<compile_context>
chip_gen: v5e
topology: v5e:2x2
jax: 0.10.0
libtpu: 0.0.40
codegen_flags: <defaults>
</compile_context>

<pallas_src>
import functools

import jax
import jax.numpy as jnp
from jax.experimental import pallas as pl
from jax.experimental.pallas import tpu as pltpu

MAP_NUM = 4
FEAT_DIM = 16      # DenseMap output_dim (per map)
TABLE_RES = 64     # DenseMap 1-D grid resolution
HIDDEN = 128


def _round_up(x, m):
    return (x + m - 1) // m * m


# ----------------------------- Pallas kernel ---------------------------------
def fused_kernel(x_ref, tab_ref, w1_ref, b1_ref, w2_ref, b2_ref, w3_ref, b3_ref,
                 o_ref):
    """Fused DenseMap + 3-layer MLP, transposed layout.

    x_ref  : (1, tm)                      coordinates for this batch tile
    tab_ref: (MAP_NUM, FEAT_DIM, TABLE_RES)  per-map tables, pre-transposed
    w1_ref : (HIDDEN, FEAT_DIM), b1_ref: (HIDDEN, 1)
    w2_ref : (HIDDEN, HIDDEN),   b2_ref: (HIDDEN, 1)
    w3_ref : (1, HIDDEN),        b3_ref: (1,) scalar in SMEM
    o_ref  : (MAP_NUM, tm)                lane-dense output block
    """
    tm = x_ref.shape[1]
    # Linear interpolation as a hat-function matmul (lane-parallel, MXU-friendly).
    pos = jnp.clip(x_ref[...], 0.0, 1.0) * float(TABLE_RES - 1)          # (1, tm)
    r = jax.lax.broadcasted_iota(jnp.int32, (TABLE_RES, tm), 0).astype(jnp.float32)
    wint = jnp.maximum(1.0 - jnp.abs(pos - r), 0.0)                      # (RES, tm)

    w1 = w1_ref[...]; b1 = b1_ref[...]
    w2 = w2_ref[...]; b2 = b2_ref[...]
    w3 = w3_ref[...]; b3 = b3_ref[0]

    for m in range(MAP_NUM):                     # static unroll (MAP_NUM = 4)
        # feats^T = table_m^T @ wint : (FEAT_DIM, tm).  HIGHEST precision so it
        # reproduces the exact gather + lerp reference arithmetic.
        feats = jnp.dot(tab_ref[m], wint,
                        precision=jax.lax.Precision.HIGHEST,
                        preferred_element_type=jnp.float32)
        h = jnp.dot(w1, feats, preferred_element_type=jnp.float32)
        h = jnp.maximum(h + b1, 0.0)                                     # (HIDDEN, tm)
        h = jnp.dot(w2, h, preferred_element_type=jnp.float32)
        h = jnp.maximum(h + b2, 0.0)                                     # (HIDDEN, tm)
        y = jnp.dot(w3, h, preferred_element_type=jnp.float32) + b3      # (1, tm)
        o_ref[pl.ds(m, 1), :] = y.astype(o_ref.dtype)                    # lane-dense row


@functools.partial(jax.jit, static_argnames=("tm",))
def fused_model_pallas(coords, tabs_t, w1t, b1c, w2t, b2c, w3r, b3, *, tm=2048):
    """coords: (B,) in [0,1].  Returns (MAP_NUM, B_padded) float32."""
    (B,) = coords.shape
    block = min(tm, _round_up(B, 128))          # don't over-tile tiny problems
    b_pad = _round_up(B, block)                 # handle B not divisible by block
    x2 = coords.reshape(1, B)
    if b_pad != B:
        x2 = jnp.pad(x2, ((0, 0), (0, b_pad - B)))
    grid = (b_pad // block,)

    return pl.pallas_call(
        fused_kernel,
        out_shape=jax.ShapeDtypeStruct((MAP_NUM, b_pad), jnp.float32),
        grid_spec=pltpu.PrefetchScalarGridSpec(
            num_scalar_prefetch=0,
            grid=grid,
            in_specs=[
                pl.BlockSpec((1, block), lambda i: (0, i)),                 # coords tile
                pl.BlockSpec((MAP_NUM, FEAT_DIM, TABLE_RES),
                             lambda i: (0, 0, 0)),                          # tables (resident)
                pl.BlockSpec((HIDDEN, FEAT_DIM), lambda i: (0, 0)),         # W1^T
                pl.BlockSpec((HIDDEN, 1), lambda i: (0, 0)),                # b1 (column)
                pl.BlockSpec((HIDDEN, HIDDEN), lambda i: (0, 0)),           # W2^T
                pl.BlockSpec((HIDDEN, 1), lambda i: (0, 0)),                # b2 (column)
                pl.BlockSpec((1, HIDDEN), lambda i: (0, 0)),                # W3^T (row)
                pl.BlockSpec(memory_space=pltpu.MemorySpace.SMEM),          # b3 scalar
            ],
            out_specs=pl.BlockSpec((MAP_NUM, block), lambda i: (0, i)),     # lane-dense out
        ),
        compiler_params=pltpu.CompilerParams(
            # Independent batch tiles: shard the grid across TensorCores (v7x).
            dimension_semantics=("parallel",),
            # VMEM use at tm=2048 is ~4 MB/step (resident weights + (128,tm)
            # activations), well under every generation's default scoped limit;
            # raise vmem_limit_bytes only if tm is swept far past 8192.
        ),
    )(x2, tabs_t, w1t, b1c, w2t, b2c, w3r, b3)


# ----------------------------- DenseMap (reference) ---------------------------
def dense_map(coords, tables):
    """Reference-layout DenseMap interpolation: returns (B, MAP_NUM, FEAT_DIM)."""
    pos = jnp.clip(coords, 0.0, 1.0) * (TABLE_RES - 1)
    i0 = jnp.clip(jnp.floor(pos).astype(jnp.int32), 0, TABLE_RES - 2)
    i1 = i0 + 1
    w = (pos - i0.astype(jnp.float32))[:, None, None]
    f0 = jnp.transpose(tables[:, i0, :], (1, 0, 2))
    f1 = jnp.transpose(tables[:, i1, :], (1, 0, 2))
    return (1.0 - w) * f0 + w * f1


# ----------------------------- Model wrapper ----------------------------------
def init_params(key):
    ks = jax.random.split(key, 8)
    tables = jax.random.normal(ks[0], (MAP_NUM, TABLE_RES, FEAT_DIM), jnp.float32) * 0.1

    def lin(kw, kb, fan_in, fan_out):
        bound = 1.0 / jnp.sqrt(fan_in)
        w = jax.random.uniform(kw, (fan_in, fan_out), jnp.float32, -bound, bound)
        b = jax.random.uniform(kb, (1, fan_out), jnp.float32, -bound, bound)
        return w, b

    w1, b1 = lin(ks[1], ks[2], FEAT_DIM, HIDDEN)
    w2, b2 = lin(ks[3], ks[4], HIDDEN, HIDDEN)
    w3, b3 = lin(ks[5], ks[6], HIDDEN, 1)
    return dict(tables=tables, w1=w1, b1=b1, w2=w2, b2=b2, w3=w3, b3=b3)


def model_forward(params, x, *, tm=2048):
    """x: (B,) coordinates in [0,1]  ->  (B, MAP_NUM, 1)  (fused Pallas path)."""
    B = x.shape[0]
    # Tiny (16 KB) one-time relayout: (MAP_NUM, TABLE_RES, FEAT_DIM) -> (M, F, RES).
    tabs_t = jnp.transpose(params["tables"], (0, 2, 1))
    out = fused_model_pallas(
        x, tabs_t,
        params["w1"].T,                         # (HIDDEN, FEAT_DIM)
        params["b1"].reshape(HIDDEN, 1),
        params["w2"].T,                         # (HIDDEN, HIDDEN)
        params["b2"].reshape(HIDDEN, 1),
        params["w3"].T,                         # (1, HIDDEN)
        params["b3"].reshape(1),
        tm=tm,
    )                                           # (MAP_NUM, B_pad)
    return out[:, :B].T[:, :, None]             # tiny (4, B) transpose -> (B, 4, 1)


def model_forward_ref(params, x):
    """Pure-JAX reference (mirrors torch semantics)."""
    B = x.shape[0]
    h = dense_map(x, params["tables"]).astype(jnp.float32)
    h = h.reshape(B, MAP_NUM, FEAT_DIM)
    h = jnp.maximum(h @ params["w1"] + params["b1"], 0.0)
    h = jnp.maximum(h @ params["w2"] + params["b2"], 0.0)
    return h @ params["w3"] + params["b3"]


if __name__ == "__main__":
    B = 256  # small stand-in for batch_size = 2**14
    key = jax.random.PRNGKey(0)
    k_params, k_x = jax.random.split(key)
    params = init_params(k_params)
    # Coordinates in [0,1], analogous to (arange(res)+0.5)/res in the script.
    x = jax.random.uniform(k_x, (B,), jnp.float32)

    out = jax.block_until_ready(model_forward(params, x))
    assert out.shape == (B, MAP_NUM, 1), out.shape

    ref = jax.block_until_ready(model_forward_ref(params, x))
    err = float(jnp.max(jnp.abs(out - ref)))
    assert jnp.allclose(out, ref, atol=1e-4, rtol=1e-4), err

    print("KERNEL_OK")
</pallas_src>

<mosaic_0001>
module attributes {stable_mosaic.version = 11 : i64} {
  func.func @fused_kernel(%arg0: i32, %arg1: memref<1x256xf32, #tpu.memory_space<vmem>>, %arg2: memref<4x16x64xf32, #tpu.memory_space<vmem>>, %arg3: memref<128x16xf32, #tpu.memory_space<vmem>>, %arg4: memref<128x1xf32, #tpu.memory_space<vmem>>, %arg5: memref<128x128xf32, #tpu.memory_space<vmem>>, %arg6: memref<128x1xf32, #tpu.memory_space<vmem>>, %arg7: memref<1x128xf32, #tpu.memory_space<vmem>>, %arg8: memref<1xf32, #tpu.memory_space<smem>>, %arg9: memref<4x256xf32, #tpu.memory_space<vmem>>) attributes {dimension_semantics = [#tpu.dimension_semantics<parallel>], iteration_bounds = array<i64: 1>, scalar_prefetch = 0 : i64, scratch_operands = 0 : i64, tpu.core_type = #tpu.core_type<tc>, window_params = [{transform_indices = @transform_0, window_bounds = array<i64: 1, 256>}, {pipeline_mode = #tpu.pipeline_mode<synchronous>, transform_indices = @transform_1, window_bounds = array<i64: 4, 16, 64>}, {pipeline_mode = #tpu.pipeline_mode<synchronous>, transform_indices = @transform_2, window_bounds = array<i64: 128, 16>}, {pipeline_mode = #tpu.pipeline_mode<synchronous>, transform_indices = @transform_3, window_bounds = array<i64: 128, 1>}, {pipeline_mode = #tpu.pipeline_mode<synchronous>, transform_indices = @transform_4, window_bounds = array<i64: 128, 128>}, {pipeline_mode = #tpu.pipeline_mode<synchronous>, transform_indices = @transform_5, window_bounds = array<i64: 128, 1>}, {pipeline_mode = #tpu.pipeline_mode<synchronous>, transform_indices = @transform_6, window_bounds = array<i64: 1, 128>}, {transform_indices = @transform_7, window_bounds = array<i64: 1>}, {transform_indices = @transform_8, window_bounds = array<i64: 4, 256>}]} {
    %c0 = arith.constant 0 : index
    %c0_0 = arith.constant 0 : index
    %0 = vector.load %arg1[%c0, %c0_0] : memref<1x256xf32, #tpu.memory_space<vmem>>, vector<1x256xf32>
    %cst = arith.constant 0.000000e+00 : f32
    %cst_1 = arith.constant 1.000000e+00 : f32
    %1 = vector.broadcast %cst : f32 to vector<1x256xf32>
    %2 = arith.maximumf %1, %0 : vector<1x256xf32>
    %3 = vector.broadcast %cst_1 : f32 to vector<1x256xf32>
    %4 = arith.minimumf %3, %2 : vector<1x256xf32>
    %cst_2 = arith.constant 6.300000e+01 : f32
    %5 = vector.broadcast %cst_2 : f32 to vector<1x256xf32>
    %6 = arith.mulf %4, %5 : vector<1x256xf32>
    %7 = tpu.iota {dimensions = array<i32: 0>} : vector<64x256xi32>
    %8 = arith.sitofp %7 : vector<64x256xi32> to vector<64x256xf32>
    %9 = vector.broadcast %6 : vector<1x256xf32> to vector<64x256xf32>
    %10 = arith.subf %9, %8 : vector<64x256xf32>
    %11 = math.absf %10 : vector<64x256xf32>
    %cst_3 = arith.constant 1.000000e+00 : f32
    %12 = vector.broadcast %cst_3 : f32 to vector<64x256xf32>
    %13 = arith.subf %12, %11 : vector<64x256xf32>
    %cst_4 = arith.constant 0.000000e+00 : f32
    %14 = vector.broadcast %cst_4 : f32 to vector<64x256xf32>
    %15 = arith.maximumf %13, %14 : vector<64x256xf32>
    %c0_5 = arith.constant 0 : index
    %c0_6 = arith.constant 0 : index
    %16 = vector.load %arg3[%c0_5, %c0_6] : memref<128x16xf32, #tpu.memory_space<vmem>>, vector<128x16xf32>
    %c0_7 = arith.constant 0 : index
    %c0_8 = arith.constant 0 : index
    %17 = vector.load %arg4[%c0_7, %c0_8] : memref<128x1xf32, #tpu.memory_space<vmem>>, vector<128x1xf32>
    %c0_9 = arith.constant 0 : index
    %c0_10 = arith.constant 0 : index
    %18 = vector.load %arg5[%c0_9, %c0_10] : memref<128x128xf32, #tpu.memory_space<vmem>>, vector<128x128xf32>
    %c0_11 = arith.constant 0 : index
    %c0_12 = arith.constant 0 : index
    %19 = vector.load %arg6[%c0_11, %c0_12] : memref<128x1xf32, #tpu.memory_space<vmem>>, vector<128x1xf32>
    %c0_13 = arith.constant 0 : index
    %c0_14 = arith.constant 0 : index
    %20 = vector.load %arg7[%c0_13, %c0_14] : memref<1x128xf32, #tpu.memory_space<vmem>>, vector<1x128xf32>
    %c0_15 = arith.constant 0 : index
    %21 = memref.load %arg8[%c0_15] : memref<1xf32, #tpu.memory_space<smem>>
    %c0_16 = arith.constant 0 : index
    %c0_17 = arith.constant 0 : index
    %c0_18 = arith.constant 0 : index
    %22 = vector.load %arg2[%c0_16, %c0_17, %c0_18] : memref<4x16x64xf32, #tpu.memory_space<vmem>>, vector<1x16x64xf32>
    %23 = vector.shape_cast %22 : vector<1x16x64xf32> to vector<16x64xf32>
    %cst_19 = arith.constant dense<0.000000e+00> : vector<16x256xf32>
    %24 = tpu.matmul %23, %15, %cst_19 {dimension_numbers = #tpu.dot_dimension_numbers<[1], [0], [0], [1], [0, 0, 1, 1], [], []>, precision = #tpu.contract_precision<fp32>} : vector<16x64xf32>, vector<64x256xf32>, vector<16x256xf32> -> vector<16x256xf32>
    %cst_20 = arith.constant dense<0.000000e+00> : vector<128x256xf32>
    %25 = tpu.matmul %16, %24, %cst_20 {dimension_numbers = #tpu.dot_dimension_numbers<[1], [0], [0], [1], [0, 0, 1, 1], [], []>} : vector<128x16xf32>, vector<16x256xf32>, vector<128x256xf32> -> vector<128x256xf32>
    %26 = vector.broadcast %17 : vector<128x1xf32> to vector<128x256xf32>
    %27 = arith.addf %25, %26 : vector<128x256xf32>
    %cst_21 = arith.constant 0.000000e+00 : f32
    %28 = vector.broadcast %cst_21 : f32 to vector<128x256xf32>
    %29 = arith.maximumf %27, %28 : vector<128x256xf32>
    %cst_22 = arith.constant dense<0.000000e+00> : vector<128x256xf32>
    %30 = tpu.matmul %18, %29, %cst_22 {dimension_numbers = #tpu.dot_dimension_numbers<[1], [0], [0], [1], [0, 0, 1, 1], [], []>} : vector<128x128xf32>, vector<128x256xf32>, vector<128x256xf32> -> vector<128x256xf32>
    %31 = vector.broadcast %19 : vector<128x1xf32> to vector<128x256xf32>
    %32 = arith.addf %30, %31 : vector<128x256xf32>
    %cst_23 = arith.constant 0.000000e+00 : f32
    %33 = vector.broadcast %cst_23 : f32 to vector<128x256xf32>
    %34 = arith.maximumf %32, %33 : vector<128x256xf32>
    %cst_24 = arith.constant dense<0.000000e+00> : vector<1x256xf32>
    %35 = tpu.matmul %20, %34, %cst_24 {dimension_numbers = #tpu.dot_dimension_numbers<[1], [0], [0], [1], [0, 0, 1, 1], [], []>} : vector<1x128xf32>, vector<128x256xf32>, vector<1x256xf32> -> vector<1x256xf32>
    %36 = vector.broadcast %21 : f32 to vector<1x256xf32>
    %37 = arith.addf %35, %36 : vector<1x256xf32>
    %c0_25 = arith.constant 0 : index
    %c0_26 = arith.constant 0 : index
    %38 = vector.load %arg9[%c0_25, %c0_26] : memref<4x256xf32, #tpu.memory_space<vmem>>, vector<1x256xf32>
    tpu.vector_store %arg9[%c0_25, %c0_26], %37 {strides = array<i32>} : memref<4x256xf32, #tpu.memory_space<vmem>>, vector<1x256xf32>,
    %c1 = arith.constant 1 : index
    %c0_27 = arith.constant 0 : index
    %c0_28 = arith.constant 0 : index
    %39 = vector.load %arg2[%c1, %c0_27, %c0_28] : memref<4x16x64xf32, #tpu.memory_space<vmem>>, vector<1x16x64xf32>
    %40 = vector.shape_cast %39 : vector<1x16x64xf32> to vector<16x64xf32>
    %cst_29 = arith.constant dense<0.000000e+00> : vector<16x256xf32>
    %41 = tpu.matmul %40, %15, %cst_29 {dimension_numbers = #tpu.dot_dimension_numbers<[1], [0], [0], [1], [0, 0, 1, 1], [], []>, precision = #tpu.contract_precision<fp32>} : vector<16x64xf32>, vector<64x256xf32>, vector<16x256xf32> -> vector<16x256xf32>
    %cst_30 = arith.constant dense<0.000000e+00> : vector<128x256xf32>
    %42 = tpu.matmul %16, %41, %cst_30 {dimension_numbers = #tpu.dot_dimension_numbers<[1], [0], [0], [1], [0, 0, 1, 1], [], []>} : vector<128x16xf32>, vector<16x256xf32>, vector<128x256xf32> -> vector<128x256xf32>
    %43 = vector.broadcast %17 : vector<128x1xf32> to vector<128x256xf32>
    %44 = arith.addf %42, %43 : vector<128x256xf32>
    %cst_31 = arith.constant 0.000000e+00 : f32
    %45 = vector.broadcast %cst_31 : f32 to vector<128x256xf32>
    %46 = arith.maximumf %44, %45 : vector<128x256xf32>
    %cst_32 = arith.constant dense<0.000000e+00> : vector<128x256xf32>
    %47 = tpu.matmul %18, %46, %cst_32 {dimension_numbers = #tpu.dot_dimension_numbers<[1], [0], [0], [1], [0, 0, 1, 1], [], []>} : vector<128x128xf32>, vector<128x256xf32>, vector<128x256xf32> -> vector<128x256xf32>
    %48 = vector.broadcast %19 : vector<128x1xf32> to vector<128x256xf32>
    %49 = arith.addf %47, %48 : vector<128x256xf32>
    %cst_33 = arith.constant 0.000000e+00 : f32
    %50 = vector.broadcast %cst_33 : f32 to vector<128x256xf32>
    %51 = arith.maximumf %49, %50 : vector<128x256xf32>
    %cst_34 = arith.constant dense<0.000000e+00> : vector<1x256xf32>
    %52 = tpu.matmul %20, %51, %cst_34 {dimension_numbers = #tpu.dot_dimension_numbers<[1], [0], [0], [1], [0, 0, 1, 1], [], []>} : vector<1x128xf32>, vector<128x256xf32>, vector<1x256xf32> -> vector<1x256xf32>
    %53 = vector.broadcast %21 : f32 to vector<1x256xf32>
    %54 = arith.addf %52, %53 : vector<1x256xf32>
    %c1_35 = arith.constant 1 : index
    %c0_36 = arith.constant 0 : index
    %55 = vector.load %arg9[%c1_35, %c0_36] : memref<4x256xf32, #tpu.memory_space<vmem>>, vector<1x256xf32>
    tpu.vector_store %arg9[%c1_35, %c0_36], %54 {strides = array<i32>} : memref<4x256xf32, #tpu.memory_space<vmem>>, vector<1x256xf32>,
    %c2 = arith.constant 2 : index
    %c0_37 = arith.constant 0 : index
    %c0_38 = arith.constant 0 : index
    %56 = vector.load %arg2[%c2, %c0_37, %c0_38] : memref<4x16x64xf32, #tpu.memory_space<vmem>>, vector<1x16x64xf32>
    %57 = vector.shape_cast %56 : vector<1x16x64xf32> to vector<16x64xf32>
    %cst_39 = arith.constant dense<0.000000e+00> : vector<16x256xf32>
    %58 = tpu.matmul %57, %15, %cst_39 {dimension_numbers = #tpu.dot_dimension_numbers<[1], [0], [0], [1], [0, 0, 1, 1], [], []>, precision = #tpu.contract_precision<fp32>} : vector<16x64xf32>, vector<64x256xf32>, vector<16x256xf32> -> vector<16x256xf32>
    %cst_40 = arith.constant dense<0.000000e+00> : vector<128x256xf32>
    %59 = tpu.matmul %16, %58, %cst_40 {dimension_numbers = #tpu.dot_dimension_numbers<[1], [0], [0], [1], [0, 0, 1, 1], [], []>} : vector<128x16xf32>, vector<16x256xf32>, vector<128x256xf32> -> vector<128x256xf32>
    %60 = vector.broadcast %17 : vector<128x1xf32> to vector<128x256xf32>
    %61 = arith.addf %59, %60 : vector<128x256xf32>
    %cst_41 = arith.constant 0.000000e+00 : f32
    %62 = vector.broadcast %cst_41 : f32 to vector<128x256xf32>
    %63 = arith.maximumf %61, %62 : vector<128x256xf32>
    %cst_42 = arith.constant dense<0.000000e+00> : vector<128x256xf32>
    %64 = tpu.matmul %18, %63, %cst_42 {dimension_numbers = #tpu.dot_dimension_numbers<[1], [0], [0], [1], [0, 0, 1, 1], [], []>} : vector<128x128xf32>, vector<128x256xf32>, vector<128x256xf32> -> vector<128x256xf32>
    %65 = vector.broadcast %19 : vector<128x1xf32> to vector<128x256xf32>
    %66 = arith.addf %64, %65 : vector<128x256xf32>
    %cst_43 = arith.constant 0.000000e+00 : f32
    %67 = vector.broadcast %cst_43 : f32 to vector<128x256xf32>
    %68 = arith.maximumf %66, %67 : vector<128x256xf32>
    %cst_44 = arith.constant dense<0.000000e+00> : vector<1x256xf32>
    %69 = tpu.matmul %20, %68, %cst_44 {dimension_numbers = #tpu.dot_dimension_numbers<[1], [0], [0], [1], [0, 0, 1, 1], [], []>} : vector<1x128xf32>, vector<128x256xf32>, vector<1x256xf32> -> vector<1x256xf32>
    %70 = vector.broadcast %21 : f32 to vector<1x256xf32>
    %71 = arith.addf %69, %70 : vector<1x256xf32>
    %c2_45 = arith.constant 2 : index
    %c0_46 = arith.constant 0 : index
    %72 = vector.load %arg9[%c2_45, %c0_46] : memref<4x256xf32, #tpu.memory_space<vmem>>, vector<1x256xf32>
    tpu.vector_store %arg9[%c2_45, %c0_46], %71 {strides = array<i32>} : memref<4x256xf32, #tpu.memory_space<vmem>>, vector<1x256xf32>,
    %c3 = arith.constant 3 : index
    %c0_47 = arith.constant 0 : index
    %c0_48 = arith.constant 0 : index
    %73 = vector.load %arg2[%c3, %c0_47, %c0_48] : memref<4x16x64xf32, #tpu.memory_space<vmem>>, vector<1x16x64xf32>
    %74 = vector.shape_cast %73 : vector<1x16x64xf32> to vector<16x64xf32>
    %cst_49 = arith.constant dense<0.000000e+00> : vector<16x256xf32>
    %75 = tpu.matmul %74, %15, %cst_49 {dimension_numbers = #tpu.dot_dimension_numbers<[1], [0], [0], [1], [0, 0, 1, 1], [], []>, precision = #tpu.contract_precision<fp32>} : vector<16x64xf32>, vector<64x256xf32>, vector<16x256xf32> -> vector<16x256xf32>
    %cst_50 = arith.constant dense<0.000000e+00> : vector<128x256xf32>
    %76 = tpu.matmul %16, %75, %cst_50 {dimension_numbers = #tpu.dot_dimension_numbers<[1], [0], [0], [1], [0, 0, 1, 1], [], []>} : vector<128x16xf32>, vector<16x256xf32>, vector<128x256xf32> -> vector<128x256xf32>
    %77 = vector.broadcast %17 : vector<128x1xf32> to vector<128x256xf32>
    %78 = arith.addf %76, %77 : vector<128x256xf32>
    %cst_51 = arith.constant 0.000000e+00 : f32
    %79 = vector.broadcast %cst_51 : f32 to vector<128x256xf32>
    %80 = arith.maximumf %78, %79 : vector<128x256xf32>
    %cst_52 = arith.constant dense<0.000000e+00> : vector<128x256xf32>
    %81 = tpu.matmul %18, %80, %cst_52 {dimension_numbers = #tpu.dot_dimension_numbers<[1], [0], [0], [1], [0, 0, 1, 1], [], []>} : vector<128x128xf32>, vector<128x256xf32>, vector<128x256xf32> -> vector<128x256xf32>
    %82 = vector.broadcast %19 : vector<128x1xf32> to vector<128x256xf32>
    %83 = arith.addf %81, %82 : vector<128x256xf32>
    %cst_53 = arith.constant 0.000000e+00 : f32
    %84 = vector.broadcast %cst_53 : f32 to vector<128x256xf32>
    %85 = arith.maximumf %83, %84 : vector<128x256xf32>
    %cst_54 = arith.constant dense<0.000000e+00> : vector<1x256xf32>
    %86 = tpu.matmul %20, %85, %cst_54 {dimension_numbers = #tpu.dot_dimension_numbers<[1], [0], [0], [1], [0, 0, 1, 1], [], []>} : vector<1x128xf32>, vector<128x256xf32>, vector<1x256xf32> -> vector<1x256xf32>
    %87 = vector.broadcast %21 : f32 to vector<1x256xf32>
    %88 = arith.addf %86, %87 : vector<1x256xf32>
    %c3_55 = arith.constant 3 : index
    %c0_56 = arith.constant 0 : index
    %89 = vector.load %arg9[%c3_55, %c0_56] : memref<4x256xf32, #tpu.memory_space<vmem>>, vector<1x256xf32>
    tpu.vector_store %arg9[%c3_55, %c0_56], %88 {strides = array<i32>} : memref<4x256xf32, #tpu.memory_space<vmem>>, vector<1x256xf32>,
    return
  }
  func.func @transform_0(%arg0: i32) -> (i32, i32) {
    %c0_i32 = arith.constant 0 : i32
    %c0_i32_0 = arith.constant 0 : i32
    return %c0_i32, %arg0 : i32, i32
  }
  func.func @transform_1(%arg0: i32) -> (i32, i32, i32) {
    %c0_i32 = arith.constant 0 : i32
    %c0_i32_0 = arith.constant 0 : i32
    %c0_i32_1 = arith.constant 0 : i32
    %c0_i32_2 = arith.constant 0 : i32
    return %c0_i32, %c0_i32_0, %c0_i32_1 : i32, i32, i32
  }
  func.func @transform_2(%arg0: i32) -> (i32, i32) {
    %c0_i32 = arith.constant 0 : i32
    %c0_i32_0 = arith.constant 0 : i32
    %c0_i32_1 = arith.constant 0 : i32
    return %c0_i32, %c0_i32_0 : i32, i32
  }
  func.func @transform_3(%arg0: i32) -> (i32, i32) {
    %c0_i32 = arith.constant 0 : i32
    %c0_i32_0 = arith.constant 0 : i32
    %c0_i32_1 = arith.constant 0 : i32
    return %c0_i32, %c0_i32_0 : i32, i32
  }
  func.func @transform_4(%arg0: i32) -> (i32, i32) {
    %c0_i32 = arith.constant 0 : i32
    %c0_i32_0 = arith.constant 0 : i32
    %c0_i32_1 = arith.constant 0 : i32
    return %c0_i32, %c0_i32_0 : i32, i32
  }
  func.func @transform_5(%arg0: i32) -> (i32, i32) {
    %c0_i32 = arith.constant 0 : i32
    %c0_i32_0 = arith.constant 0 : i32
    %c0_i32_1 = arith.constant 0 : i32
    return %c0_i32, %c0_i32_0 : i32, i32
  }
  func.func @transform_6(%arg0: i32) -> (i32, i32) {
    %c0_i32 = arith.constant 0 : i32
    %c0_i32_0 = arith.constant 0 : i32
    %c0_i32_1 = arith.constant 0 : i32
    return %c0_i32, %c0_i32_0 : i32, i32
  }
  func.func @transform_7(%arg0: i32) -> i32 {
    %c0_i32 = arith.constant 0 : i32
    %c0_i32_0 = arith.constant 0 : i32
    return %c0_i32 : i32
  }
  func.func @transform_8(%arg0: i32) -> (i32, i32) {
    %c0_i32 = arith.constant 0 : i32
    %c0_i32_0 = arith.constant 0 : i32
    return %c0_i32, %arg0 : i32, i32
  }
}

</mosaic_0001>

<llo_original>
// kernel: fused_model_pallas.1
$region0: #{fused_model_pallas.1}
  #allocation0 [shape = 'u32[]', space=smem, size = 0x4, offset = 0x4, fixed_abs, tag = 'smem constant byte address 0x4 - core index']
  #allocation1 [shape = 'u32[72,128]{1,0:T(1,128)}', space=vmem, size = 0x9000, scoped, tag = 'internal scratch']
  #allocation2 [shape = 'f32[1]{0:T(128)S(6)}', space=smem, size = 0x200, scoped, tag = 'scoped memory for fused_model_pallas.1']
  %s0 = inlined_call_operand.vmem [shape: f32[1,256], index: 0, kind: input, shape index: {}]
  %s1 = inlined_call_operand.vmem [shape: f32[4,16,64], index: 1, kind: input, shape index: {}]
  %s2 = inlined_call_operand.vmem [shape: f32[128,16], index: 2, kind: input, shape index: {}]
  %s3 = inlined_call_operand.vmem [shape: f32[128,1], index: 3, kind: input, shape index: {}]
  %s4 = inlined_call_operand.vmem [shape: f32[128,128], index: 4, kind: input, shape index: {}]
  %s5 = inlined_call_operand.vmem [shape: f32[128,1], index: 5, kind: input, shape index: {}]
  %s6 = inlined_call_operand.vmem [shape: f32[1,128], index: 6, kind: input, shape index: {}]
  %s7 = inlined_call_operand.<no memory space> [shape: f32[1], index: 7, kind: input, shape index: {}]
  %s8 = inlined_call_operand.hbm [shape: f32[4,256], index: 8, kind: output, shape index: {}]
  %s9 = sld [smem:[#allocation0]]
  $region42: #{fused_model_pallas.1} parent=0
    _
  %s11 = ssub.s32 1, %s9
  %s12 = scalar_select 0, %s11, %s9
  %13 = sst [smem:[#allocation2]] %s7
  $region1: #{fused_model_pallas.1} parent=0
    #allocation3 [shape = 'u8[4096]{0}', space=vmem, size = 0x1000, scoped, tag = 'output window, operand 0, single buffered']
    #allocation4 [shape = 's32[1]{0}', space=sflag, size = 0x4, scoped, tag = 'scoped memory for fused_model_pallas.1']
    %14 = vsyncpa [#allocation4], 0
    // Predicated region
    $region2: #{fused_model_pallas.1} parent=1 // pred_check
      _
    $region3: #{fused_model_pallas.1} parent=1 // pred_check_branch
      %16 = sbr.rel (0) target = $region5
    $region4: #{fused_model_pallas.1} parent=1 // pred_region
      _
    $region5: #{fused_model_pallas.1} parent=1 // pred_fallthru
      _
    // Predicated region
    $region6: #{fused_model_pallas.1} parent=1 // pred_check
      _
    $region7: #{fused_model_pallas.1} parent=1 // pred_check_branch
      %18 = sbr.rel (0) target = $region9
    $region8: #{fused_model_pallas.1} parent=1 // pred_region
      _
    $region9: #{fused_model_pallas.1} parent=1 // pred_fallthru
      _
    // Predicated region
    $region10: #{fused_model_pallas.1} parent=1 // pred_check
      _
    $region11: #{fused_model_pallas.1} parent=1 // pred_check_branch
      %20 = sbr.rel (0) target = $region13
    $region12: #{fused_model_pallas.1} parent=1 // pred_region
      _
    $region13: #{fused_model_pallas.1} parent=1 // pred_fallthru
      _
    // Predicated region
    $region14: #{fused_model_pallas.1} parent=1 // pred_check
      _
    $region15: #{fused_model_pallas.1} parent=1 // pred_check_branch
      %22 = sbr.rel (0) target = $region17
    $region16: #{fused_model_pallas.1} parent=1 // pred_region
      _
    $region17: #{fused_model_pallas.1} parent=1 // pred_fallthru
      _
    // Predicated region
    $region18: #{fused_model_pallas.1} parent=1 // pred_check
      _
    $region19: #{fused_model_pallas.1} parent=1 // pred_check_branch
      %24 = sbr.rel (0) target = $region21
    $region20: #{fused_model_pallas.1} parent=1 // pred_region
      _
    $region21: #{fused_model_pallas.1} parent=1 // pred_fallthru
      _
    // Predicated region
    $region22: #{fused_model_pallas.1} parent=1 // pred_check
      _
    $region23: #{fused_model_pallas.1} parent=1 // pred_check_branch
      %26 = sbr.rel (0) target = $region25
    $region24: #{fused_model_pallas.1} parent=1 // pred_region
      _
    $region25: #{fused_model_pallas.1} parent=1 // pred_fallthru
      _
    // Predicated region
    $region26: #{fused_model_pallas.1} parent=1 // pred_check
      _
    $region27: #{fused_model_pallas.1} parent=1 // pred_check_branch
      %28 = sbr.rel (0) target = $region29
    $region28: #{fused_model_pallas.1} parent=1 // pred_region
      _
    $region29: #{fused_model_pallas.1} parent=1 // pred_fallthru
      _
    // Predicated region
    $region30: #{fused_model_pallas.1} parent=1 // pred_check
      _
    $region31: #{fused_model_pallas.1} parent=1 // pred_check_branch
      %30 = sbr.rel (0) target = $region33
    $region32: #{fused_model_pallas.1} parent=1 // pred_region
      _
    $region33: #{fused_model_pallas.1} parent=1 // pred_fallthru
      _
    %v31 = vld [vmem:[%s0] sm:$0x3]
    %v32 = vmax.f32 %v31, 0.0
    %v33 = vmin.f32 %v32, 1.0
    %v34 = vmul.f32 %v33, 63.0
    %v35 = vlaneseq
    %v36 = vshrl.u32 %v35, 7
    %v37 = vadd.s32 %v36, 8
    %v38 = vadd.s32 %v36, 16
    %v39 = vadd.s32 %v36, 24
    %v40 = vadd.s32 %v36, 32
    %v41 = vadd.s32 %v36, 40
    %v42 = vadd.s32 %v36, 48
    %v43 = vadd.s32 %v36, 56
    %v44 = vcvt.s32.f32 %v36
    %v45 = vcvt.s32.f32 %v37
    %v46 = vcvt.s32.f32 %v38
    %v47 = vcvt.s32.f32 %v39
    %v48 = vcvt.s32.f32 %v40
    %v49 = vcvt.s32.f32 %v41
    %v50 = vcvt.s32.f32 %v42
    %v51 = vcvt.s32.f32 %v43
    %v53 = vperm.slane %v34, 0
    %v54 = vperm.slane %v34, 1
    %v57 = vsub.f32 %v53, %v44
    %v58 = vsub.f32 %v54, %v44
    %v59 = vsub.f32 %v53, %v45
    %v60 = vsub.f32 %v54, %v45
    %v61 = vsub.f32 %v53, %v46
    %v62 = vsub.f32 %v54, %v46
    %v63 = vsub.f32 %v53, %v47
    %v64 = vsub.f32 %v54, %v47
    %v65 = vsub.f32 %v53, %v48
    %v66 = vsub.f32 %v54, %v48
    %v67 = vsub.f32 %v53, %v49
    %v68 = vsub.f32 %v54, %v49
    %v69 = vsub.f32 %v53, %v50
    %v70 = vsub.f32 %v54, %v50
    %v71 = vsub.f32 %v53, %v51
    %v72 = vsub.f32 %v54, %v51
    %v73 = vand.u32 2147483647, %v57
    %v74 = vand.u32 2147483647, %v58
    %v75 = vand.u32 2147483647, %v59
    %v76 = vand.u32 2147483647, %v60
    %v77 = vand.u32 2147483647, %v61
    %v78 = vand.u32 2147483647, %v62
    %v79 = vand.u32 2147483647, %v63
    %v80 = vand.u32 2147483647, %v64
    %v81 = vand.u32 2147483647, %v65
    %v82 = vand.u32 2147483647, %v66
    %v83 = vand.u32 2147483647, %v67
    %v84 = vand.u32 2147483647, %v68
    %v85 = vand.u32 2147483647, %v69
    %v86 = vand.u32 2147483647, %v70
    %v87 = vand.u32 2147483647, %v71
    %v88 = vand.u32 2147483647, %v72
    %v89 = vsub.f32 1.0, %v73
    %v90 = vsub.f32 1.0, %v74
    %v91 = vsub.f32 1.0, %v75
    %v92 = vsub.f32 1.0, %v76
    %v93 = vsub.f32 1.0, %v77
    %v94 = vsub.f32 1.0, %v78
    %v95 = vsub.f32 1.0, %v79
    %v96 = vsub.f32 1.0, %v80
    %v97 = vsub.f32 1.0, %v81
    %v98 = vsub.f32 1.0, %v82
    %v99 = vsub.f32 1.0, %v83
    %v100 = vsub.f32 1.0, %v84
    %v101 = vsub.f32 1.0, %v85
    %v102 = vsub.f32 1.0, %v86
    %v103 = vsub.f32 1.0, %v87
    %v104 = vsub.f32 1.0, %v88
    %v105 = vmax.f32 %v89, 0.0
    %v106 = vmax.f32 %v90, 0.0
    %v107 = vmax.f32 %v91, 0.0
    %v108 = vmax.f32 %v92, 0.0
    %v109 = vmax.f32 %v93, 0.0
    %v110 = vmax.f32 %v94, 0.0
    %v111 = vmax.f32 %v95, 0.0
    %v112 = vmax.f32 %v96, 0.0
    %v113 = vmax.f32 %v97, 0.0
    %v114 = vmax.f32 %v98, 0.0
    %v115 = vmax.f32 %v99, 0.0
    %v116 = vmax.f32 %v100, 0.0
    %v117 = vmax.f32 %v101, 0.0
    %v118 = vmax.f32 %v102, 0.0
    %v119 = vmax.f32 %v103, 0.0
    %v120 = vmax.f32 %v104, 0.0
    %v121 = vld [vmem:[%s2] sm:$0xff]
    %v122 = vld [vmem:[%s2 + $0x8] sm:$0xff]
    %v123 = vld [vmem:[%s2 + $0x10] sm:$0xff]
    %v124 = vld [vmem:[%s2 + $0x18] sm:$0xff]
    %v125 = vld [vmem:[%s2 + $0x20] sm:$0xff]
    %v126 = vld [vmem:[%s2 + $0x28] sm:$0xff]
    %v127 = vld [vmem:[%s2 + $0x30] sm:$0xff]
    %v128 = vld [vmem:[%s2 + $0x38] sm:$0xff]
    %v129 = vld [vmem:[%s2 + $0x40] sm:$0xff]
    %v130 = vld [vmem:[%s2 + $0x48] sm:$0xff]
    %v131 = vld [vmem:[%s2 + $0x50] sm:$0xff]
    %v132 = vld [vmem:[%s2 + $0x58] sm:$0xff]
    %v133 = vld [vmem:[%s2 + $0x60] sm:$0xff]
    %v134 = vld [vmem:[%s2 + $0x68] sm:$0xff]
    %v135 = vld [vmem:[%s2 + $0x70] sm:$0xff]
    %v136 = vld [vmem:[%s2 + $0x78] sm:$0xff]
    %v137 = vld [vmem:[%s3] sm:$0xff]
    %v138 = vld [vmem:[%s3 + $0x8] sm:$0xff]
    %v139 = vld [vmem:[%s3 + $0x10] sm:$0xff]
    %v140 = vld [vmem:[%s3 + $0x18] sm:$0xff]
    %v141 = vld [vmem:[%s3 + $0x20] sm:$0xff]
    %v142 = vld [vmem:[%s3 + $0x28] sm:$0xff]
    %v143 = vld [vmem:[%s3 + $0x30] sm:$0xff]
    %v144 = vld [vmem:[%s3 + $0x38] sm:$0xff]
    %v145 = vld [vmem:[%s3 + $0x40] sm:$0xff]
    %v146 = vld [vmem:[%s3 + $0x48] sm:$0xff]
    %v147 = vld [vmem:[%s3 + $0x50] sm:$0xff]
    %v148 = vld [vmem:[%s3 + $0x58] sm:$0xff]
    %v149 = vld [vmem:[%s3 + $0x60] sm:$0xff]
    %v150 = vld [vmem:[%s3 + $0x68] sm:$0xff]
    %v151 = vld [vmem:[%s3 + $0x70] sm:$0xff]
    %v152 = vld [vmem:[%s3 + $0x78] sm:$0xff]
    %v153 = vld [vmem:[%s4] sm:$0xff]
    %v154 = vld [vmem:[%s4 + $0x8] sm:$0xff]
    %v155 = vld [vmem:[%s4 + $0x10] sm:$0xff]
    %v156 = vld [vmem:[%s4 + $0x18] sm:$0xff]
    %v157 = vld [vmem:[%s4 + $0x20] sm:$0xff]
    %v158 = vld [vmem:[%s4 + $0x28] sm:$0xff]
    %v159 = vld [vmem:[%s4 + $0x30] sm:$0xff]
    %v160 = vld [vmem:[%s4 + $0x38] sm:$0xff]
    %v161 = vld [vmem:[%s4 + $0x40] sm:$0xff]
    %v162 = vld [vmem:[%s4 + $0x48] sm:$0xff]
    %v163 = vld [vmem:[%s4 + $0x50] sm:$0xff]
    %v164 = vld [vmem:[%s4 + $0x58] sm:$0xff]
    %v165 = vld [vmem:[%s4 + $0x60] sm:$0xff]
    %v166 = vld [vmem:[%s4 + $0x68] sm:$0xff]
    %v167 = vld [vmem:[%s4 + $0x70] sm:$0xff]
    %v168 = vld [vmem:[%s4 + $0x78] sm:$0xff]
    %v169 = vld [vmem:[%s5] sm:$0xff]
    %v170 = vld [vmem:[%s5 + $0x8] sm:$0xff]
    %v171 = vld [vmem:[%s5 + $0x10] sm:$0xff]
    %v172 = vld [vmem:[%s5 + $0x18] sm:$0xff]
    %v173 = vld [vmem:[%s5 + $0x20] sm:$0xff]
    %v174 = vld [vmem:[%s5 + $0x28] sm:$0xff]
    %v175 = vld [vmem:[%s5 + $0x30] sm:$0xff]
    %v176 = vld [vmem:[%s5 + $0x38] sm:$0xff]
    %v177 = vld [vmem:[%s5 + $0x40] sm:$0xff]
    %v178 = vld [vmem:[%s5 + $0x48] sm:$0xff]
    %v179 = vld [vmem:[%s5 + $0x50] sm:$0xff]
    %v180 = vld [vmem:[%s5 + $0x58] sm:$0xff]
    %v181 = vld [vmem:[%s5 + $0x60] sm:$0xff]
    %v182 = vld [vmem:[%s5 + $0x68] sm:$0xff]
    %v183 = vld [vmem:[%s5 + $0x70] sm:$0xff]
    %v184 = vld [vmem:[%s5 + $0x78] sm:$0xff]
    %v185 = vld [vmem:[%s6] sm:$0x1]
    %s186 = sld [smem:[#allocation2]]
    %v187 = vld [vmem:[%s1] sm:$0xff]
    %v188 = vld [vmem:[%s1 + $0x8] sm:$0xff]
    %vm189 = vcmask 523264
    %v191 = vsel %vm189, %v187, 0
    %v194 = vsel %vm189, %v188, 0
    %196 = vmatpush.msra.mxu0 0.0
    %197 = vmatpush.msra.mxu0 0.0
    %198 = vmatpush.msra.mxu0 0.0
    %199 = vmatpush.msra.mxu0 0.0
    %200 = vmatpush.msra.mxu0 0.0
    %201 = vmatpush.msra.mxu0 0.0
    %202 = vmatpush.msra.mxu0 0.0
    %203 = vmatpush.msra.mxu0 0.0
    %v204 = vand.u32 %v119, 4294901760
    %205 = vmatpush.msra.mxu0 %v204
    %v206 = vand.u32 %v117, 4294901760
    %207 = vmatpush.msra.mxu0 %v206
    %v208 = vand.u32 %v115, 4294901760
    %209 = vmatpush.msra.mxu0 %v208
    %v210 = vand.u32 %v113, 4294901760
    %211 = vmatpush.msra.mxu0 %v210
    %v212 = vand.u32 %v111, 4294901760
    %213 = vmatpush.msra.mxu0 %v212
    %v214 = vand.u32 %v109, 4294901760
    %215 = vmatpush.msra.mxu0 %v214
    %v216 = vand.u32 %v107, 4294901760
    %217 = vmatpush.msra.mxu0 %v216
    %v218 = vand.u32 %v105, 4294901760
    %219 = vmatpush.msra.mxu0 %v218
    %v220 = vand.u32 %v191, 4294901760
    %v221 = vsub.f32 %v191, %v220
    %v222 = vand.u32 %v221, 4294901760
    %v223 = vsub.f32 %v221, %v222
    %v224 = vand.u32 %v223, 4294901760
    %225 = vmatmul.f32.gmra.mxu0 %v224
    %v226 = vpop.f32.mrf.mxu0
    %v227 = vadd.f32 0.0, %v226
    %v228 = vand.u32 %v194, 4294901760
    %v229 = vsub.f32 %v194, %v228
    %v230 = vand.u32 %v229, 4294901760
    %v231 = vsub.f32 %v229, %v230
    %v232 = vand.u32 %v231, 4294901760
    %233 = vmatmul.f32.gmra.mxu0 %v232
    %v234 = vpop.f32.mrf.mxu0
    %v235 = vadd.f32 0.0, %v234
    %236 = vdwg.mxu0
    %237 = vmatpush.msra.mxu0 0.0
    %238 = vmatpush.msra.mxu0 0.0
    %239 = vmatpush.msra.mxu0 0.0
    %240 = vmatpush.msra.mxu0 0.0
    %241 = vmatpush.msra.mxu0 0.0
    %242 = vmatpush.msra.mxu0 0.0
    %243 = vmatpush.msra.mxu0 0.0
    %244 = vmatpush.msra.mxu0 0.0
    %v245 = vand.u32 %v119, 4294901760
    %v246 = vsub.f32 %v119, %v245
    %v247 = vand.u32 %v246, 4294901760
    %v248 = vsub.f32 %v246, %v247
    %v249 = vand.u32 %v248, 4294901760
    %250 = vmatpush.msra.mxu0 %v249
    %v251 = vand.u32 %v117, 4294901760
    %v252 = vsub.f32 %v117, %v251
    %v253 = vand.u32 %v252, 4294901760
    %v254 = vsub.f32 %v252, %v253
    %v255 = vand.u32 %v254, 4294901760
    %256 = vmatpush.msra.mxu0 %v255
    %v257 = vand.u32 %v115, 4294901760
    %v258 = vsub.f32 %v115, %v257
    %v259 = vand.u32 %v258, 4294901760
    %v260 = vsub.f32 %v258, %v259
    %v261 = vand.u32 %v260, 4294901760
    %262 = vmatpush.msra.mxu0 %v261
    %v263 = vand.u32 %v113, 4294901760
    %v264 = vsub.f32 %v113, %v263
    %v265 = vand.u32 %v264, 4294901760
    %v266 = vsub.f32 %v264, %v265
    %v267 = vand.u32 %v266, 4294901760
    %268 = vmatpush.msra.mxu0 %v267
    %v269 = vand.u32 %v111, 4294901760
    %v270 = vsub.f32 %v111, %v269
    %v271 = vand.u32 %v270, 4294901760
    %v272 = vsub.f32 %v270, %v271
    %v273 = vand.u32 %v272, 4294901760
    %274 = vmatpush.msra.mxu0 %v273
    %v275 = vand.u32 %v109, 4294901760
    %v276 = vsub.f32 %v109, %v275
    %v277 = vand.u32 %v276, 4294901760
    %v278 = vsub.f32 %v276, %v277
    %v279 = vand.u32 %v278, 4294901760
    %280 = vmatpush.msra.mxu0 %v279
    %v281 = vand.u32 %v107, 4294901760
    %v282 = vsub.f32 %v107, %v281
    %v283 = vand.u32 %v282, 4294901760
    %v284 = vsub.f32 %v282, %v283
    %v285 = vand.u32 %v284, 4294901760
    %286 = vmatpush.msra.mxu0 %v285
    %v287 = vand.u32 %v105, 4294901760
    %v288 = vsub.f32 %v105, %v287
    %v289 = vand.u32 %v288, 4294901760
    %v290 = vsub.f32 %v288, %v289
    %v291 = vand.u32 %v290, 4294901760
    %292 = vmatpush.msra.mxu0 %v291
    %v293 = vand.u32 %v191, 4294901760
    %294 = vmatmul.f32.gmra.mxu0 %v293
    %v295 = vpop.f32.mrf.mxu0
    %v296 = vadd.f32 %v227, %v295
    %v297 = vand.u32 %v194, 4294901760
    %298 = vmatmul.f32.gmra.mxu0 %v297
    %v299 = vpop.f32.mrf.mxu0
    %v300 = vadd.f32 %v235, %v299
    %301 = vdwg.mxu0
    %302 = vmatpush.msra.mxu0 0.0
    %303 = vmatpush.msra.mxu0 0.0
    %304 = vmatpush.msra.mxu0 0.0
    %305 = vmatpush.msra.mxu0 0.0
    %306 = vmatpush.msra.mxu0 0.0
    %307 = vmatpush.msra.mxu0 0.0
    %308 = vmatpush.msra.mxu0 0.0
    %309 = vmatpush.msra.mxu0 0.0
    %v310 = vand.u32 %v119, 4294901760
    %v311 = vsub.f32 %v119, %v310
    %312 = vmatpush.msra.mxu0 %v311
    %v313 = vand.u32 %v117, 4294901760
    %v314 = vsub.f32 %v117, %v313
    %315 = vmatpush.msra.mxu0 %v314
    %v316 = vand.u32 %v115, 4294901760
    %v317 = vsub.f32 %v115, %v316
    %318 = vmatpush.msra.mxu0 %v317
    %v319 = vand.u32 %v113, 4294901760
    %v320 = vsub.f32 %v113, %v319
    %321 = vmatpush.msra.mxu0 %v320
    %v322 = vand.u32 %v111, 4294901760
    %v323 = vsub.f32 %v111, %v322
    %324 = vmatpush.msra.mxu0 %v323
    %v325 = vand.u32 %v109, 4294901760
    %v326 = vsub.f32 %v109, %v325
    %327 = vmatpush.msra.mxu0 %v326
    %v328 = vand.u32 %v107, 4294901760
    %v329 = vsub.f32 %v107, %v328
    %330 = vmatpush.msra.mxu0 %v329
    %v331 = vand.u32 %v105, 4294901760
    %v332 = vsub.f32 %v105, %v331
    %333 = vmatpush.msra.mxu0 %v332
    %v334 = vand.u32 %v191, 4294901760
    %v335 = vsub.f32 %v191, %v334
    %336 = vmatmul.f32.gmra.mxu0 %v335
    %v337 = vpop.f32.mrf.mxu0
    %v338 = vadd.f32 %v296, %v337
    %v339 = vand.u32 %v194, 4294901760
    %v340 = vsub.f32 %v194, %v339
    %341 = vmatmul.f32.gmra.mxu0 %v340
    %v342 = vpop.f32.mrf.mxu0
    %v343 = vadd.f32 %v300, %v342
    %344 = vdwg.mxu0
    %345 = vmatpush.msra.mxu0 0.0
    %346 = vmatpush.msra.mxu0 0.0
    %347 = vmatpush.msra.mxu0 0.0
    %348 = vmatpush.msra.mxu0 0.0
    %349 = vmatpush.msra.mxu0 0.0
    %350 = vmatpush.msra.mxu0 0.0
    %351 = vmatpush.msra.mxu0 0.0
    %352 = vmatpush.msra.mxu0 0.0
    %v353 = vand.u32 %v119, 4294901760
    %354 = vmatpush.msra.mxu0 %v353
    %v355 = vand.u32 %v117, 4294901760
    %356 = vmatpush.msra.mxu0 %v355
    %v357 = vand.u32 %v115, 4294901760
    %358 = vmatpush.msra.mxu0 %v357
    %v359 = vand.u32 %v113, 4294901760
    %360 = vmatpush.msra.mxu0 %v359
    %v361 = vand.u32 %v111, 4294901760
    %362 = vmatpush.msra.mxu0 %v361
    %v363 = vand.u32 %v109, 4294901760
    %364 = vmatpush.msra.mxu0 %v363
    %v365 = vand.u32 %v107, 4294901760
    %366 = vmatpush.msra.mxu0 %v365
    %v367 = vand.u32 %v105, 4294901760
    %368 = vmatpush.msra.mxu0 %v367
    %v369 = vand.u32 %v191, 4294901760
    %v370 = vsub.f32 %v191, %v369
    %v371 = vand.u32 %v370, 4294901760
    %372 = vmatmul.f32.gmra.mxu0 %v371
    %v373 = vpop.f32.mrf.mxu0
    %v374 = vadd.f32 %v338, %v373
    %v375 = vand.u32 %v194, 4294901760
    %v376 = vsub.f32 %v194, %v375
    %v377 = vand.u32 %v376, 4294901760
    %378 = vmatmul.f32.gmra.mxu0 %v377
    %v379 = vpop.f32.mrf.mxu0
    %v380 = vadd.f32 %v343, %v379
    %381 = vdwg.mxu0
    %382 = vmatpush.msra.mxu0 0.0
    %383 = vmatpush.msra.mxu0 0.0
    %384 = vmatpush.msra.mxu0 0.0
    %385 = vmatpush.msra.mxu0 0.0
    %386 = vmatpush.msra.mxu0 0.0
    %387 = vmatpush.msra.mxu0 0.0
    %388 = vmatpush.msra.mxu0 0.0
    %389 = vmatpush.msra.mxu0 0.0
    %v390 = vand.u32 %v119, 4294901760
    %v391 = vsub.f32 %v119, %v390
    %v392 = vand.u32 %v391, 4294901760
    %393 = vmatpush.msra.mxu0 %v392
    %v394 = vand.u32 %v117, 4294901760
    %v395 = vsub.f32 %v117, %v394
    %v396 = vand.u32 %v395, 4294901760
    %397 = vmatpush.msra.mxu0 %v396
    %v398 = vand.u32 %v115, 4294901760
    %v399 = vsub.f32 %v115, %v398
    %v400 = vand.u32 %v399, 4294901760
    %401 = vmatpush.msra.mxu0 %v400
    %v402 = vand.u32 %v113, 4294901760
    %v403 = vsub.f32 %v113, %v402
    %v404 = vand.u32 %v403, 4294901760
    %405 = vmatpush.msra.mxu0 %v404
    %v406 = vand.u32 %v111, 4294901760
    %v407 = vsub.f32 %v111, %v406
    %v408 = vand.u32 %v407, 4294901760
    %409 = vmatpush.msra.mxu0 %v408
    %v410 = vand.u32 %v109, 4294901760
    %v411 = vsub.f32 %v109, %v410
    %v412 = vand.u32 %v411, 4294901760
    %413 = vmatpush.msra.mxu0 %v412
    %v414 = vand.u32 %v107, 4294901760
    %v415 = vsub.f32 %v107, %v414
    %v416 = vand.u32 %v415, 4294901760
    %417 = vmatpush.msra.mxu0 %v416
    %v418 = vand.u32 %v105, 4294901760
    %v419 = vsub.f32 %v105, %v418
    %v420 = vand.u32 %v419, 4294901760
    %421 = vmatpush.msra.mxu0 %v420
    %v422 = vand.u32 %v191, 4294901760
    %423 = vmatmul.f32.gmra.mxu0 %v422
    %v424 = vpop.f32.mrf.mxu0
    %v425 = vadd.f32 %v374, %v424
    %v426 = vand.u32 %v194, 4294901760
    %427 = vmatmul.f32.gmra.mxu0 %v426
    %v428 = vpop.f32.mrf.mxu0
    %v429 = vadd.f32 %v380, %v428
    %430 = vdwg.mxu0
    %431 = vmatpush.msra.mxu0 0.0
    %432 = vmatpush.msra.mxu0 0.0
    %433 = vmatpush.msra.mxu0 0.0
    %434 = vmatpush.msra.mxu0 0.0
    %435 = vmatpush.msra.mxu0 0.0
    %436 = vmatpush.msra.mxu0 0.0
    %437 = vmatpush.msra.mxu0 0.0
    %438 = vmatpush.msra.mxu0 0.0
    %v439 = vand.u32 %v119, 4294901760
    %440 = vmatpush.msra.mxu0 %v439
    %v441 = vand.u32 %v117, 4294901760
    %442 = vmatpush.msra.mxu0 %v441
    %v443 = vand.u32 %v115, 4294901760
    %444 = vmatpush.msra.mxu0 %v443
    %v445 = vand.u32 %v113, 4294901760
    %446 = vmatpush.msra.mxu0 %v445
    %v447 = vand.u32 %v111, 4294901760
    %448 = vmatpush.msra.mxu0 %v447
    %v449 = vand.u32 %v109, 4294901760
    %450 = vmatpush.msra.mxu0 %v449
    %v451 = vand.u32 %v107, 4294901760
    %452 = vmatpush.msra.mxu0 %v451
    %v453 = vand.u32 %v105, 4294901760
    %454 = vmatpush.msra.mxu0 %v453
    %v455 = vand.u32 %v191, 4294901760
    %456 = vmatmul.f32.gmra.mxu0 %v455
    %v457 = vpop.f32.mrf.mxu0
    %v458 = vadd.f32 %v425, %v457
    %v459 = vand.u32 %v194, 4294901760
    %460 = vmatmul.f32.gmra.mxu0 %v459
    %v461 = vpop.f32.mrf.mxu0
    %v462 = vadd.f32 %v429, %v461
    %463 = vdwg.mxu0
    %464 = vmatpush.msra.mxu0 0.0
    %465 = vmatpush.msra.mxu0 0.0
    %466 = vmatpush.msra.mxu0 0.0
    %467 = vmatpush.msra.mxu0 0.0
    %468 = vmatpush.msra.mxu0 0.0
    %469 = vmatpush.msra.mxu0 0.0
    %470 = vmatpush.msra.mxu0 0.0
    %471 = vmatpush.msra.mxu0 0.0
    %v472 = vand.u32 %v120, 4294901760
    %473 = vmatpush.msra.mxu0 %v472
    %v474 = vand.u32 %v118, 4294901760
    %475 = vmatpush.msra.mxu0 %v474
    %v476 = vand.u32 %v116, 4294901760
    %477 = vmatpush.msra.mxu0 %v476
    %v478 = vand.u32 %v114, 4294901760
    %479 = vmatpush.msra.mxu0 %v478
    %v480 = vand.u32 %v112, 4294901760
    %481 = vmatpush.msra.mxu0 %v480
    %v482 = vand.u32 %v110, 4294901760
    %483 = vmatpush.msra.mxu0 %v482
    %v484 = vand.u32 %v108, 4294901760
    %485 = vmatpush.msra.mxu0 %v484
    %v486 = vand.u32 %v106, 4294901760
    %487 = vmatpush.msra.mxu0 %v486
    %v488 = vand.u32 %v191, 4294901760
    %v489 = vsub.f32 %v191, %v488
    %v490 = vand.u32 %v489, 4294901760
    %v491 = vsub.f32 %v489, %v490
    %v492 = vand.u32 %v491, 4294901760
    %493 = vmatmul.f32.gmra.mxu0 %v492
    %v494 = vpop.f32.mrf.mxu0
    %v495 = vadd.f32 0.0, %v494
    %v496 = vand.u32 %v194, 4294901760
    %v497 = vsub.f32 %v194, %v496
    %v498 = vand.u32 %v497, 4294901760
    %v499 = vsub.f32 %v497, %v498
    %v500 = vand.u32 %v499, 4294901760
    %501 = vmatmul.f32.gmra.mxu0 %v500
    %v502 = vpop.f32.mrf.mxu0
    %v503 = vadd.f32 0.0, %v502
    %504 = vdwg.mxu0
    %505 = vmatpush.msra.mxu0 0.0
    %506 = vmatpush.msra.mxu0 0.0
    %507 = vmatpush.msra.mxu0 0.0
    %508 = vmatpush.msra.mxu0 0.0
    %509 = vmatpush.msra.mxu0 0.0
    %510 = vmatpush.msra.mxu0 0.0
    %511 = vmatpush.msra.mxu0 0.0
    %512 = vmatpush.msra.mxu0 0.0
    %v513 = vand.u32 %v120, 4294901760
    %v514 = vsub.f32 %v120, %v513
    %v515 = vand.u32 %v514, 4294901760
    %v516 = vsub.f32 %v514, %v515
    %v517 = vand.u32 %v516, 4294901760
    %518 = vmatpush.msra.mxu0 %v517
    %v519 = vand.u32 %v118, 4294901760
    %v520 = vsub.f32 %v118, %v519
    %v521 = vand.u32 %v520, 4294901760
    %v522 = vsub.f32 %v520, %v521
    %v523 = vand.u32 %v522, 4294901760
    %524 = vmatpush.msra.mxu0 %v523
    %v525 = vand.u32 %v116, 4294901760
    %v526 = vsub.f32 %v116, %v525
    %v527 = vand.u32 %v526, 4294901760
    %v528 = vsub.f32 %v526, %v527
    %v529 = vand.u32 %v528, 4294901760
    %530 = vmatpush.msra.mxu0 %v529
    %v531 = vand.u32 %v114, 4294901760
    %v532 = vsub.f32 %v114, %v531
    %v533 = vand.u32 %v532, 4294901760
    %v534 = vsub.f32 %v532, %v533
    %v535 = vand.u32 %v534, 4294901760
    %536 = vmatpush.msra.mxu0 %v535
    %v537 = vand.u32 %v112, 4294901760
    %v538 = vsub.f32 %v112, %v537
    %v539 = vand.u32 %v538, 4294901760
    %v540 = vsub.f32 %v538, %v539
    %v541 = vand.u32 %v540, 4294901760
    %542 = vmatpush.msra.mxu0 %v541
    %v543 = vand.u32 %v110, 4294901760
    %v544 = vsub.f32 %v110, %v543
    %v545 = vand.u32 %v544, 4294901760
    %v546 = vsub.f32 %v544, %v545
    %v547 = vand.u32 %v546, 4294901760
    %548 = vmatpush.msra.mxu0 %v547
    %v549 = vand.u32 %v108, 4294901760
    %v550 = vsub.f32 %v108, %v549
    %v551 = vand.u32 %v550, 4294901760
    %v552 = vsub.f32 %v550, %v551
    %v553 = vand.u32 %v552, 4294901760
    %554 = vmatpush.msra.mxu0 %v553
    %v555 = vand.u32 %v106, 4294901760
    %v556 = vsub.f32 %v106, %v555
    %v557 = vand.u32 %v556, 4294901760
    %v558 = vsub.f32 %v556, %v557
    %v559 = vand.u32 %v558, 4294901760
    %560 = vmatpush.msra.mxu0 %v559
    %v561 = vand.u32 %v191, 4294901760
    %562 = vmatmul.f32.gmra.mxu0 %v561
    %v563 = vpop.f32.mrf.mxu0
    %v564 = vadd.f32 %v495, %v563
    %v565 = vand.u32 %v194, 4294901760
    %566 = vmatmul.f32.gmra.mxu0 %v565
    %v567 = vpop.f32.mrf.mxu0
    %v568 = vadd.f32 %v503, %v567
    %569 = vdwg.mxu0
    %570 = vmatpush.msra.mxu0 0.0
    %571 = vmatpush.msra.mxu0 0.0
    %572 = vmatpush.msra.mxu0 0.0
    %573 = vmatpush.msra.mxu0 0.0
    %574 = vmatpush.msra.mxu0 0.0
    %575 = vmatpush.msra.mxu0 0.0
    %576 = vmatpush.msra.mxu0 0.0
    %577 = vmatpush.msra.mxu0 0.0
    %v578 = vand.u32 %v120, 4294901760
    %v579 = vsub.f32 %v120, %v578
    %580 = vmatpush.msra.mxu0 %v579
    %v581 = vand.u32 %v118, 4294901760
    %v582 = vsub.f32 %v118, %v581
    %583 = vmatpush.msra.mxu0 %v582
    %v584 = vand.u32 %v116, 4294901760
    %v585 = vsub.f32 %v116, %v584
    %586 = vmatpush.msra.mxu0 %v585
    %v587 = vand.u32 %v114, 4294901760
    %v588 = vsub.f32 %v114, %v587
    %589 = vmatpush.msra.mxu0 %v588
    %v590 = vand.u32 %v112, 4294901760
    %v591 = vsub.f32 %v112, %v590
    %592 = vmatpush.msra.mxu0 %v591
    %v593 = vand.u32 %v110, 4294901760
    %v594 = vsub.f32 %v110, %v593
    %595 = vmatpush.msra.mxu0 %v594
    %v596 = vand.u32 %v108, 4294901760
    %v597 = vsub.f32 %v108, %v596
    %598 = vmatpush.msra.mxu0 %v597
    %v599 = vand.u32 %v106, 4294901760
    %v600 = vsub.f32 %v106, %v599
    %601 = vmatpush.msra.mxu0 %v600
    %v602 = vand.u32 %v191, 4294901760
    %v603 = vsub.f32 %v191, %v602
    %604 = vmatmul.f32.gmra.mxu0 %v603
    %v605 = vpop.f32.mrf.mxu0
    %v606 = vadd.f32 %v564, %v605
    %v607 = vand.u32 %v194, 4294901760
    %v608 = vsub.f32 %v194, %v607
    %609 = vmatmul.f32.gmra.mxu0 %v608
    %v610 = vpop.f32.mrf.mxu0
    %v611 = vadd.f32 %v568, %v610
    %612 = vdwg.mxu0
    %613 = vmatpush.msra.mxu0 0.0
    %614 = vmatpush.msra.mxu0 0.0
    %615 = vmatpush.msra.mxu0 0.0
    %616 = vmatpush.msra.mxu0 0.0
    %617 = vmatpush.msra.mxu0 0.0
    %618 = vmatpush.msra.mxu0 0.0
    %619 = vmatpush.msra.mxu0 0.0
    %620 = vmatpush.msra.mxu0 0.0
    %v621 = vand.u32 %v120, 4294901760
    %622 = vmatpush.msra.mxu0 %v621
    %v623 = vand.u32 %v118, 4294901760
    %624 = vmatpush.msra.mxu0 %v623
    %v625 = vand.u32 %v116, 4294901760
    %626 = vmatpush.msra.mxu0 %v625
    %v627 = vand.u32 %v114, 4294901760
    %628 = vmatpush.msra.mxu0 %v627
    %v629 = vand.u32 %v112, 4294901760
    %630 = vmatpush.msra.mxu0 %v629
    %v631 = vand.u32 %v110, 4294901760
    %632 = vmatpush.msra.mxu0 %v631
    %v633 = vand.u32 %v108, 4294901760
    %634 = vmatpush.msra.mxu0 %v633
    %v635 = vand.u32 %v106, 4294901760
    %636 = vmatpush.msra.mxu0 %v635
    %v637 = vand.u32 %v191, 4294901760
    %v638 = vsub.f32 %v191, %v637
    %v639 = vand.u32 %v638, 4294901760
    %640 = vmatmul.f32.gmra.mxu0 %v639
    %v641 = vpop.f32.mrf.mxu0
    %v642 = vadd.f32 %v606, %v641
    %v643 = vand.u32 %v194, 4294901760
    %v644 = vsub.f32 %v194, %v643
    %v645 = vand.u32 %v644, 4294901760
    %646 = vmatmul.f32.gmra.mxu0 %v645
    %v647 = vpop.f32.mrf.mxu0
    %v648 = vadd.f32 %v611, %v647
    %649 = vdwg.mxu0
    %650 = vmatpush.msra.mxu0 0.0
    %651 = vmatpush.msra.mxu0 0.0
    %652 = vmatpush.msra.mxu0 0.0
    %653 = vmatpush.msra.mxu0 0.0
    %654 = vmatpush.msra.mxu0 0.0
    %655 = vmatpush.msra.mxu0 0.0
    %656 = vmatpush.msra.mxu0 0.0
    %657 = vmatpush.msra.mxu0 0.0
    %v658 = vand.u32 %v120, 4294901760
    %v659 = vsub.f32 %v120, %v658
    %v660 = vand.u32 %v659, 4294901760
    %661 = vmatpush.msra.mxu0 %v660
    %v662 = vand.u32 %v118, 4294901760
    %v663 = vsub.f32 %v118, %v662
    %v664 = vand.u32 %v663, 4294901760
    %665 = vmatpush.msra.mxu0 %v664
    %v666 = vand.u32 %v116, 4294901760
    %v667 = vsub.f32 %v116, %v666
    %v668 = vand.u32 %v667, 4294901760
    %669 = vmatpush.msra.mxu0 %v668
    %v670 = vand.u32 %v114, 4294901760
    %v671 = vsub.f32 %v114, %v670
    %v672 = vand.u32 %v671, 4294901760
    %673 = vmatpush.msra.mxu0 %v672
    %v674 = vand.u32 %v112, 4294901760
    %v675 = vsub.f32 %v112, %v674
    %v676 = vand.u32 %v675, 4294901760
    %677 = vmatpush.msra.mxu0 %v676
    %v678 = vand.u32 %v110, 4294901760
    %v679 = vsub.f32 %v110, %v678
    %v680 = vand.u32 %v679, 4294901760
    %681 = vmatpush.msra.mxu0 %v680
    %v682 = vand.u32 %v108, 4294901760
    %v683 = vsub.f32 %v108, %v682
    %v684 = vand.u32 %v683, 4294901760
    %685 = vmatpush.msra.mxu0 %v684
    %v686 = vand.u32 %v106, 4294901760
    %v687 = vsub.f32 %v106, %v686
    %v688 = vand.u32 %v687, 4294901760
    %689 = vmatpush.msra.mxu0 %v688
    %v690 = vand.u32 %v191, 4294901760
    %691 = vmatmul.f32.gmra.mxu0 %v690
    %v692 = vpop.f32.mrf.mxu0
    %v693 = vadd.f32 %v642, %v692
    %v694 = vand.u32 %v194, 4294901760
    %695 = vmatmul.f32.gmra.mxu0 %v694
    %v696 = vpop.f32.mrf.mxu0
    %v697 = vadd.f32 %v648, %v696
    %698 = vdwg.mxu0
    %699 = vmatpush.msra.mxu0 0.0
    %700 = vmatpush.msra.mxu0 0.0
    %701 = vmatpush.msra.mxu0 0.0
    %702 = vmatpush.msra.mxu0 0.0
    %703 = vmatpush.msra.mxu0 0.0
    %704 = vmatpush.msra.mxu0 0.0
    %705 = vmatpush.msra.mxu0 0.0
    %706 = vmatpush.msra.mxu0 0.0
    %v707 = vand.u32 %v120, 4294901760
    %708 = vmatpush.msra.mxu0 %v707
    %v709 = vand.u32 %v118, 4294901760
    %710 = vmatpush.msra.mxu0 %v709
    %v711 = vand.u32 %v116, 4294901760
    %712 = vmatpush.msra.mxu0 %v711
    %v713 = vand.u32 %v114, 4294901760
    %714 = vmatpush.msra.mxu0 %v713
    %v715 = vand.u32 %v112, 4294901760
    %716 = vmatpush.msra.mxu0 %v715
    %v717 = vand.u32 %v110, 4294901760
    %718 = vmatpush.msra.mxu0 %v717
    %v719 = vand.u32 %v108, 4294901760
    %720 = vmatpush.msra.mxu0 %v719
    %v721 = vand.u32 %v106, 4294901760
    %722 = vmatpush.msra.mxu0 %v721
    %v723 = vand.u32 %v191, 4294901760
    %724 = vmatmul.f32.gmra.mxu0 %v723
    %v725 = vpop.f32.mrf.mxu0
    %v726 = vadd.f32 %v693, %v725
    %v727 = vand.u32 %v194, 4294901760
    %728 = vmatmul.f32.gmra.mxu0 %v727
    %v729 = vpop.f32.mrf.mxu0
    %v730 = vadd.f32 %v697, %v729
    %731 = vdwg.mxu0
    %733 = vset.pattern.permute.xlu0 0
    %734 = vperm.xlu0 %733, %v137
    %v735 = vpop.permute.xlu0 %734
    %738 = vset.pattern.permute.xlu0 0
    %739 = vperm.xlu0 %738, %v138
    %v740 = vpop.permute.xlu0 %739
    %743 = vset.pattern.permute.xlu0 0
    %744 = vperm.xlu0 %743, %v139
    %v745 = vpop.permute.xlu0 %744
    %748 = vset.pattern.permute.xlu0 0
    %749 = vperm.xlu0 %748, %v140
    %v750 = vpop.permute.xlu0 %749
    %753 = vset.pattern.permute.xlu0 0
    %754 = vperm.xlu0 %753, %v141
    %v755 = vpop.permute.xlu0 %754
    %758 = vset.pattern.permute.xlu0 0
    %759 = vperm.xlu0 %758, %v142
    %v760 = vpop.permute.xlu0 %759
    %763 = vset.pattern.permute.xlu0 0
    %764 = vperm.xlu0 %763, %v143
    %v765 = vpop.permute.xlu0 %764
    %768 = vset.pattern.permute.xlu0 0
    %769 = vperm.xlu0 %768, %v144
    %v770 = vpop.permute.xlu0 %769
    %773 = vset.pattern.permute.xlu0 0
    %774 = vperm.xlu0 %773, %v145
    %v775 = vpop.permute.xlu0 %774
    %778 = vset.pattern.permute.xlu0 0
    %779 = vperm.xlu0 %778, %v146
    %v780 = vpop.permute.xlu0 %779
    %783 = vset.pattern.permute.xlu0 0
    %784 = vperm.xlu0 %783, %v147
    %v785 = vpop.permute.xlu0 %784
    %788 = vset.pattern.permute.xlu0 0
    %789 = vperm.xlu0 %788, %v148
    %v790 = vpop.permute.xlu0 %789
    %793 = vset.pattern.permute.xlu0 0
    %794 = vperm.xlu0 %793, %v149
    %v795 = vpop.permute.xlu0 %794
    %798 = vset.pattern.permute.xlu0 0
    %799 = vperm.xlu0 %798, %v150
    %v800 = vpop.permute.xlu0 %799
    %803 = vset.pattern.permute.xlu0 0
    %804 = vperm.xlu0 %803, %v151
    %v805 = vpop.permute.xlu0 %804
    %808 = vset.pattern.permute.xlu0 0
    %809 = vperm.xlu0 %808, %v152
    %v810 = vpop.permute.xlu0 %809
    %vm812 = vcmask 130048
    %v814 = vsel %vm812, %v121, 0
    %v817 = vsel %vm812, %v122, 0
    %v820 = vsel %vm812, %v123, 0
    %v823 = vsel %vm812, %v124, 0
    %v826 = vsel %vm812, %v125, 0
    %v829 = vsel %vm812, %v126, 0
    %v832 = vsel %vm812, %v127, 0
    %v835 = vsel %vm812, %v128, 0
    %v838 = vsel %vm812, %v129, 0
    %v841 = vsel %vm812, %v130, 0
    %v844 = vsel %vm812, %v131, 0
    %v847 = vsel %vm812, %v132, 0
    %v850 = vsel %vm812, %v133, 0
    %v853 = vsel %vm812, %v134, 0
    %v856 = vsel %vm812, %v135, 0
    %v859 = vsel %vm812, %v136, 0
    %861 = vmatpush.msra.mxu0 0.0
    %862 = vmatpush.msra.mxu0 0.0
    %863 = vmatpush.msra.mxu0 0.0
    %864 = vmatpush.msra.mxu0 0.0
    %865 = vmatpush.msra.mxu0 0.0
    %866 = vmatpush.msra.mxu0 0.0
    %867 = vmatpush.msra.mxu0 0.0
    %868 = vmatpush.msra.mxu0 0.0
    %869 = vmatpush.msra.mxu0 0.0
    %870 = vmatpush.msra.mxu0 0.0
    %871 = vmatpush.msra.mxu0 0.0
    %872 = vmatpush.msra.mxu0 0.0
    %873 = vmatpush.msra.mxu0 0.0
    %874 = vmatpush.msra.mxu0 0.0
    %875 = vmatpush.msra.mxu0 %v462
    %876 = vmatpush.msra.mxu0 %v458
    %877 = vmatmul.f32.gmra.mxu0 %v814
    %v878 = vpop.f32.mrf.mxu0
    %v879 = vadd.f32 %v735, %v878
    %880 = vmatmul.f32.gmra.mxu0 %v817
    %v881 = vpop.f32.mrf.mxu0
    %v882 = vadd.f32 %v740, %v881
    %883 = vmatmul.f32.gmra.mxu0 %v820
    %v884 = vpop.f32.mrf.mxu0
    %v885 = vadd.f32 %v745, %v884
    %886 = vmatmul.f32.gmra.mxu0 %v823
    %v887 = vpop.f32.mrf.mxu0
    %v888 = vadd.f32 %v750, %v887
    %889 = vmatmul.f32.gmra.mxu0 %v826
    %v890 = vpop.f32.mrf.mxu0
    %v891 = vadd.f32 %v755, %v890
    %892 = vmatmul.f32.gmra.mxu0 %v829
    %v893 = vpop.f32.mrf.mxu0
    %v894 = vadd.f32 %v760, %v893
    %895 = vmatmul.f32.gmra.mxu0 %v832
    %v896 = vpop.f32.mrf.mxu0
    %v897 = vadd.f32 %v765, %v896
    %898 = vmatmul.f32.gmra.mxu0 %v835
    %v899 = vpop.f32.mrf.mxu0
    %v900 = vadd.f32 %v770, %v899
    %901 = vmatmul.f32.gmra.mxu0 %v838
    %v902 = vpop.f32.mrf.mxu0
    %v903 = vadd.f32 %v775, %v902
    %904 = vmatmul.f32.gmra.mxu0 %v841
    %v905 = vpop.f32.mrf.mxu0
    %v906 = vadd.f32 %v780, %v905
    %907 = vmatmul.f32.gmra.mxu0 %v844
    %v908 = vpop.f32.mrf.mxu0
    %v909 = vadd.f32 %v785, %v908
    %910 = vmatmul.f32.gmra.mxu0 %v847
    %v911 = vpop.f32.mrf.mxu0
    %v912 = vadd.f32 %v790, %v911
    %913 = vmatmul.f32.gmra.mxu0 %v850
    %v914 = vpop.f32.mrf.mxu0
    %v915 = vadd.f32 %v795, %v914
    %916 = vmatmul.f32.gmra.mxu0 %v853
    %v917 = vpop.f32.mrf.mxu0
    %v918 = vadd.f32 %v800, %v917
    %919 = vmatmul.f32.gmra.mxu0 %v856
    %v920 = vpop.f32.mrf.mxu0
    %v921 = vadd.f32 %v805, %v920
    %922 = vmatmul.f32.gmra.mxu0 %v859
    %v923 = vpop.f32.mrf.mxu0
    %v924 = vadd.f32 %v810, %v923
    %925 = vdwg.mxu0
    %926 = vmatpush.msra.mxu0 0.0
    %927 = vmatpush.msra.mxu0 0.0
    %928 = vmatpush.msra.mxu0 0.0
    %929 = vmatpush.msra.mxu0 0.0
    %930 = vmatpush.msra.mxu0 0.0
    %931 = vmatpush.msra.mxu0 0.0
    %932 = vmatpush.msra.mxu0 0.0
    %933 = vmatpush.msra.mxu0 0.0
    %934 = vmatpush.msra.mxu0 0.0
    %935 = vmatpush.msra.mxu0 0.0
    %936 = vmatpush.msra.mxu0 0.0
    %937 = vmatpush.msra.mxu0 0.0
    %938 = vmatpush.msra.mxu0 0.0
    %939 = vmatpush.msra.mxu0 0.0
    %940 = vmatpush.msra.mxu0 %v730
    %941 = vmatpush.msra.mxu0 %v726
    %942 = vmatmul.f32.gmra.mxu0 %v814
    %v943 = vpop.f32.mrf.mxu0
    %v944 = vadd.f32 %v735, %v943
    %945 = vmatmul.f32.gmra.mxu0 %v817
    %v946 = vpop.f32.mrf.mxu0
    %v947 = vadd.f32 %v740, %v946
    %948 = vmatmul.f32.gmra.mxu0 %v820
    %v949 = vpop.f32.mrf.mxu0
    %v950 = vadd.f32 %v745, %v949
    %951 = vmatmul.f32.gmra.mxu0 %v823
    %v952 = vpop.f32.mrf.mxu0
    %v953 = vadd.f32 %v750, %v952
    %954 = vmatmul.f32.gmra.mxu0 %v826
    %v955 = vpop.f32.mrf.mxu0
    %v956 = vadd.f32 %v755, %v955
    %957 = vmatmul.f32.gmra.mxu0 %v829
    %v958 = vpop.f32.mrf.mxu0
    %v959 = vadd.f32 %v760, %v958
    %960 = vmatmul.f32.gmra.mxu0 %v832
    %v961 = vpop.f32.mrf.mxu0
    %v962 = vadd.f32 %v765, %v961
    %963 = vmatmul.f32.gmra.mxu0 %v835
    %v964 = vpop.f32.mrf.mxu0
    %v965 = vadd.f32 %v770, %v964
    %966 = vmatmul.f32.gmra.mxu0 %v838
    %v967 = vpop.f32.mrf.mxu0
    %v968 = vadd.f32 %v775, %v967
    %969 = vmatmul.f32.gmra.mxu0 %v841
    %v970 = vpop.f32.mrf.mxu0
    %v971 = vadd.f32 %v780, %v970
    %972 = vmatmul.f32.gmra.mxu0 %v844
    %v973 = vpop.f32.mrf.mxu0
    %v974 = vadd.f32 %v785, %v973
    %975 = vmatmul.f32.gmra.mxu0 %v847
    %v976 = vpop.f32.mrf.mxu0
    %v977 = vadd.f32 %v790, %v976
    %978 = vmatmul.f32.gmra.mxu0 %v850
    %v979 = vpop.f32.mrf.mxu0
    %v980 = vadd.f32 %v795, %v979
    %981 = vmatmul.f32.gmra.mxu0 %v853
    %v982 = vpop.f32.mrf.mxu0
    %v983 = vadd.f32 %v800, %v982
    %984 = vmatmul.f32.gmra.mxu0 %v856
    %v985 = vpop.f32.mrf.mxu0
    %v986 = vadd.f32 %v805, %v985
    %987 = vmatmul.f32.gmra.mxu0 %v859
    %v988 = vpop.f32.mrf.mxu0
    %v989 = vadd.f32 %v810, %v988
    %990 = vdwg.mxu0
    %v991 = vmax.f32 %v879, 0.0
    %v992 = vmax.f32 %v944, 0.0
    %v993 = vmax.f32 %v882, 0.0
    %v994 = vmax.f32 %v947, 0.0
    %v995 = vmax.f32 %v885, 0.0
    %v996 = vmax.f32 %v950, 0.0
    %v997 = vmax.f32 %v888, 0.0
    %v998 = vmax.f32 %v953, 0.0
    %v999 = vmax.f32 %v891, 0.0
    %v1000 = vmax.f32 %v956, 0.0
    %v1001 = vmax.f32 %v894, 0.0
    %v1002 = vmax.f32 %v959, 0.0
    %v1003 = vmax.f32 %v897, 0.0
    %v1004 = vmax.f32 %v962, 0.0
    %v1005 = vmax.f32 %v900, 0.0
    %v1006 = vmax.f32 %v965, 0.0
    %v1007 = vmax.f32 %v903, 0.0
    %v1008 = vmax.f32 %v968, 0.0
    %v1009 = vmax.f32 %v906, 0.0
    %v1010 = vmax.f32 %v971, 0.0
    %v1011 = vmax.f32 %v909, 0.0
    %v1012 = vmax.f32 %v974, 0.0
    %v1013 = vmax.f32 %v912, 0.0
    %v1014 = vmax.f32 %v977, 0.0
    %v1015 = vmax.f32 %v915, 0.0
    %v1016 = vmax.f32 %v980, 0.0
    %v1017 = vmax.f32 %v918, 0.0
    %v1018 = vmax.f32 %v983, 0.0
    %v1019 = vmax.f32 %v921, 0.0
    %v1020 = vmax.f32 %v986, 0.0
    %v1021 = vmax.f32 %v924, 0.0
    %v1022 = vmax.f32 %v989, 0.0
    %1024 = vset.pattern.permute.xlu0 0
    %1025 = vperm.xlu0 %1024, %v169
    %v1026 = vpop.permute.xlu0 %1025
    %1029 = vset.pattern.permute.xlu0 0
    %1030 = vperm.xlu0 %1029, %v170
    %v1031 = vpop.permute.xlu0 %1030
    %1034 = vset.pattern.permute.xlu0 0
    %1035 = vperm.xlu0 %1034, %v171
    %v1036 = vpop.permute.xlu0 %1035
    %1039 = vset.pattern.permute.xlu0 0
    %1040 = vperm.xlu0 %1039, %v172
    %v1041 = vpop.permute.xlu0 %1040
    %1044 = vset.pattern.permute.xlu0 0
    %1045 = vperm.xlu0 %1044, %v173
    %v1046 = vpop.permute.xlu0 %1045
    %1049 = vset.pattern.permute.xlu0 0
    %1050 = vperm.xlu0 %1049, %v174
    %v1051 = vpop.permute.xlu0 %1050
    %1054 = vset.pattern.permute.xlu0 0
    %1055 = vperm.xlu0 %1054, %v175
    %v1056 = vpop.permute.xlu0 %1055
    %1059 = vset.pattern.permute.xlu0 0
    %1060 = vperm.xlu0 %1059, %v176
    %v1061 = vpop.permute.xlu0 %1060
    %1064 = vset.pattern.permute.xlu0 0
    %1065 = vperm.xlu0 %1064, %v177
    %v1066 = vpop.permute.xlu0 %1065
    %1069 = vset.pattern.permute.xlu0 0
    %1070 = vperm.xlu0 %1069, %v178
    %v1071 = vpop.permute.xlu0 %1070
    %1074 = vset.pattern.permute.xlu0 0
    %1075 = vperm.xlu0 %1074, %v179
    %v1076 = vpop.permute.xlu0 %1075
    %1079 = vset.pattern.permute.xlu0 0
    %1080 = vperm.xlu0 %1079, %v180
    %v1081 = vpop.permute.xlu0 %1080
    %1084 = vset.pattern.permute.xlu0 0
    %1085 = vperm.xlu0 %1084, %v181
    %v1086 = vpop.permute.xlu0 %1085
    %1089 = vset.pattern.permute.xlu0 0
    %1090 = vperm.xlu0 %1089, %v182
    %v1091 = vpop.permute.xlu0 %1090
    %1094 = vset.pattern.permute.xlu0 0
    %1095 = vperm.xlu0 %1094, %v183
    %v1096 = vpop.permute.xlu0 %1095
    %1099 = vset.pattern.permute.xlu0 0
    %1100 = vperm.xlu0 %1099, %v184
    %v1101 = vpop.permute.xlu0 %1100
    %1103 = vmatpush.msra.mxu0 %v1021
    %1104 = vmatpush.msra.mxu0 %v1019
    %1105 = vmatpush.msra.mxu0 %v1017
    %1106 = vmatpush.msra.mxu0 %v1015
    %1107 = vmatpush.msra.mxu0 %v1013
    %1108 = vmatpush.msra.mxu0 %v1011
    %1109 = vmatpush.msra.mxu0 %v1009
    %1110 = vmatpush.msra.mxu0 %v1007
    %1111 = vmatpush.msra.mxu0 %v1005
    %1112 = vmatpush.msra.mxu0 %v1003
    %1113 = vmatpush.msra.mxu0 %v1001
    %1114 = vmatpush.msra.mxu0 %v999
    %1115 = vmatpush.msra.mxu0 %v997
    %1116 = vmatpush.msra.mxu0 %v995
    %1117 = vmatpush.msra.mxu0 %v993
    %1118 = vmatpush.msra.mxu0 %v991
    %1119 = vmatmul.f32.gmra.mxu0 %v153
    %v1120 = vpop.f32.mrf.mxu0
    %v1121 = vadd.f32 %v1026, %v1120
    %1122 = vmatmul.f32.gmra.mxu0 %v154
    %v1123 = vpop.f32.mrf.mxu0
    %v1124 = vadd.f32 %v1031, %v1123
    %1125 = vmatmul.f32.gmra.mxu0 %v155
    %v1126 = vpop.f32.mrf.mxu0
    %v1127 = vadd.f32 %v1036, %v1126
    %1128 = vmatmul.f32.gmra.mxu0 %v156
    %v1129 = vpop.f32.mrf.mxu0
    %v1130 = vadd.f32 %v1041, %v1129
    %1131 = vmatmul.f32.gmra.mxu0 %v157
    %v1132 = vpop.f32.mrf.mxu0
    %v1133 = vadd.f32 %v1046, %v1132
    %1134 = vmatmul.f32.gmra.mxu0 %v158
    %v1135 = vpop.f32.mrf.mxu0
    %v1136 = vadd.f32 %v1051, %v1135
    %1137 = vmatmul.f32.gmra.mxu0 %v159
    %v1138 = vpop.f32.mrf.mxu0
    %v1139 = vadd.f32 %v1056, %v1138
    %1140 = vmatmul.f32.gmra.mxu0 %v160
    %v1141 = vpop.f32.mrf.mxu0
    %v1142 = vadd.f32 %v1061, %v1141
    %1143 = vmatmul.f32.gmra.mxu0 %v161
    %v1144 = vpop.f32.mrf.mxu0
    %v1145 = vadd.f32 %v1066, %v1144
    %1146 = vmatmul.f32.gmra.mxu0 %v162
    %v1147 = vpop.f32.mrf.mxu0
    %v1148 = vadd.f32 %v1071, %v1147
    %1149 = vmatmul.f32.gmra.mxu0 %v163
    %v1150 = vpop.f32.mrf.mxu0
    %v1151 = vadd.f32 %v1076, %v1150
    %1152 = vmatmul.f32.gmra.mxu0 %v164
    %v1153 = vpop.f32.mrf.mxu0
    %v1154 = vadd.f32 %v1081, %v1153
    %1155 = vmatmul.f32.gmra.mxu0 %v165
    %v1156 = vpop.f32.mrf.mxu0
    %v1157 = vadd.f32 %v1086, %v1156
    %1158 = vmatmul.f32.gmra.mxu0 %v166
    %v1159 = vpop.f32.mrf.mxu0
    %v1160 = vadd.f32 %v1091, %v1159
    %1161 = vmatmul.f32.gmra.mxu0 %v167
    %v1162 = vpop.f32.mrf.mxu0
    %v1163 = vadd.f32 %v1096, %v1162
    %1164 = vmatmul.f32.gmra.mxu0 %v168
    %v1165 = vpop.f32.mrf.mxu0
    %v1166 = vadd.f32 %v1101, %v1165
    %1167 = vdwg.mxu0
    %1168 = vmatpush.msra.mxu0 %v1022
    %1169 = vmatpush.msra.mxu0 %v1020
    %1170 = vmatpush.msra.mxu0 %v1018
    %1171 = vmatpush.msra.mxu0 %v1016
    %1172 = vmatpush.msra.mxu0 %v1014
    %1173 = vmatpush.msra.mxu0 %v1012
    %1174 = vmatpush.msra.mxu0 %v1010
    %1175 = vmatpush.msra.mxu0 %v1008
    %1176 = vmatpush.msra.mxu0 %v1006
    %1177 = vmatpush.msra.mxu0 %v1004
    %1178 = vmatpush.msra.mxu0 %v1002
    %1179 = vmatpush.msra.mxu0 %v1000
    %1180 = vmatpush.msra.mxu0 %v998
    %1181 = vmatpush.msra.mxu0 %v996
    %1182 = vmatpush.msra.mxu0 %v994
    %1183 = vmatpush.msra.mxu0 %v992
    %1184 = vmatmul.f32.gmra.mxu0 %v153
    %v1185 = vpop.f32.mrf.mxu0
    %v1186 = vadd.f32 %v1026, %v1185
    %1187 = vmatmul.f32.gmra.mxu0 %v154
    %v1188 = vpop.f32.mrf.mxu0
    %v1189 = vadd.f32 %v1031, %v1188
    %1190 = vmatmul.f32.gmra.mxu0 %v155
    %v1191 = vpop.f32.mrf.mxu0
    %v1192 = vadd.f32 %v1036, %v1191
    %1193 = vmatmul.f32.gmra.mxu0 %v156
    %v1194 = vpop.f32.mrf.mxu0
    %v1195 = vadd.f32 %v1041, %v1194
    %1196 = vmatmul.f32.gmra.mxu0 %v157
    %v1197 = vpop.f32.mrf.mxu0
    %v1198 = vadd.f32 %v1046, %v1197
    %1199 = vmatmul.f32.gmra.mxu0 %v158
    %v1200 = vpop.f32.mrf.mxu0
    %v1201 = vadd.f32 %v1051, %v1200
    %1202 = vmatmul.f32.gmra.mxu0 %v159
    %v1203 = vpop.f32.mrf.mxu0
    %v1204 = vadd.f32 %v1056, %v1203
    %1205 = vmatmul.f32.gmra.mxu0 %v160
    %v1206 = vpop.f32.mrf.mxu0
    %v1207 = vadd.f32 %v1061, %v1206
    %1208 = vmatmul.f32.gmra.mxu0 %v161
    %v1209 = vpop.f32.mrf.mxu0
    %v1210 = vadd.f32 %v1066, %v1209
    %1211 = vmatmul.f32.gmra.mxu0 %v162
    %v1212 = vpop.f32.mrf.mxu0
    %v1213 = vadd.f32 %v1071, %v1212
    %1214 = vmatmul.f32.gmra.mxu0 %v163
    %v1215 = vpop.f32.mrf.mxu0
    %v1216 = vadd.f32 %v1076, %v1215
    %1217 = vmatmul.f32.gmra.mxu0 %v164
    %v1218 = vpop.f32.mrf.mxu0
    %v1219 = vadd.f32 %v1081, %v1218
    %1220 = vmatmul.f32.gmra.mxu0 %v165
    %v1221 = vpop.f32.mrf.mxu0
    %v1222 = vadd.f32 %v1086, %v1221
    %1223 = vmatmul.f32.gmra.mxu0 %v166
    %v1224 = vpop.f32.mrf.mxu0
    %v1225 = vadd.f32 %v1091, %v1224
    %1226 = vmatmul.f32.gmra.mxu0 %v167
    %v1227 = vpop.f32.mrf.mxu0
    %v1228 = vadd.f32 %v1096, %v1227
    %1229 = vmatmul.f32.gmra.mxu0 %v168
    %v1230 = vpop.f32.mrf.mxu0
    %v1231 = vadd.f32 %v1101, %v1230
    %1232 = vdwg.mxu0
    %v1233 = vmax.f32 %v1121, 0.0
    %v1234 = vmax.f32 %v1186, 0.0
    %v1235 = vmax.f32 %v1124, 0.0
    %v1236 = vmax.f32 %v1189, 0.0
    %v1237 = vmax.f32 %v1127, 0.0
    %v1238 = vmax.f32 %v1192, 0.0
    %v1239 = vmax.f32 %v1130, 0.0
    %v1240 = vmax.f32 %v1195, 0.0
    %v1241 = vmax.f32 %v1133, 0.0
    %v1242 = vmax.f32 %v1198, 0.0
    %v1243 = vmax.f32 %v1136, 0.0
    %v1244 = vmax.f32 %v1201, 0.0
    %v1245 = vmax.f32 %v1139, 0.0
    %v1246 = vmax.f32 %v1204, 0.0
    %v1247 = vmax.f32 %v1142, 0.0
    %v1248 = vmax.f32 %v1207, 0.0
    %v1249 = vmax.f32 %v1145, 0.0
    %v1250 = vmax.f32 %v1210, 0.0
    %v1251 = vmax.f32 %v1148, 0.0
    %v1252 = vmax.f32 %v1213, 0.0
    %v1253 = vmax.f32 %v1151, 0.0
    %v1254 = vmax.f32 %v1216, 0.0
    %v1255 = vmax.f32 %v1154, 0.0
    %v1256 = vmax.f32 %v1219, 0.0
    %v1257 = vmax.f32 %v1157, 0.0
    %v1258 = vmax.f32 %v1222, 0.0
    %v1259 = vmax.f32 %v1160, 0.0
    %v1260 = vmax.f32 %v1225, 0.0
    %v1261 = vmax.f32 %v1163, 0.0
    %v1262 = vmax.f32 %v1228, 0.0
    %v1263 = vmax.f32 %v1166, 0.0
    %v1264 = vmax.f32 %v1231, 0.0
    %v1265 = vstv %s186
    %1266 = vmatpush.msra.mxu0 %v1263
    %1267 = vmatpush.msra.mxu0 %v1261
    %1268 = vmatpush.msra.mxu0 %v1259
    %1269 = vmatpush.msra.mxu0 %v1257
    %1270 = vmatpush.msra.mxu0 %v1255
    %1271 = vmatpush.msra.mxu0 %v1253
    %1272 = vmatpush.msra.mxu0 %v1251
    %1273 = vmatpush.msra.mxu0 %v1249
    %1274 = vmatpush.msra.mxu0 %v1247
    %1275 = vmatpush.msra.mxu0 %v1245
    %1276 = vmatpush.msra.mxu0 %v1243
    %1277 = vmatpush.msra.mxu0 %v1241
    %1278 = vmatpush.msra.mxu0 %v1239
    %1279 = vmatpush.msra.mxu0 %v1237
    %1280 = vmatpush.msra.mxu0 %v1235
    %1281 = vmatpush.msra.mxu0 %v1233
    %1282 = vmatmul.f32.gmra.mxu0 %v185
    %v1283 = vpop.f32.mrf.mxu0
    %v1284 = vadd.f32 %v1265, %v1283
    %1285 = vdwg.mxu0
    %1286 = vmatpush.msra.mxu0 %v1264
    %1287 = vmatpush.msra.mxu0 %v1262
    %1288 = vmatpush.msra.mxu0 %v1260
    %1289 = vmatpush.msra.mxu0 %v1258
    %1290 = vmatpush.msra.mxu0 %v1256
    %1291 = vmatpush.msra.mxu0 %v1254
    %1292 = vmatpush.msra.mxu0 %v1252
    %1293 = vmatpush.msra.mxu0 %v1250
    %1294 = vmatpush.msra.mxu0 %v1248
    %1295 = vmatpush.msra.mxu0 %v1246
    %1296 = vmatpush.msra.mxu0 %v1244
    %1297 = vmatpush.msra.mxu0 %v1242
    %1298 = vmatpush.msra.mxu0 %v1240
    %1299 = vmatpush.msra.mxu0 %v1238
    %1300 = vmatpush.msra.mxu0 %v1236
    %1301 = vmatpush.msra.mxu0 %v1234
    %1302 = vmatmul.f32.gmra.mxu0 %v185
    %v1303 = vpop.f32.mrf.mxu0
    %v1304 = vadd.f32 %v1265, %v1303
    %1305 = vdwg.mxu0
    %v1308 = vrot.slane %v1304, 7
    %vm1309 = vcmask 1040384
    %v1310 = vsel %vm1309, %v1284, %v1308
    %v1312 = vlaneseq
    %vm1313 = vcmp.ge.s32.totalorder %v1312, 0
    %vm1314 = vcmp.lt.s32.totalorder %v1312, 256
    %vm1315 = vmand %vm1313, %vm1314
    %1316 = vst.msk [vmem:[#allocation3] ss:$4 sm:$0x3] %vm1315, %v1310
    %s1317 = scalar_lea.vmem %s1, 16
    %v1318 = vld [vmem:[%s1317] sm:$0xff]
    %v1319 = vld [vmem:[%s1317 + $0x8] sm:$0xff]
    %v1321 = vsel %vm189, %v1318, 0
    %v1324 = vsel %vm189, %v1319, 0
    %1326 = vmatpush.msra.mxu0 0.0
    %1327 = vmatpush.msra.mxu0 0.0
    %1328 = vmatpush.msra.mxu0 0.0
    %1329 = vmatpush.msra.mxu0 0.0
    %1330 = vmatpush.msra.mxu0 0.0
    %1331 = vmatpush.msra.mxu0 0.0
    %1332 = vmatpush.msra.mxu0 0.0
    %1333 = vmatpush.msra.mxu0 0.0
    %v1334 = vand.u32 %v119, 4294901760
    %1335 = vmatpush.msra.mxu0 %v1334
    %v1336 = vand.u32 %v117, 4294901760
    %1337 = vmatpush.msra.mxu0 %v1336
    %v1338 = vand.u32 %v115, 4294901760
    %1339 = vmatpush.msra.mxu0 %v1338
    %v1340 = vand.u32 %v113, 4294901760
    %1341 = vmatpush.msra.mxu0 %v1340
    %v1342 = vand.u32 %v111, 4294901760
    %1343 = vmatpush.msra.mxu0 %v1342
    %v1344 = vand.u32 %v109, 4294901760
    %1345 = vmatpush.msra.mxu0 %v1344
    %v1346 = vand.u32 %v107, 4294901760
    %1347 = vmatpush.msra.mxu0 %v1346
    %v1348 = vand.u32 %v105, 4294901760
    %1349 = vmatpush.msra.mxu0 %v1348
    %v1350 = vand.u32 %v1321, 4294901760
    %v1351 = vsub.f32 %v1321, %v1350
    %v1352 = vand.u32 %v1351, 4294901760
    %v1353 = vsub.f32 %v1351, %v1352
    %v1354 = vand.u32 %v1353, 4294901760
    %1355 = vmatmul.f32.gmra.mxu0 %v1354
    %v1356 = vpop.f32.mrf.mxu0
    %v1357 = vadd.f32 0.0, %v1356
    %v1358 = vand.u32 %v1324, 4294901760
    %v1359 = vsub.f32 %v1324, %v1358
    %v1360 = vand.u32 %v1359, 4294901760
    %v1361 = vsub.f32 %v1359, %v1360
    %v1362 = vand.u32 %v1361, 4294901760
    %1363 = vmatmul.f32.gmra.mxu0 %v1362
    %v1364 = vpop.f32.mrf.mxu0
    %v1365 = vadd.f32 0.0, %v1364
    %1366 = vdwg.mxu0
    %1367 = vmatpush.msra.mxu0 0.0
    %1368 = vmatpush.msra.mxu0 0.0
    %1369 = vmatpush.msra.mxu0 0.0
    %1370 = vmatpush.msra.mxu0 0.0
    %1371 = vmatpush.msra.mxu0 0.0
    %1372 = vmatpush.msra.mxu0 0.0
    %1373 = vmatpush.msra.mxu0 0.0
    %1374 = vmatpush.msra.mxu0 0.0
    %v1375 = vand.u32 %v119, 4294901760
    %v1376 = vsub.f32 %v119, %v1375
    %v1377 = vand.u32 %v1376, 4294901760
    %v1378 = vsub.f32 %v1376, %v1377
    %v1379 = vand.u32 %v1378, 4294901760
    %1380 = vmatpush.msra.mxu0 %v1379
    %v1381 = vand.u32 %v117, 4294901760
    %v1382 = vsub.f32 %v117, %v1381
    %v1383 = vand.u32 %v1382, 4294901760
    %v1384 = vsub.f32 %v1382, %v1383
    %v1385 = vand.u32 %v1384, 4294901760
    %1386 = vmatpush.msra.mxu0 %v1385
    %v1387 = vand.u32 %v115, 4294901760
    %v1388 = vsub.f32 %v115, %v1387
    %v1389 = vand.u32 %v1388, 4294901760
    %v1390 = vsub.f32 %v1388, %v1389
    %v1391 = vand.u32 %v1390, 4294901760
    %1392 = vmatpush.msra.mxu0 %v1391
    %v1393 = vand.u32 %v113, 4294901760
    %v1394 = vsub.f32 %v113, %v1393
    %v1395 = vand.u32 %v1394, 4294901760
    %v1396 = vsub.f32 %v1394, %v1395
    %v1397 = vand.u32 %v1396, 4294901760
    %1398 = vmatpush.msra.mxu0 %v1397
    %v1399 = vand.u32 %v111, 4294901760
    %v1400 = vsub.f32 %v111, %v1399
    %v1401 = vand.u32 %v1400, 4294901760
    %v1402 = vsub.f32 %v1400, %v1401
    %v1403 = vand.u32 %v1402, 4294901760
    %1404 = vmatpush.msra.mxu0 %v1403
    %v1405 = vand.u32 %v109, 4294901760
    %v1406 = vsub.f32 %v109, %v1405
    %v1407 = vand.u32 %v1406, 4294901760
    %v1408 = vsub.f32 %v1406, %v1407
    %v1409 = vand.u32 %v1408, 4294901760
    %1410 = vmatpush.msra.mxu0 %v1409
    %v1411 = vand.u32 %v107, 4294901760
    %v1412 = vsub.f32 %v107, %v1411
    %v1413 = vand.u32 %v1412, 4294901760
    %v1414 = vsub.f32 %v1412, %v1413
    %v1415 = vand.u32 %v1414, 4294901760
    %1416 = vmatpush.msra.mxu0 %v1415
    %v1417 = vand.u32 %v105, 4294901760
    %v1418 = vsub.f32 %v105, %v1417
    %v1419 = vand.u32 %v1418, 4294901760
    %v1420 = vsub.f32 %v1418, %v1419
    %v1421 = vand.u32 %v1420, 4294901760
    %1422 = vmatpush.msra.mxu0 %v1421
    %v1423 = vand.u32 %v1321, 4294901760
    %1424 = vmatmul.f32.gmra.mxu0 %v1423
    %v1425 = vpop.f32.mrf.mxu0
    %v1426 = vadd.f32 %v1357, %v1425
    %v1427 = vand.u32 %v1324, 4294901760
    %1428 = vmatmul.f32.gmra.mxu0 %v1427
    %v1429 = vpop.f32.mrf.mxu0
    %v1430 = vadd.f32 %v1365, %v1429
    %1431 = vdwg.mxu0
    %1432 = vmatpush.msra.mxu0 0.0
    %1433 = vmatpush.msra.mxu0 0.0
    %1434 = vmatpush.msra.mxu0 0.0
    %1435 = vmatpush.msra.mxu0 0.0
    %1436 = vmatpush.msra.mxu0 0.0
    %1437 = vmatpush.msra.mxu0 0.0
    %1438 = vmatpush.msra.mxu0 0.0
    %1439 = vmatpush.msra.mxu0 0.0
    %v1440 = vand.u32 %v119, 4294901760
    %v1441 = vsub.f32 %v119, %v1440
    %1442 = vmatpush.msra.mxu0 %v1441
    %v1443 = vand.u32 %v117, 4294901760
    %v1444 = vsub.f32 %v117, %v1443
    %1445 = vmatpush.msra.mxu0 %v1444
    %v1446 = vand.u32 %v115, 4294901760
    %v1447 = vsub.f32 %v115, %v1446
    %1448 = vmatpush.msra.mxu0 %v1447
    %v1449 = vand.u32 %v113, 4294901760
    %v1450 = vsub.f32 %v113, %v1449
    %1451 = vmatpush.msra.mxu0 %v1450
    %v1452 = vand.u32 %v111, 4294901760
    %v1453 = vsub.f32 %v111, %v1452
    %1454 = vmatpush.msra.mxu0 %v1453
    %v1455 = vand.u32 %v109, 4294901760
    %v1456 = vsub.f32 %v109, %v1455
    %1457 = vmatpush.msra.mxu0 %v1456
    %v1458 = vand.u32 %v107, 4294901760
    %v1459 = vsub.f32 %v107, %v1458
    %1460 = vmatpush.msra.mxu0 %v1459
    %v1461 = vand.u32 %v105, 4294901760
    %v1462 = vsub.f32 %v105, %v1461
    %1463 = vmatpush.msra.mxu0 %v1462
    %v1464 = vand.u32 %v1321, 4294901760
    %v1465 = vsub.f32 %v1321, %v1464
    %1466 = vmatmul.f32.gmra.mxu0 %v1465
    %v1467 = vpop.f32.mrf.mxu0
    %v1468 = vadd.f32 %v1426, %v1467
    %v1469 = vand.u32 %v1324, 4294901760
    %v1470 = vsub.f32 %v1324, %v1469
    %1471 = vmatmul.f32.gmra.mxu0 %v1470
    %v1472 = vpop.f32.mrf.mxu0
    %v1473 = vadd.f32 %v1430, %v1472
    %1474 = vdwg.mxu0
    %1475 = vmatpush.msra.mxu0 0.0
    %1476 = vmatpush.msra.mxu0 0.0
    %1477 = vmatpush.msra.mxu0 0.0
    %1478 = vmatpush.msra.mxu0 0.0
    %1479 = vmatpush.msra.mxu0 0.0
    %1480 = vmatpush.msra.mxu0 0.0
    %1481 = vmatpush.msra.mxu0 0.0
    %1482 = vmatpush.msra.mxu0 0.0
    %v1483 = vand.u32 %v119, 4294901760
    %1484 = vmatpush.msra.mxu0 %v1483
    %v1485 = vand.u32 %v117, 4294901760
    %1486 = vmatpush.msra.mxu0 %v1485
    %v1487 = vand.u32 %v115, 4294901760
    %1488 = vmatpush.msra.mxu0 %v1487
    %v1489 = vand.u32 %v113, 4294901760
    %1490 = vmatpush.msra.mxu0 %v1489
    %v1491 = vand.u32 %v111, 4294901760
    %1492 = vmatpush.msra.mxu0 %v1491
    %v1493 = vand.u32 %v109, 4294901760
    %1494 = vmatpush.msra.mxu0 %v1493
    %v1495 = vand.u32 %v107, 4294901760
    %1496 = vmatpush.msra.mxu0 %v1495
    %v1497 = vand.u32 %v105, 4294901760
    %1498 = vmatpush.msra.mxu0 %v1497
    %v1499 = vand.u32 %v1321, 4294901760
    %v1500 = vsub.f32 %v1321, %v1499
    %v1501 = vand.u32 %v1500, 4294901760
    %1502 = vmatmul.f32.gmra.mxu0 %v1501
    %v1503 = vpop.f32.mrf.mxu0
    %v1504 = vadd.f32 %v1468, %v1503
    %v1505 = vand.u32 %v1324, 4294901760
    %v1506 = vsub.f32 %v1324, %v1505
    %v1507 = vand.u32 %v1506, 4294901760
    %1508 = vmatmul.f32.gmra.mxu0 %v1507
    %v1509 = vpop.f32.mrf.mxu0
    %v1510 = vadd.f32 %v1473, %v1509
    %1511 = vdwg.mxu0
    %1512 = vmatpush.msra.mxu0 0.0
    %1513 = vmatpush.msra.mxu0 0.0
    %1514 = vmatpush.msra.mxu0 0.0
    %1515 = vmatpush.msra.mxu0 0.0
    %1516 = vmatpush.msra.mxu0 0.0
    %1517 = vmatpush.msra.mxu0 0.0
    %1518 = vmatpush.msra.mxu0 0.0
    %1519 = vmatpush.msra.mxu0 0.0
    %v1520 = vand.u32 %v119, 4294901760
    %v1521 = vsub.f32 %v119, %v1520
    %v1522 = vand.u32 %v1521, 4294901760
    %1523 = vmatpush.msra.mxu0 %v1522
    %v1524 = vand.u32 %v117, 4294901760
    %v1525 = vsub.f32 %v117, %v1524
    %v1526 = vand.u32 %v1525, 4294901760
    %1527 = vmatpush.msra.mxu0 %v1526
    %v1528 = vand.u32 %v115, 4294901760
    %v1529 = vsub.f32 %v115, %v1528
    %v1530 = vand.u32 %v1529, 4294901760
    %1531 = vmatpush.msra.mxu0 %v1530
    %v1532 = vand.u32 %v113, 4294901760
    %v1533 = vsub.f32 %v113, %v1532
    %v1534 = vand.u32 %v1533, 4294901760
    %1535 = vmatpush.msra.mxu0 %v1534
    %v1536 = vand.u32 %v111, 4294901760
    %v1537 = vsub.f32 %v111, %v1536
    %v1538 = vand.u32 %v1537, 4294901760
    %1539 = vmatpush.msra.mxu0 %v1538
    %v1540 = vand.u32 %v109, 4294901760
    %v1541 = vsub.f32 %v109, %v1540
    %v1542 = vand.u32 %v1541, 4294901760
    %1543 = vmatpush.msra.mxu0 %v1542
    %v1544 = vand.u32 %v107, 4294901760
    %v1545 = vsub.f32 %v107, %v1544
    %v1546 = vand.u32 %v1545, 4294901760
    %1547 = vmatpush.msra.mxu0 %v1546
    %v1548 = vand.u32 %v105, 4294901760
    %v1549 = vsub.f32 %v105, %v1548
    %v1550 = vand.u32 %v1549, 4294901760
    %1551 = vmatpush.msra.mxu0 %v1550
    %v1552 = vand.u32 %v1321, 4294901760
    %1553 = vmatmul.f32.gmra.mxu0 %v1552
    %v1554 = vpop.f32.mrf.mxu0
    %v1555 = vadd.f32 %v1504, %v1554
    %v1556 = vand.u32 %v1324, 4294901760
    %1557 = vmatmul.f32.gmra.mxu0 %v1556
    %v1558 = vpop.f32.mrf.mxu0
    %v1559 = vadd.f32 %v1510, %v1558
    %1560 = vdwg.mxu0
    %1561 = vmatpush.msra.mxu0 0.0
    %1562 = vmatpush.msra.mxu0 0.0
    %1563 = vmatpush.msra.mxu0 0.0
    %1564 = vmatpush.msra.mxu0 0.0
    %1565 = vmatpush.msra.mxu0 0.0
    %1566 = vmatpush.msra.mxu0 0.0
    %1567 = vmatpush.msra.mxu0 0.0
    %1568 = vmatpush.msra.mxu0 0.0
    %v1569 = vand.u32 %v119, 4294901760
    %1570 = vmatpush.msra.mxu0 %v1569
    %v1571 = vand.u32 %v117, 4294901760
    %1572 = vmatpush.msra.mxu0 %v1571
    %v1573 = vand.u32 %v115, 4294901760
    %1574 = vmatpush.msra.mxu0 %v1573
    %v1575 = vand.u32 %v113, 4294901760
    %1576 = vmatpush.msra.mxu0 %v1575
    %v1577 = vand.u32 %v111, 4294901760
    %1578 = vmatpush.msra.mxu0 %v1577
    %v1579 = vand.u32 %v109, 4294901760
    %1580 = vmatpush.msra.mxu0 %v1579
    %v1581 = vand.u32 %v107, 4294901760
    %1582 = vmatpush.msra.mxu0 %v1581
    %v1583 = vand.u32 %v105, 4294901760
    %1584 = vmatpush.msra.mxu0 %v1583
    %v1585 = vand.u32 %v1321, 4294901760
    %1586 = vmatmul.f32.gmra.mxu0 %v1585
    %v1587 = vpop.f32.mrf.mxu0
    %v1588 = vadd.f32 %v1555, %v1587
    %v1589 = vand.u32 %v1324, 4294901760
    %1590 = vmatmul.f32.gmra.mxu0 %v1589
    %v1591 = vpop.f32.mrf.mxu0
    %v1592 = vadd.f32 %v1559, %v1591
    %1593 = vdwg.mxu0
    %1594 = vmatpush.msra.mxu0 0.0
    %1595 = vmatpush.msra.mxu0 0.0
    %1596 = vmatpush.msra.mxu0 0.0
    %1597 = vmatpush.msra.mxu0 0.0
    %1598 = vmatpush.msra.mxu0 0.0
    %1599 = vmatpush.msra.mxu0 0.0
    %1600 = vmatpush.msra.mxu0 0.0
    %1601 = vmatpush.msra.mxu0 0.0
    %v1602 = vand.u32 %v120, 4294901760
    %1603 = vmatpush.msra.mxu0 %v1602
    %v1604 = vand.u32 %v118, 4294901760
    %1605 = vmatpush.msra.mxu0 %v1604
    %v1606 = vand.u32 %v116, 4294901760
    %1607 = vmatpush.msra.mxu0 %v1606
    %v1608 = vand.u32 %v114, 4294901760
    %1609 = vmatpush.msra.mxu0 %v1608
    %v1610 = vand.u32 %v112, 4294901760
    %1611 = vmatpush.msra.mxu0 %v1610
    %v1612 = vand.u32 %v110, 4294901760
    %1613 = vmatpush.msra.mxu0 %v1612
    %v1614 = vand.u32 %v108, 4294901760
    %1615 = vmatpush.msra.mxu0 %v1614
    %v1616 = vand.u32 %v106, 4294901760
    %1617 = vmatpush.msra.mxu0 %v1616
    %v1618 = vand.u32 %v1321, 4294901760
    %v1619 = vsub.f32 %v1321, %v1618
    %v1620 = vand.u32 %v1619, 4294901760
    %v1621 = vsub.f32 %v1619, %v1620
    %v1622 = vand.u32 %v1621, 4294901760
    %1623 = vmatmul.f32.gmra.mxu0 %v1622
    %v1624 = vpop.f32.mrf.mxu0
    %v1625 = vadd.f32 0.0, %v1624
    %v1626 = vand.u32 %v1324, 4294901760
    %v1627 = vsub.f32 %v1324, %v1626
    %v1628 = vand.u32 %v1627, 4294901760
    %v1629 = vsub.f32 %v1627, %v1628
    %v1630 = vand.u32 %v1629, 4294901760
    %1631 = vmatmul.f32.gmra.mxu0 %v1630
    %v1632 = vpop.f32.mrf.mxu0
    %v1633 = vadd.f32 0.0, %v1632
    %1634 = vdwg.mxu0
    %1635 = vmatpush.msra.mxu0 0.0
    %1636 = vmatpush.msra.mxu0 0.0
    %1637 = vmatpush.msra.mxu0 0.0
    %1638 = vmatpush.msra.mxu0 0.0
    %1639 = vmatpush.msra.mxu0 0.0
    %1640 = vmatpush.msra.mxu0 0.0
    %1641 = vmatpush.msra.mxu0 0.0
    %1642 = vmatpush.msra.mxu0 0.0
    %v1643 = vand.u32 %v120, 4294901760
    %v1644 = vsub.f32 %v120, %v1643
    %v1645 = vand.u32 %v1644, 4294901760
    %v1646 = vsub.f32 %v1644, %v1645
    %v1647 = vand.u32 %v1646, 4294901760
    %1648 = vmatpush.msra.mxu0 %v1647
    %v1649 = vand.u32 %v118, 4294901760
    %v1650 = vsub.f32 %v118, %v1649
    %v1651 = vand.u32 %v1650, 4294901760
    %v1652 = vsub.f32 %v1650, %v1651
    %v1653 = vand.u32 %v1652, 4294901760
    %1654 = vmatpush.msra.mxu0 %v1653
    %v1655 = vand.u32 %v116, 4294901760
    %v1656 = vsub.f32 %v116, %v1655
    %v1657 = vand.u32 %v1656, 4294901760
    %v1658 = vsub.f32 %v1656, %v1657
    %v1659 = vand.u32 %v1658, 4294901760
    %1660 = vmatpush.msra.mxu0 %v1659
    %v1661 = vand.u32 %v114, 4294901760
    %v1662 = vsub.f32 %v114, %v1661
    %v1663 = vand.u32 %v1662, 4294901760
    %v1664 = vsub.f32 %v1662, %v1663
    %v1665 = vand.u32 %v1664, 4294901760
    %1666 = vmatpush.msra.mxu0 %v1665
    %v1667 = vand.u32 %v112, 4294901760
    %v1668 = vsub.f32 %v112, %v1667
    %v1669 = vand.u32 %v1668, 4294901760
    %v1670 = vsub.f32 %v1668, %v1669
    %v1671 = vand.u32 %v1670, 4294901760
    %1672 = vmatpush.msra.mxu0 %v1671
    %v1673 = vand.u32 %v110, 4294901760
    %v1674 = vsub.f32 %v110, %v1673
    %v1675 = vand.u32 %v1674, 4294901760
    %v1676 = vsub.f32 %v1674, %v1675
    %v1677 = vand.u32 %v1676, 4294901760
    %1678 = vmatpush.msra.mxu0 %v1677
    %v1679 = vand.u32 %v108, 4294901760
    %v1680 = vsub.f32 %v108, %v1679
    %v1681 = vand.u32 %v1680, 4294901760
    %v1682 = vsub.f32 %v1680, %v1681
    %v1683 = vand.u32 %v1682, 4294901760
    %1684 = vmatpush.msra.mxu0 %v1683
    %v1685 = vand.u32 %v106, 4294901760
    %v1686 = vsub.f32 %v106, %v1685
    %v1687 = vand.u32 %v1686, 4294901760
    %v1688 = vsub.f32 %v1686, %v1687
    %v1689 = vand.u32 %v1688, 4294901760
    %1690 = vmatpush.msra.mxu0 %v1689
    %v1691 = vand.u32 %v1321, 4294901760
    %1692 = vmatmul.f32.gmra.mxu0 %v1691
    %v1693 = vpop.f32.mrf.mxu0
    %v1694 = vadd.f32 %v1625, %v1693
    %v1695 = vand.u32 %v1324, 4294901760
    %1696 = vmatmul.f32.gmra.mxu0 %v1695
    %v1697 = vpop.f32.mrf.mxu0
    %v1698 = vadd.f32 %v1633, %v1697
    %1699 = vdwg.mxu0
    %1700 = vmatpush.msra.mxu0 0.0
    %1701 = vmatpush.msra.mxu0 0.0
    %1702 = vmatpush.msra.mxu0 0.0
    %1703 = vmatpush.msra.mxu0 0.0
    %1704 = vmatpush.msra.mxu0 0.0
    %1705 = vmatpush.msra.mxu0 0.0
    %1706 = vmatpush.msra.mxu0 0.0
    %1707 = vmatpush.msra.mxu0 0.0
    %v1708 = vand.u32 %v120, 4294901760
    %v1709 = vsub.f32 %v120, %v1708
    %1710 = vmatpush.msra.mxu0 %v1709
    %v1711 = vand.u32 %v118, 4294901760
    %v1712 = vsub.f32 %v118, %v1711
    %1713 = vmatpush.msra.mxu0 %v1712
    %v1714 = vand.u32 %v116, 4294901760
    %v1715 = vsub.f32 %v116, %v1714
    %1716 = vmatpush.msra.mxu0 %v1715
    %v1717 = vand.u32 %v114, 4294901760
    %v1718 = vsub.f32 %v114, %v1717
    %1719 = vmatpush.msra.mxu0 %v1718
    %v1720 = vand.u32 %v112, 4294901760
    %v1721 = vsub.f32 %v112, %v1720
    %1722 = vmatpush.msra.mxu0 %v1721
    %v1723 = vand.u32 %v110, 4294901760
    %v1724 = vsub.f32 %v110, %v1723
    %1725 = vmatpush.msra.mxu0 %v1724
    %v1726 = vand.u32 %v108, 4294901760
    %v1727 = vsub.f32 %v108, %v1726
    %1728 = vmatpush.msra.mxu0 %v1727
    %v1729 = vand.u32 %v106, 4294901760
    %v1730 = vsub.f32 %v106, %v1729
    %1731 = vmatpush.msra.mxu0 %v1730
    %v1732 = vand.u32 %v1321, 4294901760
    %v1733 = vsub.f32 %v1321, %v1732
    %1734 = vmatmul.f32.gmra.mxu0 %v1733
    %v1735 = vpop.f32.mrf.mxu0
    %v1736 = vadd.f32 %v1694, %v1735
    %v1737 = vand.u32 %v1324, 4294901760
    %v1738 = vsub.f32 %v1324, %v1737
    %1739 = vmatmul.f32.gmra.mxu0 %v1738
    %v1740 = vpop.f32.mrf.mxu0
    %v1741 = vadd.f32 %v1698, %v1740
    %1742 = vdwg.mxu0
    %1743 = vmatpush.msra.mxu0 0.0
    %1744 = vmatpush.msra.mxu0 0.0
    %1745 = vmatpush.msra.mxu0 0.0
    %1746 = vmatpush.msra.mxu0 0.0
    %1747 = vmatpush.msra.mxu0 0.0
    %1748 = vmatpush.msra.mxu0 0.0
    %1749 = vmatpush.msra.mxu0 0.0
    %1750 = vmatpush.msra.mxu0 0.0
    %v1751 = vand.u32 %v120, 4294901760
    %1752 = vmatpush.msra.mxu0 %v1751
    %v1753 = vand.u32 %v118, 4294901760
    %1754 = vmatpush.msra.mxu0 %v1753
    %v1755 = vand.u32 %v116, 4294901760
    %1756 = vmatpush.msra.mxu0 %v1755
    %v1757 = vand.u32 %v114, 4294901760
    %1758 = vmatpush.msra.mxu0 %v1757
    %v1759 = vand.u32 %v112, 4294901760
    %1760 = vmatpush.msra.mxu0 %v1759
    %v1761 = vand.u32 %v110, 4294901760
    %1762 = vmatpush.msra.mxu0 %v1761
    %v1763 = vand.u32 %v108, 4294901760
    %1764 = vmatpush.msra.mxu0 %v1763
    %v1765 = vand.u32 %v106, 4294901760
    %1766 = vmatpush.msra.mxu0 %v1765
    %v1767 = vand.u32 %v1321, 4294901760
    %v1768 = vsub.f32 %v1321, %v1767
    %v1769 = vand.u32 %v1768, 4294901760
    %1770 = vmatmul.f32.gmra.mxu0 %v1769
    %v1771 = vpop.f32.mrf.mxu0
    %v1772 = vadd.f32 %v1736, %v1771
    %v1773 = vand.u32 %v1324, 4294901760
    %v1774 = vsub.f32 %v1324, %v1773
    %v1775 = vand.u32 %v1774, 4294901760
    %1776 = vmatmul.f32.gmra.mxu0 %v1775
    %v1777 = vpop.f32.mrf.mxu0
    %v1778 = vadd.f32 %v1741, %v1777
    %1779 = vdwg.mxu0
    %1780 = vmatpush.msra.mxu0 0.0
    %1781 = vmatpush.msra.mxu0 0.0
    %1782 = vmatpush.msra.mxu0 0.0
    %1783 = vmatpush.msra.mxu0 0.0
    %1784 = vmatpush.msra.mxu0 0.0
    %1785 = vmatpush.msra.mxu0 0.0
    %1786 = vmatpush.msra.mxu0 0.0
    %1787 = vmatpush.msra.mxu0 0.0
    %v1788 = vand.u32 %v120, 4294901760
    %v1789 = vsub.f32 %v120, %v1788
    %v1790 = vand.u32 %v1789, 4294901760
    %1791 = vmatpush.msra.mxu0 %v1790
    %v1792 = vand.u32 %v118, 4294901760
    %v1793 = vsub.f32 %v118, %v1792
    %v1794 = vand.u32 %v1793, 4294901760
    %1795 = vmatpush.msra.mxu0 %v1794
    %v1796 = vand.u32 %v116, 4294901760
    %v1797 = vsub.f32 %v116, %v1796
    %v1798 = vand.u32 %v1797, 4294901760
    %1799 = vmatpush.msra.mxu0 %v1798
    %v1800 = vand.u32 %v114, 4294901760
    %v1801 = vsub.f32 %v114, %v1800
    %v1802 = vand.u32 %v1801, 4294901760
    %1803 = vmatpush.msra.mxu0 %v1802
    %v1804 = vand.u32 %v112, 4294901760
    %v1805 = vsub.f32 %v112, %v1804
    %v1806 = vand.u32 %v1805, 4294901760
    %1807 = vmatpush.msra.mxu0 %v1806
    %v1808 = vand.u32 %v110, 4294901760
    %v1809 = vsub.f32 %v110, %v1808
    %v1810 = vand.u32 %v1809, 4294901760
    %1811 = vmatpush.msra.mxu0 %v1810
    %v1812 = vand.u32 %v108, 4294901760
    %v1813 = vsub.f32 %v108, %v1812
    %v1814 = vand.u32 %v1813, 4294901760
    %1815 = vmatpush.msra.mxu0 %v1814
    %v1816 = vand.u32 %v106, 4294901760
    %v1817 = vsub.f32 %v106, %v1816
    %v1818 = vand.u32 %v1817, 4294901760
    %1819 = vmatpush.msra.mxu0 %v1818
    %v1820 = vand.u32 %v1321, 4294901760
    %1821 = vmatmul.f32.gmra.mxu0 %v1820
    %v1822 = vpop.f32.mrf.mxu0
    %v1823 = vadd.f32 %v1772, %v1822
    %v1824 = vand.u32 %v1324, 4294901760
    %1825 = vmatmul.f32.gmra.mxu0 %v1824
    %v1826 = vpop.f32.mrf.mxu0
    %v1827 = vadd.f32 %v1778, %v1826
    %1828 = vdwg.mxu0
    %1829 = vmatpush.msra.mxu0 0.0
    %1830 = vmatpush.msra.mxu0 0.0
    %1831 = vmatpush.msra.mxu0 0.0
    %1832 = vmatpush.msra.mxu0 0.0
    %1833 = vmatpush.msra.mxu0 0.0
    %1834 = vmatpush.msra.mxu0 0.0
    %1835 = vmatpush.msra.mxu0 0.0
    %1836 = vmatpush.msra.mxu0 0.0
    %v1837 = vand.u32 %v120, 4294901760
    %1838 = vmatpush.msra.mxu0 %v1837
    %v1839 = vand.u32 %v118, 4294901760
    %1840 = vmatpush.msra.mxu0 %v1839
    %v1841 = vand.u32 %v116, 4294901760
    %1842 = vmatpush.msra.mxu0 %v1841
    %v1843 = vand.u32 %v114, 4294901760
    %1844 = vmatpush.msra.mxu0 %v1843
    %v1845 = vand.u32 %v112, 4294901760
    %1846 = vmatpush.msra.mxu0 %v1845
    %v1847 = vand.u32 %v110, 4294901760
    %1848 = vmatpush.msra.mxu0 %v1847
    %v1849 = vand.u32 %v108, 4294901760
    %1850 = vmatpush.msra.mxu0 %v1849
    %v1851 = vand.u32 %v106, 4294901760
    %1852 = vmatpush.msra.mxu0 %v1851
    %v1853 = vand.u32 %v1321, 4294901760
    %1854 = vmatmul.f32.gmra.mxu0 %v1853
    %v1855 = vpop.f32.mrf.mxu0
    %v1856 = vadd.f32 %v1823, %v1855
    %v1857 = vand.u32 %v1324, 4294901760
    %1858 = vmatmul.f32.gmra.mxu0 %v1857
    %v1859 = vpop.f32.mrf.mxu0
    %v1860 = vadd.f32 %v1827, %v1859
    %1861 = vdwg.mxu0
    %1862 = vmatpush.msra.mxu0 0.0
    %1863 = vmatpush.msra.mxu0 0.0
    %1864 = vmatpush.msra.mxu0 0.0
    %1865 = vmatpush.msra.mxu0 0.0
    %1866 = vmatpush.msra.mxu0 0.0
    %1867 = vmatpush.msra.mxu0 0.0
    %1868 = vmatpush.msra.mxu0 0.0
    %1869 = vmatpush.msra.mxu0 0.0
    %1870 = vmatpush.msra.mxu0 0.0
    %1871 = vmatpush.msra.mxu0 0.0
    %1872 = vmatpush.msra.mxu0 0.0
    %1873 = vmatpush.msra.mxu0 0.0
    %1874 = vmatpush.msra.mxu0 0.0
    %1875 = vmatpush.msra.mxu0 0.0
    %1876 = vmatpush.msra.mxu0 %v1592
    %1877 = vmatpush.msra.mxu0 %v1588
    %1878 = vmatmul.f32.gmra.mxu0 %v814
    %v1879 = vpop.f32.mrf.mxu0
    %v1880 = vadd.f32 %v735, %v1879
    %1881 = vmatmul.f32.gmra.mxu0 %v817
    %v1882 = vpop.f32.mrf.mxu0
    %v1883 = vadd.f32 %v740, %v1882
    %1884 = vmatmul.f32.gmra.mxu0 %v820
    %v1885 = vpop.f32.mrf.mxu0
    %v1886 = vadd.f32 %v745, %v1885
    %1887 = vmatmul.f32.gmra.mxu0 %v823
    %v1888 = vpop.f32.mrf.mxu0
    %v1889 = vadd.f32 %v750, %v1888
    %1890 = vmatmul.f32.gmra.mxu0 %v826
    %v1891 = vpop.f32.mrf.mxu0
    %v1892 = vadd.f32 %v755, %v1891
    %1893 = vmatmul.f32.gmra.mxu0 %v829
    %v1894 = vpop.f32.mrf.mxu0
    %v1895 = vadd.f32 %v760, %v1894
    %1896 = vmatmul.f32.gmra.mxu0 %v832
    %v1897 = vpop.f32.mrf.mxu0
    %v1898 = vadd.f32 %v765, %v1897
    %1899 = vmatmul.f32.gmra.mxu0 %v835
    %v1900 = vpop.f32.mrf.mxu0
    %v1901 = vadd.f32 %v770, %v1900
    %1902 = vmatmul.f32.gmra.mxu0 %v838
    %v1903 = vpop.f32.mrf.mxu0
    %v1904 = vadd.f32 %v775, %v1903
    %1905 = vmatmul.f32.gmra.mxu0 %v841
    %v1906 = vpop.f32.mrf.mxu0
    %v1907 = vadd.f32 %v780, %v1906
    %1908 = vmatmul.f32.gmra.mxu0 %v844
    %v1909 = vpop.f32.mrf.mxu0
    %v1910 = vadd.f32 %v785, %v1909
    %1911 = vmatmul.f32.gmra.mxu0 %v847
    %v1912 = vpop.f32.mrf.mxu0
    %v1913 = vadd.f32 %v790, %v1912
    %1914 = vmatmul.f32.gmra.mxu0 %v850
    %v1915 = vpop.f32.mrf.mxu0
    %v1916 = vadd.f32 %v795, %v1915
    %1917 = vmatmul.f32.gmra.mxu0 %v853
    %v1918 = vpop.f32.mrf.mxu0
    %v1919 = vadd.f32 %v800, %v1918
    %1920 = vmatmul.f32.gmra.mxu0 %v856
    %v1921 = vpop.f32.mrf.mxu0
    %v1922 = vadd.f32 %v805, %v1921
    %1923 = vmatmul.f32.gmra.mxu0 %v859
    %v1924 = vpop.f32.mrf.mxu0
    %v1925 = vadd.f32 %v810, %v1924
    %1926 = vdwg.mxu0
    %1927 = vmatpush.msra.mxu0 0.0
    %1928 = vmatpush.msra.mxu0 0.0
    %1929 = vmatpush.msra.mxu0 0.0
    %1930 = vmatpush.msra.mxu0 0.0
    %1931 = vmatpush.msra.mxu0 0.0
    %1932 = vmatpush.msra.mxu0 0.0
    %1933 = vmatpush.msra.mxu0 0.0
    %1934 = vmatpush.msra.mxu0 0.0
    %1935 = vmatpush.msra.mxu0 0.0
    %1936 = vmatpush.msra.mxu0 0.0
    %1937 = vmatpush.msra.mxu0 0.0
    %1938 = vmatpush.msra.mxu0 0.0
    %1939 = vmatpush.msra.mxu0 0.0
    %1940 = vmatpush.msra.mxu0 0.0
    %1941 = vmatpush.msra.mxu0 %v1860
    %1942 = vmatpush.msra.mxu0 %v1856
    %1943 = vmatmul.f32.gmra.mxu0 %v814
    %v1944 = vpop.f32.mrf.mxu0
    %v1945 = vadd.f32 %v735, %v1944
    %1946 = vmatmul.f32.gmra.mxu0 %v817
    %v1947 = vpop.f32.mrf.mxu0
    %v1948 = vadd.f32 %v740, %v1947
    %1949 = vmatmul.f32.gmra.mxu0 %v820
    %v1950 = vpop.f32.mrf.mxu0
    %v1951 = vadd.f32 %v745, %v1950
    %1952 = vmatmul.f32.gmra.mxu0 %v823
    %v1953 = vpop.f32.mrf.mxu0
    %v1954 = vadd.f32 %v750, %v1953
    %1955 = vmatmul.f32.gmra.mxu0 %v826
    %v1956 = vpop.f32.mrf.mxu0
    %v1957 = vadd.f32 %v755, %v1956
    %1958 = vmatmul.f32.gmra.mxu0 %v829
    %v1959 = vpop.f32.mrf.mxu0
    %v1960 = vadd.f32 %v760, %v1959
    %1961 = vmatmul.f32.gmra.mxu0 %v832
    %v1962 = vpop.f32.mrf.mxu0
    %v1963 = vadd.f32 %v765, %v1962
    %1964 = vmatmul.f32.gmra.mxu0 %v835
    %v1965 = vpop.f32.mrf.mxu0
    %v1966 = vadd.f32 %v770, %v1965
    %1967 = vmatmul.f32.gmra.mxu0 %v838
    %v1968 = vpop.f32.mrf.mxu0
    %v1969 = vadd.f32 %v775, %v1968
    %1970 = vmatmul.f32.gmra.mxu0 %v841
    %v1971 = vpop.f32.mrf.mxu0
    %v1972 = vadd.f32 %v780, %v1971
    %1973 = vmatmul.f32.gmra.mxu0 %v844
    %v1974 = vpop.f32.mrf.mxu0
    %v1975 = vadd.f32 %v785, %v1974
    %1976 = vmatmul.f32.gmra.mxu0 %v847
    %v1977 = vpop.f32.mrf.mxu0
    %v1978 = vadd.f32 %v790, %v1977
    %1979 = vmatmul.f32.gmra.mxu0 %v850
    %v1980 = vpop.f32.mrf.mxu0
    %v1981 = vadd.f32 %v795, %v1980
    %1982 = vmatmul.f32.gmra.mxu0 %v853
    %v1983 = vpop.f32.mrf.mxu0
    %v1984 = vadd.f32 %v800, %v1983
    %1985 = vmatmul.f32.gmra.mxu0 %v856
    %v1986 = vpop.f32.mrf.mxu0
    %v1987 = vadd.f32 %v805, %v1986
    %1988 = vmatmul.f32.gmra.mxu0 %v859
    %v1989 = vpop.f32.mrf.mxu0
    %v1990 = vadd.f32 %v810, %v1989
    %1991 = vdwg.mxu0
    %v1992 = vmax.f32 %v1880, 0.0
    %v1993 = vmax.f32 %v1945, 0.0
    %v1994 = vmax.f32 %v1883, 0.0
    %v1995 = vmax.f32 %v1948, 0.0
    %v1996 = vmax.f32 %v1886, 0.0
    %v1997 = vmax.f32 %v1951, 0.0
    %v1998 = vmax.f32 %v1889, 0.0
    %v1999 = vmax.f32 %v1954, 0.0
    %v2000 = vmax.f32 %v1892, 0.0
    %v2001 = vmax.f32 %v1957, 0.0
    %v2002 = vmax.f32 %v1895, 0.0
    %v2003 = vmax.f32 %v1960, 0.0
    %v2004 = vmax.f32 %v1898, 0.0
    %v2005 = vmax.f32 %v1963, 0.0
    %v2006 = vmax.f32 %v1901, 0.0
    %v2007 = vmax.f32 %v1966, 0.0
    %v2008 = vmax.f32 %v1904, 0.0
    %v2009 = vmax.f32 %v1969, 0.0
    %v2010 = vmax.f32 %v1907, 0.0
    %v2011 = vmax.f32 %v1972, 0.0
    %v2012 = vmax.f32 %v1910, 0.0
    %v2013 = vmax.f32 %v1975, 0.0
    %v2014 = vmax.f32 %v1913, 0.0
    %v2015 = vmax.f32 %v1978, 0.0
    %v2016 = vmax.f32 %v1916, 0.0
    %v2017 = vmax.f32 %v1981, 0.0
    %v2018 = vmax.f32 %v1919, 0.0
    %v2019 = vmax.f32 %v1984, 0.0
    %v2020 = vmax.f32 %v1922, 0.0
    %v2021 = vmax.f32 %v1987, 0.0
    %v2022 = vmax.f32 %v1925, 0.0
    %v2023 = vmax.f32 %v1990, 0.0
    %2024 = vmatpush.msra.mxu0 %v2022
    %2025 = vmatpush.msra.mxu0 %v2020
    %2026 = vmatpush.msra.mxu0 %v2018
    %2027 = vmatpush.msra.mxu0 %v2016
    %2028 = vmatpush.msra.mxu0 %v2014
    %2029 = vmatpush.msra.mxu0 %v2012
    %2030 = vmatpush.msra.mxu0 %v2010
    %2031 = vmatpush.msra.mxu0 %v2008
    %2032 = vmatpush.msra.mxu0 %v2006
    %2033 = vmatpush.msra.mxu0 %v2004
    %2034 = vmatpush.msra.mxu0 %v2002
    %2035 = vmatpush.msra.mxu0 %v2000
    %2036 = vmatpush.msra.mxu0 %v1998
    %2037 = vmatpush.msra.mxu0 %v1996
    %2038 = vmatpush.msra.mxu0 %v1994
    %2039 = vmatpush.msra.mxu0 %v1992
    %2040 = vmatmul.f32.gmra.mxu0 %v153
    %v2041 = vpop.f32.mrf.mxu0
    %v2042 = vadd.f32 %v1026, %v2041
    %2043 = vmatmul.f32.gmra.mxu0 %v154
    %v2044 = vpop.f32.mrf.mxu0
    %v2045 = vadd.f32 %v1031, %v2044
    %2046 = vmatmul.f32.gmra.mxu0 %v155
    %v2047 = vpop.f32.mrf.mxu0
    %v2048 = vadd.f32 %v1036, %v2047
    %2049 = vmatmul.f32.gmra.mxu0 %v156
    %v2050 = vpop.f32.mrf.mxu0
    %v2051 = vadd.f32 %v1041, %v2050
    %2052 = vmatmul.f32.gmra.mxu0 %v157
    %v2053 = vpop.f32.mrf.mxu0
    %v2054 = vadd.f32 %v1046, %v2053
    %2055 = vmatmul.f32.gmra.mxu0 %v158
    %v2056 = vpop.f32.mrf.mxu0
    %v2057 = vadd.f32 %v1051, %v2056
    %2058 = vmatmul.f32.gmra.mxu0 %v159
    %v2059 = vpop.f32.mrf.mxu0
    %v2060 = vadd.f32 %v1056, %v2059
    %2061 = vmatmul.f32.gmra.mxu0 %v160
    %v2062 = vpop.f32.mrf.mxu0
    %v2063 = vadd.f32 %v1061, %v2062
    %2064 = vmatmul.f32.gmra.mxu0 %v161
    %v2065 = vpop.f32.mrf.mxu0
    %v2066 = vadd.f32 %v1066, %v2065
    %2067 = vmatmul.f32.gmra.mxu0 %v162
    %v2068 = vpop.f32.mrf.mxu0
    %v2069 = vadd.f32 %v1071, %v2068
    %2070 = vmatmul.f32.gmra.mxu0 %v163
    %v2071 = vpop.f32.mrf.mxu0
    %v2072 = vadd.f32 %v1076, %v2071
    %2073 = vmatmul.f32.gmra.mxu0 %v164
    %v2074 = vpop.f32.mrf.mxu0
    %v2075 = vadd.f32 %v1081, %v2074
    %2076 = vmatmul.f32.gmra.mxu0 %v165
    %v2077 = vpop.f32.mrf.mxu0
    %v2078 = vadd.f32 %v1086, %v2077
    %2079 = vmatmul.f32.gmra.mxu0 %v166
    %v2080 = vpop.f32.mrf.mxu0
    %v2081 = vadd.f32 %v1091, %v2080
    %2082 = vmatmul.f32.gmra.mxu0 %v167
    %v2083 = vpop.f32.mrf.mxu0
    %v2084 = vadd.f32 %v1096, %v2083
    %2085 = vmatmul.f32.gmra.mxu0 %v168
    %v2086 = vpop.f32.mrf.mxu0
    %v2087 = vadd.f32 %v1101, %v2086
    %2088 = vdwg.mxu0
    %2089 = vmatpush.msra.mxu0 %v2023
    %2090 = vmatpush.msra.mxu0 %v2021
    %2091 = vmatpush.msra.mxu0 %v2019
    %2092 = vmatpush.msra.mxu0 %v2017
    %2093 = vmatpush.msra.mxu0 %v2015
    %2094 = vmatpush.msra.mxu0 %v2013
    %2095 = vmatpush.msra.mxu0 %v2011
    %2096 = vmatpush.msra.mxu0 %v2009
    %2097 = vmatpush.msra.mxu0 %v2007
    %2098 = vmatpush.msra.mxu0 %v2005
    %2099 = vmatpush.msra.mxu0 %v2003
    %2100 = vmatpush.msra.mxu0 %v2001
    %2101 = vmatpush.msra.mxu0 %v1999
    %2102 = vmatpush.msra.mxu0 %v1997
    %2103 = vmatpush.msra.mxu0 %v1995
    %2104 = vmatpush.msra.mxu0 %v1993
    %2105 = vmatmul.f32.gmra.mxu0 %v153
    %v2106 = vpop.f32.mrf.mxu0
    %v2107 = vadd.f32 %v1026, %v2106
    %2108 = vmatmul.f32.gmra.mxu0 %v154
    %v2109 = vpop.f32.mrf.mxu0
    %v2110 = vadd.f32 %v1031, %v2109
    %2111 = vmatmul.f32.gmra.mxu0 %v155
    %v2112 = vpop.f32.mrf.mxu0
    %v2113 = vadd.f32 %v1036, %v2112
    %2114 = vmatmul.f32.gmra.mxu0 %v156
    %v2115 = vpop.f32.mrf.mxu0
    %v2116 = vadd.f32 %v1041, %v2115
    %2117 = vmatmul.f32.gmra.mxu0 %v157
    %v2118 = vpop.f32.mrf.mxu0
    %v2119 = vadd.f32 %v1046, %v2118
    %2120 = vmatmul.f32.gmra.mxu0 %v158
    %v2121 = vpop.f32.mrf.mxu0
    %v2122 = vadd.f32 %v1051, %v2121
    %2123 = vmatmul.f32.gmra.mxu0 %v159
    %v2124 = vpop.f32.mrf.mxu0
    %v2125 = vadd.f32 %v1056, %v2124
    %2126 = vmatmul.f32.gmra.mxu0 %v160
    %v2127 = vpop.f32.mrf.mxu0
    %v2128 = vadd.f32 %v1061, %v2127
    %2129 = vmatmul.f32.gmra.mxu0 %v161
    %v2130 = vpop.f32.mrf.mxu0
    %v2131 = vadd.f32 %v1066, %v2130
    %2132 = vmatmul.f32.gmra.mxu0 %v162
    %v2133 = vpop.f32.mrf.mxu0
    %v2134 = vadd.f32 %v1071, %v2133
    %2135 = vmatmul.f32.gmra.mxu0 %v163
    %v2136 = vpop.f32.mrf.mxu0
    %v2137 = vadd.f32 %v1076, %v2136
    %2138 = vmatmul.f32.gmra.mxu0 %v164
    %v2139 = vpop.f32.mrf.mxu0
    %v2140 = vadd.f32 %v1081, %v2139
    %2141 = vmatmul.f32.gmra.mxu0 %v165
    %v2142 = vpop.f32.mrf.mxu0
    %v2143 = vadd.f32 %v1086, %v2142
    %2144 = vmatmul.f32.gmra.mxu0 %v166
    %v2145 = vpop.f32.mrf.mxu0
    %v2146 = vadd.f32 %v1091, %v2145
    %2147 = vmatmul.f32.gmra.mxu0 %v167
    %v2148 = vpop.f32.mrf.mxu0
    %v2149 = vadd.f32 %v1096, %v2148
    %2150 = vmatmul.f32.gmra.mxu0 %v168
    %v2151 = vpop.f32.mrf.mxu0
    %v2152 = vadd.f32 %v1101, %v2151
    %2153 = vdwg.mxu0
    %v2154 = vmax.f32 %v2042, 0.0
    %v2155 = vmax.f32 %v2107, 0.0
    %v2156 = vmax.f32 %v2045, 0.0
    %v2157 = vmax.f32 %v2110, 0.0
    %v2158 = vmax.f32 %v2048, 0.0
    %v2159 = vmax.f32 %v2113, 0.0
    %v2160 = vmax.f32 %v2051, 0.0
    %v2161 = vmax.f32 %v2116, 0.0
    %v2162 = vmax.f32 %v2054, 0.0
    %v2163 = vmax.f32 %v2119, 0.0
    %v2164 = vmax.f32 %v2057, 0.0
    %v2165 = vmax.f32 %v2122, 0.0
    %v2166 = vmax.f32 %v2060, 0.0
    %v2167 = vmax.f32 %v2125, 0.0
    %v2168 = vmax.f32 %v2063, 0.0
    %v2169 = vmax.f32 %v2128, 0.0
    %v2170 = vmax.f32 %v2066, 0.0
    %v2171 = vmax.f32 %v2131, 0.0
    %v2172 = vmax.f32 %v2069, 0.0
    %v2173 = vmax.f32 %v2134, 0.0
    %v2174 = vmax.f32 %v2072, 0.0
    %v2175 = vmax.f32 %v2137, 0.0
    %v2176 = vmax.f32 %v2075, 0.0
    %v2177 = vmax.f32 %v2140, 0.0
    %v2178 = vmax.f32 %v2078, 0.0
    %v2179 = vmax.f32 %v2143, 0.0
    %v2180 = vmax.f32 %v2081, 0.0
    %v2181 = vmax.f32 %v2146, 0.0
    %v2182 = vmax.f32 %v2084, 0.0
    %v2183 = vmax.f32 %v2149, 0.0
    %v2184 = vmax.f32 %v2087, 0.0
    %v2185 = vmax.f32 %v2152, 0.0
    %2186 = vmatpush.msra.mxu0 %v2184
    %2187 = vmatpush.msra.mxu0 %v2182
    %2188 = vmatpush.msra.mxu0 %v2180
    %2189 = vmatpush.msra.mxu0 %v2178
    %2190 = vmatpush.msra.mxu0 %v2176
    %2191 = vmatpush.msra.mxu0 %v2174
    %2192 = vmatpush.msra.mxu0 %v2172
    %2193 = vmatpush.msra.mxu0 %v2170
    %2194 = vmatpush.msra.mxu0 %v2168
    %2195 = vmatpush.msra.mxu0 %v2166
    %2196 = vmatpush.msra.mxu0 %v2164
    %2197 = vmatpush.msra.mxu0 %v2162
    %2198 = vmatpush.msra.mxu0 %v2160
    %2199 = vmatpush.msra.mxu0 %v2158
    %2200 = vmatpush.msra.mxu0 %v2156
    %2201 = vmatpush.msra.mxu0 %v2154
    %2202 = vmatmul.f32.gmra.mxu0 %v185
    %v2203 = vpop.f32.mrf.mxu0
    %v2204 = vadd.f32 %v1265, %v2203
    %2205 = vdwg.mxu0
    %2206 = vmatpush.msra.mxu0 %v2185
    %2207 = vmatpush.msra.mxu0 %v2183
    %2208 = vmatpush.msra.mxu0 %v2181
    %2209 = vmatpush.msra.mxu0 %v2179
    %2210 = vmatpush.msra.mxu0 %v2177
    %2211 = vmatpush.msra.mxu0 %v2175
    %2212 = vmatpush.msra.mxu0 %v2173
    %2213 = vmatpush.msra.mxu0 %v2171
    %2214 = vmatpush.msra.mxu0 %v2169
    %2215 = vmatpush.msra.mxu0 %v2167
    %2216 = vmatpush.msra.mxu0 %v2165
    %2217 = vmatpush.msra.mxu0 %v2163
    %2218 = vmatpush.msra.mxu0 %v2161
    %2219 = vmatpush.msra.mxu0 %v2159
    %2220 = vmatpush.msra.mxu0 %v2157
    %2221 = vmatpush.msra.mxu0 %v2155
    %2222 = vmatmul.f32.gmra.mxu0 %v185
    %v2223 = vpop.f32.mrf.mxu0
    %v2224 = vadd.f32 %v1265, %v2223
    %2225 = vdwg.mxu0
    %v2228 = vrot.slane %v2224, 7
    %v2229 = vsel %vm1309, %v2204, %v2228
    %s2231 = scalar_lea.vmem [#allocation3], 1
    %2232 = vst.msk [vmem:[%s2231] ss:$4 sm:$0x3] %vm1315, %v2229
    %s2233 = scalar_lea.vmem %s1, 32
    %v2234 = vld [vmem:[%s2233] sm:$0xff]
    %v2235 = vld [vmem:[%s2233 + $0x8] sm:$0xff]
    %v2237 = vsel %vm189, %v2234, 0
    %v2240 = vsel %vm189, %v2235, 0
    %2242 = vmatpush.msra.mxu0 0.0
    %2243 = vmatpush.msra.mxu0 0.0
    %2244 = vmatpush.msra.mxu0 0.0
    %2245 = vmatpush.msra.mxu0 0.0
    %2246 = vmatpush.msra.mxu0 0.0
    %2247 = vmatpush.msra.mxu0 0.0
    %2248 = vmatpush.msra.mxu0 0.0
    %2249 = vmatpush.msra.mxu0 0.0
    %v2250 = vand.u32 %v119, 4294901760
    %2251 = vmatpush.msra.mxu0 %v2250
    %v2252 = vand.u32 %v117, 4294901760
    %2253 = vmatpush.msra.mxu0 %v2252
    %v2254 = vand.u32 %v115, 4294901760
    %2255 = vmatpush.msra.mxu0 %v2254
    %v2256 = vand.u32 %v113, 4294901760
    %2257 = vmatpush.msra.mxu0 %v2256
    %v2258 = vand.u32 %v111, 4294901760
    %2259 = vmatpush.msra.mxu0 %v2258
    %v2260 = vand.u32 %v109, 4294901760
    %2261 = vmatpush.msra.mxu0 %v2260
    %v2262 = vand.u32 %v107, 4294901760
    %2263 = vmatpush.msra.mxu0 %v2262
    %v2264 = vand.u32 %v105, 4294901760
    %2265 = vmatpush.msra.mxu0 %v2264
    %v2266 = vand.u32 %v2237, 4294901760
    %v2267 = vsub.f32 %v2237, %v2266
    %v2268 = vand.u32 %v2267, 4294901760
    %v2269 = vsub.f32 %v2267, %v2268
    %v2270 = vand.u32 %v2269, 4294901760
    %2271 = vmatmul.f32.gmra.mxu0 %v2270
    %v2272 = vpop.f32.mrf.mxu0
    %v2273 = vadd.f32 0.0, %v2272
    %v2274 = vand.u32 %v2240, 4294901760
    %v2275 = vsub.f32 %v2240, %v2274
    %v2276 = vand.u32 %v2275, 4294901760
    %v2277 = vsub.f32 %v2275, %v2276
    %v2278 = vand.u32 %v2277, 4294901760
    %2279 = vmatmul.f32.gmra.mxu0 %v2278
    %v2280 = vpop.f32.mrf.mxu0
    %v2281 = vadd.f32 0.0, %v2280
    %2282 = vdwg.mxu0
    %2283 = vmatpush.msra.mxu0 0.0
    %2284 = vmatpush.msra.mxu0 0.0
    %2285 = vmatpush.msra.mxu0 0.0
    %2286 = vmatpush.msra.mxu0 0.0
    %2287 = vmatpush.msra.mxu0 0.0
    %2288 = vmatpush.msra.mxu0 0.0
    %2289 = vmatpush.msra.mxu0 0.0
    %2290 = vmatpush.msra.mxu0 0.0
    %v2291 = vand.u32 %v119, 4294901760
    %v2292 = vsub.f32 %v119, %v2291
    %v2293 = vand.u32 %v2292, 4294901760
    %v2294 = vsub.f32 %v2292, %v2293
    %v2295 = vand.u32 %v2294, 4294901760
    %2296 = vmatpush.msra.mxu0 %v2295
    %v2297 = vand.u32 %v117, 4294901760
    %v2298 = vsub.f32 %v117, %v2297
    %v2299 = vand.u32 %v2298, 4294901760
    %v2300 = vsub.f32 %v2298, %v2299
    %v2301 = vand.u32 %v2300, 4294901760
    %2302 = vmatpush.msra.mxu0 %v2301
    %v2303 = vand.u32 %v115, 4294901760
    %v2304 = vsub.f32 %v115, %v2303
    %v2305 = vand.u32 %v2304, 4294901760
    %v2306 = vsub.f32 %v2304, %v2305
    %v2307 = vand.u32 %v2306, 4294901760
    %2308 = vmatpush.msra.mxu0 %v2307
    %v2309 = vand.u32 %v113, 4294901760
    %v2310 = vsub.f32 %v113, %v2309
    %v2311 = vand.u32 %v2310, 4294901760
    %v2312 = vsub.f32 %v2310, %v2311
    %v2313 = vand.u32 %v2312, 4294901760
    %2314 = vmatpush.msra.mxu0 %v2313
    %v2315 = vand.u32 %v111, 4294901760
    %v2316 = vsub.f32 %v111, %v2315
    %v2317 = vand.u32 %v2316, 4294901760
    %v2318 = vsub.f32 %v2316, %v2317
    %v2319 = vand.u32 %v2318, 4294901760
    %2320 = vmatpush.msra.mxu0 %v2319
    %v2321 = vand.u32 %v109, 4294901760
    %v2322 = vsub.f32 %v109, %v2321
    %v2323 = vand.u32 %v2322, 4294901760
    %v2324 = vsub.f32 %v2322, %v2323
    %v2325 = vand.u32 %v2324, 4294901760
    %2326 = vmatpush.msra.mxu0 %v2325
    %v2327 = vand.u32 %v107, 4294901760
    %v2328 = vsub.f32 %v107, %v2327
    %v2329 = vand.u32 %v2328, 4294901760
    %v2330 = vsub.f32 %v2328, %v2329
    %v2331 = vand.u32 %v2330, 4294901760
    %2332 = vmatpush.msra.mxu0 %v2331
    %v2333 = vand.u32 %v105, 4294901760
    %v2334 = vsub.f32 %v105, %v2333
    %v2335 = vand.u32 %v2334, 4294901760
    %v2336 = vsub.f32 %v2334, %v2335
    %v2337 = vand.u32 %v2336, 4294901760
    %2338 = vmatpush.msra.mxu0 %v2337
    %v2339 = vand.u32 %v2237, 4294901760
    %2340 = vmatmul.f32.gmra.mxu0 %v2339
    %v2341 = vpop.f32.mrf.mxu0
    %v2342 = vadd.f32 %v2273, %v2341
    %v2343 = vand.u32 %v2240, 4294901760
    %2344 = vmatmul.f32.gmra.mxu0 %v2343
    %v2345 = vpop.f32.mrf.mxu0
    %v2346 = vadd.f32 %v2281, %v2345
    %2347 = vdwg.mxu0
    %2348 = vmatpush.msra.mxu0 0.0
    %2349 = vmatpush.msra.mxu0 0.0
    %2350 = vmatpush.msra.mxu0 0.0
    %2351 = vmatpush.msra.mxu0 0.0
    %2352 = vmatpush.msra.mxu0 0.0
    %2353 = vmatpush.msra.mxu0 0.0
    %2354 = vmatpush.msra.mxu0 0.0
    %2355 = vmatpush.msra.mxu0 0.0
    %v2356 = vand.u32 %v119, 4294901760
    %v2357 = vsub.f32 %v119, %v2356
    %2358 = vmatpush.msra.mxu0 %v2357
    %v2359 = vand.u32 %v117, 4294901760
    %v2360 = vsub.f32 %v117, %v2359
    %2361 = vmatpush.msra.mxu0 %v2360
    %v2362 = vand.u32 %v115, 4294901760
    %v2363 = vsub.f32 %v115, %v2362
    %2364 = vmatpush.msra.mxu0 %v2363
    %v2365 = vand.u32 %v113, 4294901760
    %v2366 = vsub.f32 %v113, %v2365
    %2367 = vmatpush.msra.mxu0 %v2366
    %v2368 = vand.u32 %v111, 4294901760
    %v2369 = vsub.f32 %v111, %v2368
    %2370 = vmatpush.msra.mxu0 %v2369
    %v2371 = vand.u32 %v109, 4294901760
    %v2372 = vsub.f32 %v109, %v2371
    %2373 = vmatpush.msra.mxu0 %v2372
    %v2374 = vand.u32 %v107, 4294901760
    %v2375 = vsub.f32 %v107, %v2374
    %2376 = vmatpush.msra.mxu0 %v2375
    %v2377 = vand.u32 %v105, 4294901760
    %v2378 = vsub.f32 %v105, %v2377
    %2379 = vmatpush.msra.mxu0 %v2378
    %v2380 = vand.u32 %v2237, 4294901760
    %v2381 = vsub.f32 %v2237, %v2380
    %2382 = vmatmul.f32.gmra.mxu0 %v2381
    %v2383 = vpop.f32.mrf.mxu0
    %v2384 = vadd.f32 %v2342, %v2383
    %v2385 = vand.u32 %v2240, 4294901760
    %v2386 = vsub.f32 %v2240, %v2385
    %2387 = vmatmul.f32.gmra.mxu0 %v2386
    %v2388 = vpop.f32.mrf.mxu0
    %v2389 = vadd.f32 %v2346, %v2388
    %2390 = vdwg.mxu0
    %2391 = vmatpush.msra.mxu0 0.0
    %2392 = vmatpush.msra.mxu0 0.0
    %2393 = vmatpush.msra.mxu0 0.0
    %2394 = vmatpush.msra.mxu0 0.0
    %2395 = vmatpush.msra.mxu0 0.0
    %2396 = vmatpush.msra.mxu0 0.0
    %2397 = vmatpush.msra.mxu0 0.0
    %2398 = vmatpush.msra.mxu0 0.0
    %v2399 = vand.u32 %v119, 4294901760
    %2400 = vmatpush.msra.mxu0 %v2399
    %v2401 = vand.u32 %v117, 4294901760
    %2402 = vmatpush.msra.mxu0 %v2401
    %v2403 = vand.u32 %v115, 4294901760
    %2404 = vmatpush.msra.mxu0 %v2403
    %v2405 = vand.u32 %v113, 4294901760
    %2406 = vmatpush.msra.mxu0 %v2405
    %v2407 = vand.u32 %v111, 4294901760
    %2408 = vmatpush.msra.mxu0 %v2407
    %v2409 = vand.u32 %v109, 4294901760
    %2410 = vmatpush.msra.mxu0 %v2409
    %v2411 = vand.u32 %v107, 4294901760
    %2412 = vmatpush.msra.mxu0 %v2411
    %v2413 = vand.u32 %v105, 4294901760
    %2414 = vmatpush.msra.mxu0 %v2413
    %v2415 = vand.u32 %v2237, 4294901760
    %v2416 = vsub.f32 %v2237, %v2415
    %v2417 = vand.u32 %v2416, 4294901760
    %2418 = vmatmul.f32.gmra.mxu0 %v2417
    %v2419 = vpop.f32.mrf.mxu0
    %v2420 = vadd.f32 %v2384, %v2419
    %v2421 = vand.u32 %v2240, 4294901760
    %v2422 = vsub.f32 %v2240, %v2421
    %v2423 = vand.u32 %v2422, 4294901760
    %2424 = vmatmul.f32.gmra.mxu0 %v2423
    %v2425 = vpop.f32.mrf.mxu0
    %v2426 = vadd.f32 %v2389, %v2425
    %2427 = vdwg.mxu0
    %2428 = vmatpush.msra.mxu0 0.0
    %2429 = vmatpush.msra.mxu0 0.0
    %2430 = vmatpush.msra.mxu0 0.0
    %2431 = vmatpush.msra.mxu0 0.0
    %2432 = vmatpush.msra.mxu0 0.0
    %2433 = vmatpush.msra.mxu0 0.0
    %2434 = vmatpush.msra.mxu0 0.0
    %2435 = vmatpush.msra.mxu0 0.0
    %v2436 = vand.u32 %v119, 4294901760
    %v2437 = vsub.f32 %v119, %v2436
    %v2438 = vand.u32 %v2437, 4294901760
    %2439 = vmatpush.msra.mxu0 %v2438
    %v2440 = vand.u32 %v117, 4294901760
    %v2441 = vsub.f32 %v117, %v2440
    %v2442 = vand.u32 %v2441, 4294901760
    %2443 = vmatpush.msra.mxu0 %v2442
    %v2444 = vand.u32 %v115, 4294901760
    %v2445 = vsub.f32 %v115, %v2444
    %v2446 = vand.u32 %v2445, 4294901760
    %2447 = vmatpush.msra.mxu0 %v2446
    %v2448 = vand.u32 %v113, 4294901760
    %v2449 = vsub.f32 %v113, %v2448
    %v2450 = vand.u32 %v2449, 4294901760
    %2451 = vmatpush.msra.mxu0 %v2450
    %v2452 = vand.u32 %v111, 4294901760
    %v2453 = vsub.f32 %v111, %v2452
    %v2454 = vand.u32 %v2453, 4294901760
    %2455 = vmatpush.msra.mxu0 %v2454
    %v2456 = vand.u32 %v109, 4294901760
    %v2457 = vsub.f32 %v109, %v2456
    %v2458 = vand.u32 %v2457, 4294901760
    %2459 = vmatpush.msra.mxu0 %v2458
    %v2460 = vand.u32 %v107, 4294901760
    %v2461 = vsub.f32 %v107, %v2460
    %v2462 = vand.u32 %v2461, 4294901760
    %2463 = vmatpush.msra.mxu0 %v2462
    %v2464 = vand.u32 %v105, 4294901760
    %v2465 = vsub.f32 %v105, %v2464
    %v2466 = vand.u32 %v2465, 4294901760
    %2467 = vmatpush.msra.mxu0 %v2466
    %v2468 = vand.u32 %v2237, 4294901760
    %2469 = vmatmul.f32.gmra.mxu0 %v2468
    %v2470 = vpop.f32.mrf.mxu0
    %v2471 = vadd.f32 %v2420, %v2470
    %v2472 = vand.u32 %v2240, 4294901760
    %2473 = vmatmul.f32.gmra.mxu0 %v2472
    %v2474 = vpop.f32.mrf.mxu0
    %v2475 = vadd.f32 %v2426, %v2474
    %2476 = vdwg.mxu0
    %2477 = vmatpush.msra.mxu0 0.0
    %2478 = vmatpush.msra.mxu0 0.0
    %2479 = vmatpush.msra.mxu0 0.0
    %2480 = vmatpush.msra.mxu0 0.0
    %2481 = vmatpush.msra.mxu0 0.0
    %2482 = vmatpush.msra.mxu0 0.0
    %2483 = vmatpush.msra.mxu0 0.0
    %2484 = vmatpush.msra.mxu0 0.0
    %v2485 = vand.u32 %v119, 4294901760
    %2486 = vmatpush.msra.mxu0 %v2485
    %v2487 = vand.u32 %v117, 4294901760
    %2488 = vmatpush.msra.mxu0 %v2487
    %v2489 = vand.u32 %v115, 4294901760
    %2490 = vmatpush.msra.mxu0 %v2489
    %v2491 = vand.u32 %v113, 4294901760
    %2492 = vmatpush.msra.mxu0 %v2491
    %v2493 = vand.u32 %v111, 4294901760
    %2494 = vmatpush.msra.mxu0 %v2493
    %v2495 = vand.u32 %v109, 4294901760
    %2496 = vmatpush.msra.mxu0 %v2495
    %v2497 = vand.u32 %v107, 4294901760
    %2498 = vmatpush.msra.mxu0 %v2497
    %v2499 = vand.u32 %v105, 4294901760
    %2500 = vmatpush.msra.mxu0 %v2499
    %v2501 = vand.u32 %v2237, 4294901760
    %2502 = vmatmul.f32.gmra.mxu0 %v2501
    %v2503 = vpop.f32.mrf.mxu0
    %v2504 = vadd.f32 %v2471, %v2503
    %v2505 = vand.u32 %v2240, 4294901760
    %2506 = vmatmul.f32.gmra.mxu0 %v2505
    %v2507 = vpop.f32.mrf.mxu0
    %v2508 = vadd.f32 %v2475, %v2507
    %2509 = vdwg.mxu0
    %2510 = vmatpush.msra.mxu0 0.0
    %2511 = vmatpush.msra.mxu0 0.0
    %2512 = vmatpush.msra.mxu0 0.0
    %2513 = vmatpush.msra.mxu0 0.0
    %2514 = vmatpush.msra.mxu0 0.0
    %2515 = vmatpush.msra.mxu0 0.0
    %2516 = vmatpush.msra.mxu0 0.0
    %2517 = vmatpush.msra.mxu0 0.0
    %v2518 = vand.u32 %v120, 4294901760
    %2519 = vmatpush.msra.mxu0 %v2518
    %v2520 = vand.u32 %v118, 4294901760
    %2521 = vmatpush.msra.mxu0 %v2520
    %v2522 = vand.u32 %v116, 4294901760
    %2523 = vmatpush.msra.mxu0 %v2522
    %v2524 = vand.u32 %v114, 4294901760
    %2525 = vmatpush.msra.mxu0 %v2524
    %v2526 = vand.u32 %v112, 4294901760
    %2527 = vmatpush.msra.mxu0 %v2526
    %v2528 = vand.u32 %v110, 4294901760
    %2529 = vmatpush.msra.mxu0 %v2528
    %v2530 = vand.u32 %v108, 4294901760
    %2531 = vmatpush.msra.mxu0 %v2530
    %v2532 = vand.u32 %v106, 4294901760
    %2533 = vmatpush.msra.mxu0 %v2532
    %v2534 = vand.u32 %v2237, 4294901760
    %v2535 = vsub.f32 %v2237, %v2534
    %v2536 = vand.u32 %v2535, 4294901760
    %v2537 = vsub.f32 %v2535, %v2536
    %v2538 = vand.u32 %v2537, 4294901760
    %2539 = vmatmul.f32.gmra.mxu0 %v2538
    %v2540 = vpop.f32.mrf.mxu0
    %v2541 = vadd.f32 0.0, %v2540
    %v2542 = vand.u32 %v2240, 4294901760
    %v2543 = vsub.f32 %v2240, %v2542
    %v2544 = vand.u32 %v2543, 4294901760
    %v2545 = vsub.f32 %v2543, %v2544
    %v2546 = vand.u32 %v2545, 4294901760
    %2547 = vmatmul.f32.gmra.mxu0 %v2546
    %v2548 = vpop.f32.mrf.mxu0
    %v2549 = vadd.f32 0.0, %v2548
    %2550 = vdwg.mxu0
    %2551 = vmatpush.msra.mxu0 0.0
    %2552 = vmatpush.msra.mxu0 0.0
    %2553 = vmatpush.msra.mxu0 0.0
    %2554 = vmatpush.msra.mxu0 0.0
    %2555 = vmatpush.msra.mxu0 0.0
    %2556 = vmatpush.msra.mxu0 0.0
    %2557 = vmatpush.msra.mxu0 0.0
    %2558 = vmatpush.msra.mxu0 0.0
    %v2559 = vand.u32 %v120, 4294901760
    %v2560 = vsub.f32 %v120, %v2559
    %v2561 = vand.u32 %v2560, 4294901760
    %v2562 = vsub.f32 %v2560, %v2561
    %v2563 = vand.u32 %v2562, 4294901760
    %2564 = vmatpush.msra.mxu0 %v2563
    %v2565 = vand.u32 %v118, 4294901760
    %v2566 = vsub.f32 %v118, %v2565
    %v2567 = vand.u32 %v2566, 4294901760
    %v2568 = vsub.f32 %v2566, %v2567
    %v2569 = vand.u32 %v2568, 4294901760
    %2570 = vmatpush.msra.mxu0 %v2569
    %v2571 = vand.u32 %v116, 4294901760
    %v2572 = vsub.f32 %v116, %v2571
    %v2573 = vand.u32 %v2572, 4294901760
    %v2574 = vsub.f32 %v2572, %v2573
    %v2575 = vand.u32 %v2574, 4294901760
    %2576 = vmatpush.msra.mxu0 %v2575
    %v2577 = vand.u32 %v114, 4294901760
    %v2578 = vsub.f32 %v114, %v2577
    %v2579 = vand.u32 %v2578, 4294901760
    %v2580 = vsub.f32 %v2578, %v2579
    %v2581 = vand.u32 %v2580, 4294901760
    %2582 = vmatpush.msra.mxu0 %v2581
    %v2583 = vand.u32 %v112, 4294901760
    %v2584 = vsub.f32 %v112, %v2583
    %v2585 = vand.u32 %v2584, 4294901760
    %v2586 = vsub.f32 %v2584, %v2585
    %v2587 = vand.u32 %v2586, 4294901760
    %2588 = vmatpush.msra.mxu0 %v2587
    %v2589 = vand.u32 %v110, 4294901760
    %v2590 = vsub.f32 %v110, %v2589
    %v2591 = vand.u32 %v2590, 4294901760
    %v2592 = vsub.f32 %v2590, %v2591
    %v2593 = vand.u32 %v2592, 4294901760
    %2594 = vmatpush.msra.mxu0 %v2593
    %v2595 = vand.u32 %v108, 4294901760
    %v2596 = vsub.f32 %v108, %v2595
    %v2597 = vand.u32 %v2596, 4294901760
    %v2598 = vsub.f32 %v2596, %v2597
    %v2599 = vand.u32 %v2598, 4294901760
    %2600 = vmatpush.msra.mxu0 %v2599
    %v2601 = vand.u32 %v106, 4294901760
    %v2602 = vsub.f32 %v106, %v2601
    %v2603 = vand.u32 %v2602, 4294901760
    %v2604 = vsub.f32 %v2602, %v2603
    %v2605 = vand.u32 %v2604, 4294901760
    %2606 = vmatpush.msra.mxu0 %v2605
    %v2607 = vand.u32 %v2237, 4294901760
    %2608 = vmatmul.f32.gmra.mxu0 %v2607
    %v2609 = vpop.f32.mrf.mxu0
    %v2610 = vadd.f32 %v2541, %v2609
    %v2611 = vand.u32 %v2240, 4294901760
    %2612 = vmatmul.f32.gmra.mxu0 %v2611
    %v2613 = vpop.f32.mrf.mxu0
    %v2614 = vadd.f32 %v2549, %v2613
    %2615 = vdwg.mxu0
    %2616 = vmatpush.msra.mxu0 0.0
    %2617 = vmatpush.msra.mxu0 0.0
    %2618 = vmatpush.msra.mxu0 0.0
    %2619 = vmatpush.msra.mxu0 0.0
    %2620 = vmatpush.msra.mxu0 0.0
    %2621 = vmatpush.msra.mxu0 0.0
    %2622 = vmatpush.msra.mxu0 0.0
    %2623 = vmatpush.msra.mxu0 0.0
    %v2624 = vand.u32 %v120, 4294901760
    %v2625 = vsub.f32 %v120, %v2624
    %2626 = vmatpush.msra.mxu0 %v2625
    %v2627 = vand.u32 %v118, 4294901760
    %v2628 = vsub.f32 %v118, %v2627
    %2629 = vmatpush.msra.mxu0 %v2628
    %v2630 = vand.u32 %v116, 4294901760
    %v2631 = vsub.f32 %v116, %v2630
    %2632 = vmatpush.msra.mxu0 %v2631
    %v2633 = vand.u32 %v114, 4294901760
    %v2634 = vsub.f32 %v114, %v2633
    %2635 = vmatpush.msra.mxu0 %v2634
    %v2636 = vand.u32 %v112, 4294901760
    %v2637 = vsub.f32 %v112, %v2636
    %2638 = vmatpush.msra.mxu0 %v2637
    %v2639 = vand.u32 %v110, 4294901760
    %v2640 = vsub.f32 %v110, %v2639
    %2641 = vmatpush.msra.mxu0 %v2640
    %v2642 = vand.u32 %v108, 4294901760
    %v2643 = vsub.f32 %v108, %v2642
    %2644 = vmatpush.msra.mxu0 %v2643
    %v2645 = vand.u32 %v106, 4294901760
    %v2646 = vsub.f32 %v106, %v2645
    %2647 = vmatpush.msra.mxu0 %v2646
    %v2648 = vand.u32 %v2237, 4294901760
    %v2649 = vsub.f32 %v2237, %v2648
    %2650 = vmatmul.f32.gmra.mxu0 %v2649
    %v2651 = vpop.f32.mrf.mxu0
    %v2652 = vadd.f32 %v2610, %v2651
    %v2653 = vand.u32 %v2240, 4294901760
    %v2654 = vsub.f32 %v2240, %v2653
    %2655 = vmatmul.f32.gmra.mxu0 %v2654
    %v2656 = vpop.f32.mrf.mxu0
    %v2657 = vadd.f32 %v2614, %v2656
    %2658 = vdwg.mxu0
    %2659 = vmatpush.msra.mxu0 0.0
    %2660 = vmatpush.msra.mxu0 0.0
    %2661 = vmatpush.msra.mxu0 0.0
    %2662 = vmatpush.msra.mxu0 0.0
    %2663 = vmatpush.msra.mxu0 0.0
    %2664 = vmatpush.msra.mxu0 0.0
    %2665 = vmatpush.msra.mxu0 0.0
    %2666 = vmatpush.msra.mxu0 0.0
    %v2667 = vand.u32 %v120, 4294901760
    %2668 = vmatpush.msra.mxu0 %v2667
    %v2669 = vand.u32 %v118, 4294901760
    %2670 = vmatpush.msra.mxu0 %v2669
    %v2671 = vand.u32 %v116, 4294901760
    %2672 = vmatpush.msra.mxu0 %v2671
    %v2673 = vand.u32 %v114, 4294901760
    %2674 = vmatpush.msra.mxu0 %v2673
    %v2675 = vand.u32 %v112, 4294901760
    %2676 = vmatpush.msra.mxu0 %v2675
    %v2677 = vand.u32 %v110, 4294901760
    %2678 = vmatpush.msra.mxu0 %v2677
    %v2679 = vand.u32 %v108, 4294901760
    %2680 = vmatpush.msra.mxu0 %v2679
    %v2681 = vand.u32 %v106, 4294901760
    %2682 = vmatpush.msra.mxu0 %v2681
    %v2683 = vand.u32 %v2237, 4294901760
    %v2684 = vsub.f32 %v2237, %v2683
    %v2685 = vand.u32 %v2684, 4294901760
    %2686 = vmatmul.f32.gmra.mxu0 %v2685
    %v2687 = vpop.f32.mrf.mxu0
    %v2688 = vadd.f32 %v2652, %v2687
    %v2689 = vand.u32 %v2240, 4294901760
    %v2690 = vsub.f32 %v2240, %v2689
    %v2691 = vand.u32 %v2690, 4294901760
    %2692 = vmatmul.f32.gmra.mxu0 %v2691
    %v2693 = vpop.f32.mrf.mxu0
    %v2694 = vadd.f32 %v2657, %v2693
    %2695 = vdwg.mxu0
    %2696 = vmatpush.msra.mxu0 0.0
    %2697 = vmatpush.msra.mxu0 0.0
    %2698 = vmatpush.msra.mxu0 0.0
    %2699 = vmatpush.msra.mxu0 0.0
    %2700 = vmatpush.msra.mxu0 0.0
    %2701 = vmatpush.msra.mxu0 0.0
    %2702 = vmatpush.msra.mxu0 0.0
    %2703 = vmatpush.msra.mxu0 0.0
    %v2704 = vand.u32 %v120, 4294901760
    %v2705 = vsub.f32 %v120, %v2704
    %v2706 = vand.u32 %v2705, 4294901760
    %2707 = vmatpush.msra.mxu0 %v2706
    %v2708 = vand.u32 %v118, 4294901760
    %v2709 = vsub.f32 %v118, %v2708
    %v2710 = vand.u32 %v2709, 4294901760
    %2711 = vmatpush.msra.mxu0 %v2710
    %v2712 = vand.u32 %v116, 4294901760
    %v2713 = vsub.f32 %v116, %v2712
    %v2714 = vand.u32 %v2713, 4294901760
    %2715 = vmatpush.msra.mxu0 %v2714
    %v2716 = vand.u32 %v114, 4294901760
    %v2717 = vsub.f32 %v114, %v2716
    %v2718 = vand.u32 %v2717, 4294901760
    %2719 = vmatpush.msra.mxu0 %v2718
    %v2720 = vand.u32 %v112, 4294901760
    %v2721 = vsub.f32 %v112, %v2720
    %v2722 = vand.u32 %v2721, 4294901760
    %2723 = vmatpush.msra.mxu0 %v2722
    %v2724 = vand.u32 %v110, 4294901760
    %v2725 = vsub.f32 %v110, %v2724
    %v2726 = vand.u32 %v2725, 4294901760
    %2727 = vmatpush.msra.mxu0 %v2726
    %v2728 = vand.u32 %v108, 4294901760
    %v2729 = vsub.f32 %v108, %v2728
    %v2730 = vand.u32 %v2729, 4294901760
    %2731 = vmatpush.msra.mxu0 %v2730
    %v2732 = vand.u32 %v106, 4294901760
    %v2733 = vsub.f32 %v106, %v2732
    %v2734 = vand.u32 %v2733, 4294901760
    %2735 = vmatpush.msra.mxu0 %v2734
    %v2736 = vand.u32 %v2237, 4294901760
    %2737 = vmatmul.f32.gmra.mxu0 %v2736
    %v2738 = vpop.f32.mrf.mxu0
    %v2739 = vadd.f32 %v2688, %v2738
    %v2740 = vand.u32 %v2240, 4294901760
    %2741 = vmatmul.f32.gmra.mxu0 %v2740
    %v2742 = vpop.f32.mrf.mxu0
    %v2743 = vadd.f32 %v2694, %v2742
    %2744 = vdwg.mxu0
    %2745 = vmatpush.msra.mxu0 0.0
    %2746 = vmatpush.msra.mxu0 0.0
    %2747 = vmatpush.msra.mxu0 0.0
    %2748 = vmatpush.msra.mxu0 0.0
    %2749 = vmatpush.msra.mxu0 0.0
    %2750 = vmatpush.msra.mxu0 0.0
    %2751 = vmatpush.msra.mxu0 0.0
    %2752 = vmatpush.msra.mxu0 0.0
    %v2753 = vand.u32 %v120, 4294901760
    %2754 = vmatpush.msra.mxu0 %v2753
    %v2755 = vand.u32 %v118, 4294901760
    %2756 = vmatpush.msra.mxu0 %v2755
    %v2757 = vand.u32 %v116, 4294901760
    %2758 = vmatpush.msra.mxu0 %v2757
    %v2759 = vand.u32 %v114, 4294901760
    %2760 = vmatpush.msra.mxu0 %v2759
    %v2761 = vand.u32 %v112, 4294901760
    %2762 = vmatpush.msra.mxu0 %v2761
    %v2763 = vand.u32 %v110, 4294901760
    %2764 = vmatpush.msra.mxu0 %v2763
    %v2765 = vand.u32 %v108, 4294901760
    %2766 = vmatpush.msra.mxu0 %v2765
    %v2767 = vand.u32 %v106, 4294901760
    %2768 = vmatpush.msra.mxu0 %v2767
    %v2769 = vand.u32 %v2237, 4294901760
    %2770 = vmatmul.f32.gmra.mxu0 %v2769
    %v2771 = vpop.f32.mrf.mxu0
    %v2772 = vadd.f32 %v2739, %v2771
    %v2773 = vand.u32 %v2240, 4294901760
    %2774 = vmatmul.f32.gmra.mxu0 %v2773
    %v2775 = vpop.f32.mrf.mxu0
    %v2776 = vadd.f32 %v2743, %v2775
    %2777 = vdwg.mxu0
    %2778 = vmatpush.msra.mxu0 0.0
    %2779 = vmatpush.msra.mxu0 0.0
    %2780 = vmatpush.msra.mxu0 0.0
    %2781 = vmatpush.msra.mxu0 0.0
    %2782 = vmatpush.msra.mxu0 0.0
    %2783 = vmatpush.msra.mxu0 0.0
    %2784 = vmatpush.msra.mxu0 0.0
    %2785 = vmatpush.msra.mxu0 0.0
    %2786 = vmatpush.msra.mxu0 0.0
    %2787 = vmatpush.msra.mxu0 0.0
    %2788 = vmatpush.msra.mxu0 0.0
    %2789 = vmatpush.msra.mxu0 0.0
    %2790 = vmatpush.msra.mxu0 0.0
    %2791 = vmatpush.msra.mxu0 0.0
    %2792 = vmatpush.msra.mxu0 %v2508
    %2793 = vmatpush.msra.mxu0 %v2504
    %2794 = vmatmul.f32.gmra.mxu0 %v814
    %v2795 = vpop.f32.mrf.mxu0
    %v2796 = vadd.f32 %v735, %v2795
    %2797 = vmatmul.f32.gmra.mxu0 %v817
    %v2798 = vpop.f32.mrf.mxu0
    %v2799 = vadd.f32 %v740, %v2798
    %2800 = vmatmul.f32.gmra.mxu0 %v820
    %v2801 = vpop.f32.mrf.mxu0
    %v2802 = vadd.f32 %v745, %v2801
    %2803 = vmatmul.f32.gmra.mxu0 %v823
    %v2804 = vpop.f32.mrf.mxu0
    %v2805 = vadd.f32 %v750, %v2804
    %2806 = vmatmul.f32.gmra.mxu0 %v826
    %v2807 = vpop.f32.mrf.mxu0
    %v2808 = vadd.f32 %v755, %v2807
    %2809 = vmatmul.f32.gmra.mxu0 %v829
    %v2810 = vpop.f32.mrf.mxu0
    %v2811 = vadd.f32 %v760, %v2810
    %2812 = vmatmul.f32.gmra.mxu0 %v832
    %v2813 = vpop.f32.mrf.mxu0
    %v2814 = vadd.f32 %v765, %v2813
    %2815 = vmatmul.f32.gmra.mxu0 %v835
    %v2816 = vpop.f32.mrf.mxu0
    %v2817 = vadd.f32 %v770, %v2816
    %2818 = vmatmul.f32.gmra.mxu0 %v838
    %v2819 = vpop.f32.mrf.mxu0
    %v2820 = vadd.f32 %v775, %v2819
    %2821 = vmatmul.f32.gmra.mxu0 %v841
    %v2822 = vpop.f32.mrf.mxu0
    %v2823 = vadd.f32 %v780, %v2822
    %2824 = vmatmul.f32.gmra.mxu0 %v844
    %v2825 = vpop.f32.mrf.mxu0
    %v2826 = vadd.f32 %v785, %v2825
    %2827 = vmatmul.f32.gmra.mxu0 %v847
    %v2828 = vpop.f32.mrf.mxu0
    %v2829 = vadd.f32 %v790, %v2828
    %2830 = vmatmul.f32.gmra.mxu0 %v850
    %v2831 = vpop.f32.mrf.mxu0
    %v2832 = vadd.f32 %v795, %v2831
    %2833 = vmatmul.f32.gmra.mxu0 %v853
    %v2834 = vpop.f32.mrf.mxu0
    %v2835 = vadd.f32 %v800, %v2834
    %2836 = vmatmul.f32.gmra.mxu0 %v856
    %v2837 = vpop.f32.mrf.mxu0
    %v2838 = vadd.f32 %v805, %v2837
    %2839 = vmatmul.f32.gmra.mxu0 %v859
    %v2840 = vpop.f32.mrf.mxu0
    %v2841 = vadd.f32 %v810, %v2840
    %2842 = vdwg.mxu0
    %2843 = vmatpush.msra.mxu0 0.0
    %2844 = vmatpush.msra.mxu0 0.0
    %2845 = vmatpush.msra.mxu0 0.0
    %2846 = vmatpush.msra.mxu0 0.0
    %2847 = vmatpush.msra.mxu0 0.0
    %2848 = vmatpush.msra.mxu0 0.0
    %2849 = vmatpush.msra.mxu0 0.0
    %2850 = vmatpush.msra.mxu0 0.0
    %2851 = vmatpush.msra.mxu0 0.0
    %2852 = vmatpush.msra.mxu0 0.0
    %2853 = vmatpush.msra.mxu0 0.0
    %2854 = vmatpush.msra.mxu0 0.0
    %2855 = vmatpush.msra.mxu0 0.0
    %2856 = vmatpush.msra.mxu0 0.0
    %2857 = vmatpush.msra.mxu0 %v2776
    %2858 = vmatpush.msra.mxu0 %v2772
    %2859 = vmatmul.f32.gmra.mxu0 %v814
    %v2860 = vpop.f32.mrf.mxu0
    %v2861 = vadd.f32 %v735, %v2860
    %2862 = vmatmul.f32.gmra.mxu0 %v817
    %v2863 = vpop.f32.mrf.mxu0
    %v2864 = vadd.f32 %v740, %v2863
    %2865 = vmatmul.f32.gmra.mxu0 %v820
    %v2866 = vpop.f32.mrf.mxu0
    %v2867 = vadd.f32 %v745, %v2866
    %2868 = vmatmul.f32.gmra.mxu0 %v823
    %v2869 = vpop.f32.mrf.mxu0
    %v2870 = vadd.f32 %v750, %v2869
    %2871 = vmatmul.f32.gmra.mxu0 %v826
    %v2872 = vpop.f32.mrf.mxu0
    %v2873 = vadd.f32 %v755, %v2872
    %2874 = vmatmul.f32.gmra.mxu0 %v829
    %v2875 = vpop.f32.mrf.mxu0
    %v2876 = vadd.f32 %v760, %v2875
    %2877 = vmatmul.f32.gmra.mxu0 %v832
    %v2878 = vpop.f32.mrf.mxu0
    %v2879 = vadd.f32 %v765, %v2878
    %2880 = vmatmul.f32.gmra.mxu0 %v835
    %v2881 = vpop.f32.mrf.mxu0
    %v2882 = vadd.f32 %v770, %v2881
    %2883 = vmatmul.f32.gmra.mxu0 %v838
    %v2884 = vpop.f32.mrf.mxu0
    %v2885 = vadd.f32 %v775, %v2884
    %2886 = vmatmul.f32.gmra.mxu0 %v841
    %v2887 = vpop.f32.mrf.mxu0
    %v2888 = vadd.f32 %v780, %v2887
    %2889 = vmatmul.f32.gmra.mxu0 %v844
    %v2890 = vpop.f32.mrf.mxu0
    %v2891 = vadd.f32 %v785, %v2890
    %2892 = vmatmul.f32.gmra.mxu0 %v847
    %v2893 = vpop.f32.mrf.mxu0
    %v2894 = vadd.f32 %v790, %v2893
    %2895 = vmatmul.f32.gmra.mxu0 %v850
    %v2896 = vpop.f32.mrf.mxu0
    %v2897 = vadd.f32 %v795, %v2896
    %2898 = vmatmul.f32.gmra.mxu0 %v853
    %v2899 = vpop.f32.mrf.mxu0
    %v2900 = vadd.f32 %v800, %v2899
    %2901 = vmatmul.f32.gmra.mxu0 %v856
    %v2902 = vpop.f32.mrf.mxu0
    %v2903 = vadd.f32 %v805, %v2902
    %2904 = vmatmul.f32.gmra.mxu0 %v859
    %v2905 = vpop.f32.mrf.mxu0
    %v2906 = vadd.f32 %v810, %v2905
    %2907 = vdwg.mxu0
    %v2908 = vmax.f32 %v2796, 0.0
    %v2909 = vmax.f32 %v2861, 0.0
    %v2910 = vmax.f32 %v2799, 0.0
    %v2911 = vmax.f32 %v2864, 0.0
    %v2912 = vmax.f32 %v2802, 0.0
    %v2913 = vmax.f32 %v2867, 0.0
    %v2914 = vmax.f32 %v2805, 0.0
    %v2915 = vmax.f32 %v2870, 0.0
    %v2916 = vmax.f32 %v2808, 0.0
    %v2917 = vmax.f32 %v2873, 0.0
    %v2918 = vmax.f32 %v2811, 0.0
    %v2919 = vmax.f32 %v2876, 0.0
    %v2920 = vmax.f32 %v2814, 0.0
    %v2921 = vmax.f32 %v2879, 0.0
    %v2922 = vmax.f32 %v2817, 0.0
    %v2923 = vmax.f32 %v2882, 0.0
    %v2924 = vmax.f32 %v2820, 0.0
    %v2925 = vmax.f32 %v2885, 0.0
    %v2926 = vmax.f32 %v2823, 0.0
    %v2927 = vmax.f32 %v2888, 0.0
    %v2928 = vmax.f32 %v2826, 0.0
    %v2929 = vmax.f32 %v2891, 0.0
    %v2930 = vmax.f32 %v2829, 0.0
    %v2931 = vmax.f32 %v2894, 0.0
    %v2932 = vmax.f32 %v2832, 0.0
    %v2933 = vmax.f32 %v2897, 0.0
    %v2934 = vmax.f32 %v2835, 0.0
    %v2935 = vmax.f32 %v2900, 0.0
    %v2936 = vmax.f32 %v2838, 0.0
    %v2937 = vmax.f32 %v2903, 0.0
    %v2938 = vmax.f32 %v2841, 0.0
    %v2939 = vmax.f32 %v2906, 0.0
    %2940 = vmatpush.msra.mxu0 %v2938
    %2941 = vmatpush.msra.mxu0 %v2936
    %2942 = vmatpush.msra.mxu0 %v2934
    %2943 = vmatpush.msra.mxu0 %v2932
    %2944 = vmatpush.msra.mxu0 %v2930
    %2945 = vmatpush.msra.mxu0 %v2928
    %2946 = vmatpush.msra.mxu0 %v2926
    %2947 = vmatpush.msra.mxu0 %v2924
    %2948 = vmatpush.msra.mxu0 %v2922
    %2949 = vmatpush.msra.mxu0 %v2920
    %2950 = vmatpush.msra.mxu0 %v2918
    %2951 = vmatpush.msra.mxu0 %v2916
    %2952 = vmatpush.msra.mxu0 %v2914
    %2953 = vmatpush.msra.mxu0 %v2912
    %2954 = vmatpush.msra.mxu0 %v2910
    %2955 = vmatpush.msra.mxu0 %v2908
    %2956 = vmatmul.f32.gmra.mxu0 %v153
    %v2957 = vpop.f32.mrf.mxu0
    %v2958 = vadd.f32 %v1026, %v2957
    %2959 = vmatmul.f32.gmra.mxu0 %v154
    %v2960 = vpop.f32.mrf.mxu0
    %v2961 = vadd.f32 %v1031, %v2960
    %2962 = vmatmul.f32.gmra.mxu0 %v155
    %v2963 = vpop.f32.mrf.mxu0
    %v2964 = vadd.f32 %v1036, %v2963
    %2965 = vmatmul.f32.gmra.mxu0 %v156
    %v2966 = vpop.f32.mrf.mxu0
    %v2967 = vadd.f32 %v1041, %v2966
    %2968 = vmatmul.f32.gmra.mxu0 %v157
    %v2969 = vpop.f32.mrf.mxu0
    %v2970 = vadd.f32 %v1046, %v2969
    %2971 = vmatmul.f32.gmra.mxu0 %v158
    %v2972 = vpop.f32.mrf.mxu0
    %v2973 = vadd.f32 %v1051, %v2972
    %2974 = vmatmul.f32.gmra.mxu0 %v159
    %v2975 = vpop.f32.mrf.mxu0
    %v2976 = vadd.f32 %v1056, %v2975
    %2977 = vmatmul.f32.gmra.mxu0 %v160
    %v2978 = vpop.f32.mrf.mxu0
    %v2979 = vadd.f32 %v1061, %v2978
    %2980 = vmatmul.f32.gmra.mxu0 %v161
    %v2981 = vpop.f32.mrf.mxu0
    %v2982 = vadd.f32 %v1066, %v2981
    %2983 = vmatmul.f32.gmra.mxu0 %v162
    %v2984 = vpop.f32.mrf.mxu0
    %v2985 = vadd.f32 %v1071, %v2984
    %2986 = vmatmul.f32.gmra.mxu0 %v163
    %v2987 = vpop.f32.mrf.mxu0
    %v2988 = vadd.f32 %v1076, %v2987
    %2989 = vmatmul.f32.gmra.mxu0 %v164
    %v2990 = vpop.f32.mrf.mxu0
    %v2991 = vadd.f32 %v1081, %v2990
    %2992 = vmatmul.f32.gmra.mxu0 %v165
    %v2993 = vpop.f32.mrf.mxu0
    %v2994 = vadd.f32 %v1086, %v2993
    %2995 = vmatmul.f32.gmra.mxu0 %v166
    %v2996 = vpop.f32.mrf.mxu0
    %v2997 = vadd.f32 %v1091, %v2996
    %2998 = vmatmul.f32.gmra.mxu0 %v167
    %v2999 = vpop.f32.mrf.mxu0
    %v3000 = vadd.f32 %v1096, %v2999
    %3001 = vmatmul.f32.gmra.mxu0 %v168
    %v3002 = vpop.f32.mrf.mxu0
    %v3003 = vadd.f32 %v1101, %v3002
    %3004 = vdwg.mxu0
    %3005 = vmatpush.msra.mxu0 %v2939
    %3006 = vmatpush.msra.mxu0 %v2937
    %3007 = vmatpush.msra.mxu0 %v2935
    %3008 = vmatpush.msra.mxu0 %v2933
    %3009 = vmatpush.msra.mxu0 %v2931
    %3010 = vmatpush.msra.mxu0 %v2929
    %3011 = vmatpush.msra.mxu0 %v2927
    %3012 = vmatpush.msra.mxu0 %v2925
    %3013 = vmatpush.msra.mxu0 %v2923
    %3014 = vmatpush.msra.mxu0 %v2921
    %3015 = vmatpush.msra.mxu0 %v2919
    %3016 = vmatpush.msra.mxu0 %v2917
    %3017 = vmatpush.msra.mxu0 %v2915
    %3018 = vmatpush.msra.mxu0 %v2913
    %3019 = vmatpush.msra.mxu0 %v2911
    %3020 = vmatpush.msra.mxu0 %v2909
    %3021 = vmatmul.f32.gmra.mxu0 %v153
    %v3022 = vpop.f32.mrf.mxu0
    %v3023 = vadd.f32 %v1026, %v3022
    %3024 = vmatmul.f32.gmra.mxu0 %v154
    %v3025 = vpop.f32.mrf.mxu0
    %v3026 = vadd.f32 %v1031, %v3025
    %3027 = vmatmul.f32.gmra.mxu0 %v155
    %v3028 = vpop.f32.mrf.mxu0
    %v3029 = vadd.f32 %v1036, %v3028
    %3030 = vmatmul.f32.gmra.mxu0 %v156
    %v3031 = vpop.f32.mrf.mxu0
    %v3032 = vadd.f32 %v1041, %v3031
    %3033 = vmatmul.f32.gmra.mxu0 %v157
    %v3034 = vpop.f32.mrf.mxu0
    %v3035 = vadd.f32 %v1046, %v3034
    %3036 = vmatmul.f32.gmra.mxu0 %v158
    %v3037 = vpop.f32.mrf.mxu0
    %v3038 = vadd.f32 %v1051, %v3037
    %3039 = vmatmul.f32.gmra.mxu0 %v159
    %v3040 = vpop.f32.mrf.mxu0
    %v3041 = vadd.f32 %v1056, %v3040
    %3042 = vmatmul.f32.gmra.mxu0 %v160
    %v3043 = vpop.f32.mrf.mxu0
    %v3044 = vadd.f32 %v1061, %v3043
    %3045 = vmatmul.f32.gmra.mxu0 %v161
    %v3046 = vpop.f32.mrf.mxu0
    %v3047 = vadd.f32 %v1066, %v3046
    %3048 = vmatmul.f32.gmra.mxu0 %v162
    %v3049 = vpop.f32.mrf.mxu0
    %v3050 = vadd.f32 %v1071, %v3049
    %3051 = vmatmul.f32.gmra.mxu0 %v163
    %v3052 = vpop.f32.mrf.mxu0
    %v3053 = vadd.f32 %v1076, %v3052
    %3054 = vmatmul.f32.gmra.mxu0 %v164
    %v3055 = vpop.f32.mrf.mxu0
    %v3056 = vadd.f32 %v1081, %v3055
    %3057 = vmatmul.f32.gmra.mxu0 %v165
    %v3058 = vpop.f32.mrf.mxu0
    %v3059 = vadd.f32 %v1086, %v3058
    %3060 = vmatmul.f32.gmra.mxu0 %v166
    %v3061 = vpop.f32.mrf.mxu0
    %v3062 = vadd.f32 %v1091, %v3061
    %3063 = vmatmul.f32.gmra.mxu0 %v167
    %v3064 = vpop.f32.mrf.mxu0
    %v3065 = vadd.f32 %v1096, %v3064
    %3066 = vmatmul.f32.gmra.mxu0 %v168
    %v3067 = vpop.f32.mrf.mxu0
    %v3068 = vadd.f32 %v1101, %v3067
    %3069 = vdwg.mxu0
    %v3070 = vmax.f32 %v2958, 0.0
    %v3071 = vmax.f32 %v3023, 0.0
    %v3072 = vmax.f32 %v2961, 0.0
    %v3073 = vmax.f32 %v3026, 0.0
    %v3074 = vmax.f32 %v2964, 0.0
    %v3075 = vmax.f32 %v3029, 0.0
    %v3076 = vmax.f32 %v2967, 0.0
    %v3077 = vmax.f32 %v3032, 0.0
    %v3078 = vmax.f32 %v2970, 0.0
    %v3079 = vmax.f32 %v3035, 0.0
    %v3080 = vmax.f32 %v2973, 0.0
    %v3081 = vmax.f32 %v3038, 0.0
    %v3082 = vmax.f32 %v2976, 0.0
    %v3083 = vmax.f32 %v3041, 0.0
    %v3084 = vmax.f32 %v2979, 0.0
    %v3085 = vmax.f32 %v3044, 0.0
    %v3086 = vmax.f32 %v2982, 0.0
    %v3087 = vmax.f32 %v3047, 0.0
    %v3088 = vmax.f32 %v2985, 0.0
    %v3089 = vmax.f32 %v3050, 0.0
    %v3090 = vmax.f32 %v2988, 0.0
    %v3091 = vmax.f32 %v3053, 0.0
    %v3092 = vmax.f32 %v2991, 0.0
    %v3093 = vmax.f32 %v3056, 0.0
    %v3094 = vmax.f32 %v2994, 0.0
    %v3095 = vmax.f32 %v3059, 0.0
    %v3096 = vmax.f32 %v2997, 0.0
    %v3097 = vmax.f32 %v3062, 0.0
    %v3098 = vmax.f32 %v3000, 0.0
    %v3099 = vmax.f32 %v3065, 0.0
    %v3100 = vmax.f32 %v3003, 0.0
    %v3101 = vmax.f32 %v3068, 0.0
    %3102 = vmatpush.msra.mxu0 %v3100
    %3103 = vmatpush.msra.mxu0 %v3098
    %3104 = vmatpush.msra.mxu0 %v3096
    %3105 = vmatpush.msra.mxu0 %v3094
    %3106 = vmatpush.msra.mxu0 %v3092
    %3107 = vmatpush.msra.mxu0 %v3090
    %3108 = vmatpush.msra.mxu0 %v3088
    %3109 = vmatpush.msra.mxu0 %v3086
    %3110 = vmatpush.msra.mxu0 %v3084
    %3111 = vmatpush.msra.mxu0 %v3082
    %3112 = vmatpush.msra.mxu0 %v3080
    %3113 = vmatpush.msra.mxu0 %v3078
    %3114 = vmatpush.msra.mxu0 %v3076
    %3115 = vmatpush.msra.mxu0 %v3074
    %3116 = vmatpush.msra.mxu0 %v3072
    %3117 = vmatpush.msra.mxu0 %v3070
    %3118 = vmatmul.f32.gmra.mxu0 %v185
    %v3119 = vpop.f32.mrf.mxu0
    %v3120 = vadd.f32 %v1265, %v3119
    %3121 = vdwg.mxu0
    %3122 = vmatpush.msra.mxu0 %v3101
    %3123 = vmatpush.msra.mxu0 %v3099
    %3124 = vmatpush.msra.mxu0 %v3097
    %3125 = vmatpush.msra.mxu0 %v3095
    %3126 = vmatpush.msra.mxu0 %v3093
    %3127 = vmatpush.msra.mxu0 %v3091
    %3128 = vmatpush.msra.mxu0 %v3089
    %3129 = vmatpush.msra.mxu0 %v3087
    %3130 = vmatpush.msra.mxu0 %v3085
    %3131 = vmatpush.msra.mxu0 %v3083
    %3132 = vmatpush.msra.mxu0 %v3081
    %3133 = vmatpush.msra.mxu0 %v3079
    %3134 = vmatpush.msra.mxu0 %v3077
    %3135 = vmatpush.msra.mxu0 %v3075
    %3136 = vmatpush.msra.mxu0 %v3073
    %3137 = vmatpush.msra.mxu0 %v3071
    %3138 = vmatmul.f32.gmra.mxu0 %v185
    %v3139 = vpop.f32.mrf.mxu0
    %v3140 = vadd.f32 %v1265, %v3139
    %3141 = vdwg.mxu0
    %v3144 = vrot.slane %v3140, 7
    %v3145 = vsel %vm1309, %v3120, %v3144
    %s3147 = scalar_lea.vmem [#allocation3], 2
    %3148 = vst.msk [vmem:[%s3147] ss:$4 sm:$0x3] %vm1315, %v3145
    %s3149 = scalar_lea.vmem %s1, 48
    %v3150 = vld [vmem:[%s3149] sm:$0xff]
    %v3151 = vld [vmem:[%s3149 + $0x8] sm:$0xff]
    %v3153 = vsel %vm189, %v3150, 0
    %v3156 = vsel %vm189, %v3151, 0
    %3158 = vmatpush.msra.mxu0 0.0
    %3159 = vmatpush.msra.mxu0 0.0
    %3160 = vmatpush.msra.mxu0 0.0
    %3161 = vmatpush.msra.mxu0 0.0
    %3162 = vmatpush.msra.mxu0 0.0
    %3163 = vmatpush.msra.mxu0 0.0
    %3164 = vmatpush.msra.mxu0 0.0
    %3165 = vmatpush.msra.mxu0 0.0
    %v3166 = vand.u32 %v119, 4294901760
    %3167 = vmatpush.msra.mxu0 %v3166
    %v3168 = vand.u32 %v117, 4294901760
    %3169 = vmatpush.msra.mxu0 %v3168
    %v3170 = vand.u32 %v115, 4294901760
    %3171 = vmatpush.msra.mxu0 %v3170
    %v3172 = vand.u32 %v113, 4294901760
    %3173 = vmatpush.msra.mxu0 %v3172
    %v3174 = vand.u32 %v111, 4294901760
    %3175 = vmatpush.msra.mxu0 %v3174
    %v3176 = vand.u32 %v109, 4294901760
    %3177 = vmatpush.msra.mxu0 %v3176
    %v3178 = vand.u32 %v107, 4294901760
    %3179 = vmatpush.msra.mxu0 %v3178
    %v3180 = vand.u32 %v105, 4294901760
    %3181 = vmatpush.msra.mxu0 %v3180
    %v3182 = vand.u32 %v3153, 4294901760
    %v3183 = vsub.f32 %v3153, %v3182
    %v3184 = vand.u32 %v3183, 4294901760
    %v3185 = vsub.f32 %v3183, %v3184
    %v3186 = vand.u32 %v3185, 4294901760
    %3187 = vmatmul.f32.gmra.mxu0 %v3186
    %v3188 = vpop.f32.mrf.mxu0
    %v3189 = vadd.f32 0.0, %v3188
    %v3190 = vand.u32 %v3156, 4294901760
    %v3191 = vsub.f32 %v3156, %v3190
    %v3192 = vand.u32 %v3191, 4294901760
    %v3193 = vsub.f32 %v3191, %v3192
    %v3194 = vand.u32 %v3193, 4294901760
    %3195 = vmatmul.f32.gmra.mxu0 %v3194
    %v3196 = vpop.f32.mrf.mxu0
    %v3197 = vadd.f32 0.0, %v3196
    %3198 = vdwg.mxu0
    %3199 = vmatpush.msra.mxu0 0.0
    %3200 = vmatpush.msra.mxu0 0.0
    %3201 = vmatpush.msra.mxu0 0.0
    %3202 = vmatpush.msra.mxu0 0.0
    %3203 = vmatpush.msra.mxu0 0.0
    %3204 = vmatpush.msra.mxu0 0.0
    %3205 = vmatpush.msra.mxu0 0.0
    %3206 = vmatpush.msra.mxu0 0.0
    %v3207 = vand.u32 %v119, 4294901760
    %v3208 = vsub.f32 %v119, %v3207
    %v3209 = vand.u32 %v3208, 4294901760
    %v3210 = vsub.f32 %v3208, %v3209
    %v3211 = vand.u32 %v3210, 4294901760
    %3212 = vmatpush.msra.mxu0 %v3211
    %v3213 = vand.u32 %v117, 4294901760
    %v3214 = vsub.f32 %v117, %v3213
    %v3215 = vand.u32 %v3214, 4294901760
    %v3216 = vsub.f32 %v3214, %v3215
    %v3217 = vand.u32 %v3216, 4294901760
    %3218 = vmatpush.msra.mxu0 %v3217
    %v3219 = vand.u32 %v115, 4294901760
    %v3220 = vsub.f32 %v115, %v3219
    %v3221 = vand.u32 %v3220, 4294901760
    %v3222 = vsub.f32 %v3220, %v3221
    %v3223 = vand.u32 %v3222, 4294901760
    %3224 = vmatpush.msra.mxu0 %v3223
    %v3225 = vand.u32 %v113, 4294901760
    %v3226 = vsub.f32 %v113, %v3225
    %v3227 = vand.u32 %v3226, 4294901760
    %v3228 = vsub.f32 %v3226, %v3227
    %v3229 = vand.u32 %v3228, 4294901760
    %3230 = vmatpush.msra.mxu0 %v3229
    %v3231 = vand.u32 %v111, 4294901760
    %v3232 = vsub.f32 %v111, %v3231
    %v3233 = vand.u32 %v3232, 4294901760
    %v3234 = vsub.f32 %v3232, %v3233
    %v3235 = vand.u32 %v3234, 4294901760
    %3236 = vmatpush.msra.mxu0 %v3235
    %v3237 = vand.u32 %v109, 4294901760
    %v3238 = vsub.f32 %v109, %v3237
    %v3239 = vand.u32 %v3238, 4294901760
    %v3240 = vsub.f32 %v3238, %v3239
    %v3241 = vand.u32 %v3240, 4294901760
    %3242 = vmatpush.msra.mxu0 %v3241
    %v3243 = vand.u32 %v107, 4294901760
    %v3244 = vsub.f32 %v107, %v3243
    %v3245 = vand.u32 %v3244, 4294901760
    %v3246 = vsub.f32 %v3244, %v3245
    %v3247 = vand.u32 %v3246, 4294901760
    %3248 = vmatpush.msra.mxu0 %v3247
    %v3249 = vand.u32 %v105, 4294901760
    %v3250 = vsub.f32 %v105, %v3249
    %v3251 = vand.u32 %v3250, 4294901760
    %v3252 = vsub.f32 %v3250, %v3251
    %v3253 = vand.u32 %v3252, 4294901760
    %3254 = vmatpush.msra.mxu0 %v3253
    %v3255 = vand.u32 %v3153, 4294901760
    %3256 = vmatmul.f32.gmra.mxu0 %v3255
    %v3257 = vpop.f32.mrf.mxu0
    %v3258 = vadd.f32 %v3189, %v3257
    %v3259 = vand.u32 %v3156, 4294901760
    %3260 = vmatmul.f32.gmra.mxu0 %v3259
    %v3261 = vpop.f32.mrf.mxu0
    %v3262 = vadd.f32 %v3197, %v3261
    %3263 = vdwg.mxu0
    %3264 = vmatpush.msra.mxu0 0.0
    %3265 = vmatpush.msra.mxu0 0.0
    %3266 = vmatpush.msra.mxu0 0.0
    %3267 = vmatpush.msra.mxu0 0.0
    %3268 = vmatpush.msra.mxu0 0.0
    %3269 = vmatpush.msra.mxu0 0.0
    %3270 = vmatpush.msra.mxu0 0.0
    %3271 = vmatpush.msra.mxu0 0.0
    %v3272 = vand.u32 %v119, 4294901760
    %v3273 = vsub.f32 %v119, %v3272
    %3274 = vmatpush.msra.mxu0 %v3273
    %v3275 = vand.u32 %v117, 4294901760
    %v3276 = vsub.f32 %v117, %v3275
    %3277 = vmatpush.msra.mxu0 %v3276
    %v3278 = vand.u32 %v115, 4294901760
    %v3279 = vsub.f32 %v115, %v3278
    %3280 = vmatpush.msra.mxu0 %v3279
    %v3281 = vand.u32 %v113, 4294901760
    %v3282 = vsub.f32 %v113, %v3281
    %3283 = vmatpush.msra.mxu0 %v3282
    %v3284 = vand.u32 %v111, 4294901760
    %v3285 = vsub.f32 %v111, %v3284
    %3286 = vmatpush.msra.mxu0 %v3285
    %v3287 = vand.u32 %v109, 4294901760
    %v3288 = vsub.f32 %v109, %v3287
    %3289 = vmatpush.msra.mxu0 %v3288
    %v3290 = vand.u32 %v107, 4294901760
    %v3291 = vsub.f32 %v107, %v3290
    %3292 = vmatpush.msra.mxu0 %v3291
    %v3293 = vand.u32 %v105, 4294901760
    %v3294 = vsub.f32 %v105, %v3293
    %3295 = vmatpush.msra.mxu0 %v3294
    %v3296 = vand.u32 %v3153, 4294901760
    %v3297 = vsub.f32 %v3153, %v3296
    %3298 = vmatmul.f32.gmra.mxu0 %v3297
    %v3299 = vpop.f32.mrf.mxu0
    %v3300 = vadd.f32 %v3258, %v3299
    %v3301 = vand.u32 %v3156, 4294901760
    %v3302 = vsub.f32 %v3156, %v3301
    %3303 = vmatmul.f32.gmra.mxu0 %v3302
    %v3304 = vpop.f32.mrf.mxu0
    %v3305 = vadd.f32 %v3262, %v3304
    %3306 = vdwg.mxu0
    %3307 = vmatpush.msra.mxu0 0.0
    %3308 = vmatpush.msra.mxu0 0.0
    %3309 = vmatpush.msra.mxu0 0.0
    %3310 = vmatpush.msra.mxu0 0.0
    %3311 = vmatpush.msra.mxu0 0.0
    %3312 = vmatpush.msra.mxu0 0.0
    %3313 = vmatpush.msra.mxu0 0.0
    %3314 = vmatpush.msra.mxu0 0.0
    %v3315 = vand.u32 %v119, 4294901760
    %3316 = vmatpush.msra.mxu0 %v3315
    %v3317 = vand.u32 %v117, 4294901760
    %3318 = vmatpush.msra.mxu0 %v3317
    %v3319 = vand.u32 %v115, 4294901760
    %3320 = vmatpush.msra.mxu0 %v3319
    %v3321 = vand.u32 %v113, 4294901760
    %3322 = vmatpush.msra.mxu0 %v3321
    %v3323 = vand.u32 %v111, 4294901760
    %3324 = vmatpush.msra.mxu0 %v3323
    %v3325 = vand.u32 %v109, 4294901760
    %3326 = vmatpush.msra.mxu0 %v3325
    %v3327 = vand.u32 %v107, 4294901760
    %3328 = vmatpush.msra.mxu0 %v3327
    %v3329 = vand.u32 %v105, 4294901760
    %3330 = vmatpush.msra.mxu0 %v3329
    %v3331 = vand.u32 %v3153, 4294901760
    %v3332 = vsub.f32 %v3153, %v3331
    %v3333 = vand.u32 %v3332, 4294901760
    %3334 = vmatmul.f32.gmra.mxu0 %v3333
    %v3335 = vpop.f32.mrf.mxu0
    %v3336 = vadd.f32 %v3300, %v3335
    %v3337 = vand.u32 %v3156, 4294901760
    %v3338 = vsub.f32 %v3156, %v3337
    %v3339 = vand.u32 %v3338, 4294901760
    %3340 = vmatmul.f32.gmra.mxu0 %v3339
    %v3341 = vpop.f32.mrf.mxu0
    %v3342 = vadd.f32 %v3305, %v3341
    %3343 = vdwg.mxu0
    %3344 = vmatpush.msra.mxu0 0.0
    %3345 = vmatpush.msra.mxu0 0.0
    %3346 = vmatpush.msra.mxu0 0.0
    %3347 = vmatpush.msra.mxu0 0.0
    %3348 = vmatpush.msra.mxu0 0.0
    %3349 = vmatpush.msra.mxu0 0.0
    %3350 = vmatpush.msra.mxu0 0.0
    %3351 = vmatpush.msra.mxu0 0.0
    %v3352 = vand.u32 %v119, 4294901760
    %v3353 = vsub.f32 %v119, %v3352
    %v3354 = vand.u32 %v3353, 4294901760
    %3355 = vmatpush.msra.mxu0 %v3354
    %v3356 = vand.u32 %v117, 4294901760
    %v3357 = vsub.f32 %v117, %v3356
    %v3358 = vand.u32 %v3357, 4294901760
    %3359 = vmatpush.msra.mxu0 %v3358
    %v3360 = vand.u32 %v115, 4294901760
    %v3361 = vsub.f32 %v115, %v3360
    %v3362 = vand.u32 %v3361, 4294901760
    %3363 = vmatpush.msra.mxu0 %v3362
    %v3364 = vand.u32 %v113, 4294901760
    %v3365 = vsub.f32 %v113, %v3364
    %v3366 = vand.u32 %v3365, 4294901760
    %3367 = vmatpush.msra.mxu0 %v3366
    %v3368 = vand.u32 %v111, 4294901760
    %v3369 = vsub.f32 %v111, %v3368
    %v3370 = vand.u32 %v3369, 4294901760
    %3371 = vmatpush.msra.mxu0 %v3370
    %v3372 = vand.u32 %v109, 4294901760
    %v3373 = vsub.f32 %v109, %v3372
    %v3374 = vand.u32 %v3373, 4294901760
    %3375 = vmatpush.msra.mxu0 %v3374
    %v3376 = vand.u32 %v107, 4294901760
    %v3377 = vsub.f32 %v107, %v3376
    %v3378 = vand.u32 %v3377, 4294901760
    %3379 = vmatpush.msra.mxu0 %v3378
    %v3380 = vand.u32 %v105, 4294901760
    %v3381 = vsub.f32 %v105, %v3380
    %v3382 = vand.u32 %v3381, 4294901760
    %3383 = vmatpush.msra.mxu0 %v3382
    %v3384 = vand.u32 %v3153, 4294901760
    %3385 = vmatmul.f32.gmra.mxu0 %v3384
    %v3386 = vpop.f32.mrf.mxu0
    %v3387 = vadd.f32 %v3336, %v3386
    %v3388 = vand.u32 %v3156, 4294901760
    %3389 = vmatmul.f32.gmra.mxu0 %v3388
    %v3390 = vpop.f32.mrf.mxu0
    %v3391 = vadd.f32 %v3342, %v3390
    %3392 = vdwg.mxu0
    %3393 = vmatpush.msra.mxu0 0.0
    %3394 = vmatpush.msra.mxu0 0.0
    %3395 = vmatpush.msra.mxu0 0.0
    %3396 = vmatpush.msra.mxu0 0.0
    %3397 = vmatpush.msra.mxu0 0.0
    %3398 = vmatpush.msra.mxu0 0.0
    %3399 = vmatpush.msra.mxu0 0.0
    %3400 = vmatpush.msra.mxu0 0.0
    %v3401 = vand.u32 %v119, 4294901760
    %3402 = vmatpush.msra.mxu0 %v3401
    %v3403 = vand.u32 %v117, 4294901760
    %3404 = vmatpush.msra.mxu0 %v3403
    %v3405 = vand.u32 %v115, 4294901760
    %3406 = vmatpush.msra.mxu0 %v3405
    %v3407 = vand.u32 %v113, 4294901760
    %3408 = vmatpush.msra.mxu0 %v3407
    %v3409 = vand.u32 %v111, 4294901760
    %3410 = vmatpush.msra.mxu0 %v3409
    %v3411 = vand.u32 %v109, 4294901760
    %3412 = vmatpush.msra.mxu0 %v3411
    %v3413 = vand.u32 %v107, 4294901760
    %3414 = vmatpush.msra.mxu0 %v3413
    %v3415 = vand.u32 %v105, 4294901760
    %3416 = vmatpush.msra.mxu0 %v3415
    %v3417 = vand.u32 %v3153, 4294901760
    %3418 = vmatmul.f32.gmra.mxu0 %v3417
    %v3419 = vpop.f32.mrf.mxu0
    %v3420 = vadd.f32 %v3387, %v3419
    %v3421 = vand.u32 %v3156, 4294901760
    %3422 = vmatmul.f32.gmra.mxu0 %v3421
    %v3423 = vpop.f32.mrf.mxu0
    %v3424 = vadd.f32 %v3391, %v3423
    %3425 = vdwg.mxu0
    %3426 = vmatpush.msra.mxu0 0.0
    %3427 = vmatpush.msra.mxu0 0.0
    %3428 = vmatpush.msra.mxu0 0.0
    %3429 = vmatpush.msra.mxu0 0.0
    %3430 = vmatpush.msra.mxu0 0.0
    %3431 = vmatpush.msra.mxu0 0.0
    %3432 = vmatpush.msra.mxu0 0.0
    %3433 = vmatpush.msra.mxu0 0.0
    %v3434 = vand.u32 %v120, 4294901760
    %3435 = vmatpush.msra.mxu0 %v3434
    %v3436 = vand.u32 %v118, 4294901760
    %3437 = vmatpush.msra.mxu0 %v3436
    %v3438 = vand.u32 %v116, 4294901760
    %3439 = vmatpush.msra.mxu0 %v3438
    %v3440 = vand.u32 %v114, 4294901760
    %3441 = vmatpush.msra.mxu0 %v3440
    %v3442 = vand.u32 %v112, 4294901760
    %3443 = vmatpush.msra.mxu0 %v3442
    %v3444 = vand.u32 %v110, 4294901760
    %3445 = vmatpush.msra.mxu0 %v3444
    %v3446 = vand.u32 %v108, 4294901760
    %3447 = vmatpush.msra.mxu0 %v3446
    %v3448 = vand.u32 %v106, 4294901760
    %3449 = vmatpush.msra.mxu0 %v3448
    %v3450 = vand.u32 %v3153, 4294901760
    %v3451 = vsub.f32 %v3153, %v3450
    %v3452 = vand.u32 %v3451, 4294901760
    %v3453 = vsub.f32 %v3451, %v3452
    %v3454 = vand.u32 %v3453, 4294901760
    %3455 = vmatmul.f32.gmra.mxu0 %v3454
    %v3456 = vpop.f32.mrf.mxu0
    %v3457 = vadd.f32 0.0, %v3456
    %v3458 = vand.u32 %v3156, 4294901760
    %v3459 = vsub.f32 %v3156, %v3458
    %v3460 = vand.u32 %v3459, 4294901760
    %v3461 = vsub.f32 %v3459, %v3460
    %v3462 = vand.u32 %v3461, 4294901760
    %3463 = vmatmul.f32.gmra.mxu0 %v3462
    %v3464 = vpop.f32.mrf.mxu0
    %v3465 = vadd.f32 0.0, %v3464
    %3466 = vdwg.mxu0
    %3467 = vmatpush.msra.mxu0 0.0
    %3468 = vmatpush.msra.mxu0 0.0
    %3469 = vmatpush.msra.mxu0 0.0
    %3470 = vmatpush.msra.mxu0 0.0
    %3471 = vmatpush.msra.mxu0 0.0
    %3472 = vmatpush.msra.mxu0 0.0
    %3473 = vmatpush.msra.mxu0 0.0
    %3474 = vmatpush.msra.mxu0 0.0
    %v3475 = vand.u32 %v120, 4294901760
    %v3476 = vsub.f32 %v120, %v3475
    %v3477 = vand.u32 %v3476, 4294901760
    %v3478 = vsub.f32 %v3476, %v3477
    %v3479 = vand.u32 %v3478, 4294901760
    %3480 = vmatpush.msra.mxu0 %v3479
    %v3481 = vand.u32 %v118, 4294901760
    %v3482 = vsub.f32 %v118, %v3481
    %v3483 = vand.u32 %v3482, 4294901760
    %v3484 = vsub.f32 %v3482, %v3483
    %v3485 = vand.u32 %v3484, 4294901760
    %3486 = vmatpush.msra.mxu0 %v3485
    %v3487 = vand.u32 %v116, 4294901760
    %v3488 = vsub.f32 %v116, %v3487
    %v3489 = vand.u32 %v3488, 4294901760
    %v3490 = vsub.f32 %v3488, %v3489
    %v3491 = vand.u32 %v3490, 4294901760
    %3492 = vmatpush.msra.mxu0 %v3491
    %v3493 = vand.u32 %v114, 4294901760
    %v3494 = vsub.f32 %v114, %v3493
    %v3495 = vand.u32 %v3494, 4294901760
    %v3496 = vsub.f32 %v3494, %v3495
    %v3497 = vand.u32 %v3496, 4294901760
    %3498 = vmatpush.msra.mxu0 %v3497
    %v3499 = vand.u32 %v112, 4294901760
    %v3500 = vsub.f32 %v112, %v3499
    %v3501 = vand.u32 %v3500, 4294901760
    %v3502 = vsub.f32 %v3500, %v3501
    %v3503 = vand.u32 %v3502, 4294901760
    %3504 = vmatpush.msra.mxu0 %v3503
    %v3505 = vand.u32 %v110, 4294901760
    %v3506 = vsub.f32 %v110, %v3505
    %v3507 = vand.u32 %v3506, 4294901760
    %v3508 = vsub.f32 %v3506, %v3507
    %v3509 = vand.u32 %v3508, 4294901760
    %3510 = vmatpush.msra.mxu0 %v3509
    %v3511 = vand.u32 %v108, 4294901760
    %v3512 = vsub.f32 %v108, %v3511
    %v3513 = vand.u32 %v3512, 4294901760
    %v3514 = vsub.f32 %v3512, %v3513
    %v3515 = vand.u32 %v3514, 4294901760
    %3516 = vmatpush.msra.mxu0 %v3515
    %v3517 = vand.u32 %v106, 4294901760
    %v3518 = vsub.f32 %v106, %v3517
    %v3519 = vand.u32 %v3518, 4294901760
    %v3520 = vsub.f32 %v3518, %v3519
    %v3521 = vand.u32 %v3520, 4294901760
    %3522 = vmatpush.msra.mxu0 %v3521
    %v3523 = vand.u32 %v3153, 4294901760
    %3524 = vmatmul.f32.gmra.mxu0 %v3523
    %v3525 = vpop.f32.mrf.mxu0
    %v3526 = vadd.f32 %v3457, %v3525
    %v3527 = vand.u32 %v3156, 4294901760
    %3528 = vmatmul.f32.gmra.mxu0 %v3527
    %v3529 = vpop.f32.mrf.mxu0
    %v3530 = vadd.f32 %v3465, %v3529
    %3531 = vdwg.mxu0
    %3532 = vmatpush.msra.mxu0 0.0
    %3533 = vmatpush.msra.mxu0 0.0
    %3534 = vmatpush.msra.mxu0 0.0
    %3535 = vmatpush.msra.mxu0 0.0
    %3536 = vmatpush.msra.mxu0 0.0
    %3537 = vmatpush.msra.mxu0 0.0
    %3538 = vmatpush.msra.mxu0 0.0
    %3539 = vmatpush.msra.mxu0 0.0
    %v3540 = vand.u32 %v120, 4294901760
    %v3541 = vsub.f32 %v120, %v3540
    %3542 = vmatpush.msra.mxu0 %v3541
    %v3543 = vand.u32 %v118, 4294901760
    %v3544 = vsub.f32 %v118, %v3543
    %3545 = vmatpush.msra.mxu0 %v3544
    %v3546 = vand.u32 %v116, 4294901760
    %v3547 = vsub.f32 %v116, %v3546
    %3548 = vmatpush.msra.mxu0 %v3547
    %v3549 = vand.u32 %v114, 4294901760
    %v3550 = vsub.f32 %v114, %v3549
    %3551 = vmatpush.msra.mxu0 %v3550
    %v3552 = vand.u32 %v112, 4294901760
    %v3553 = vsub.f32 %v112, %v3552
    %3554 = vmatpush.msra.mxu0 %v3553
    %v3555 = vand.u32 %v110, 4294901760
    %v3556 = vsub.f32 %v110, %v3555
    %3557 = vmatpush.msra.mxu0 %v3556
    %v3558 = vand.u32 %v108, 4294901760
    %v3559 = vsub.f32 %v108, %v3558
    %3560 = vmatpush.msra.mxu0 %v3559
    %v3561 = vand.u32 %v106, 4294901760
    %v3562 = vsub.f32 %v106, %v3561
    %3563 = vmatpush.msra.mxu0 %v3562
    %v3564 = vand.u32 %v3153, 4294901760
    %v3565 = vsub.f32 %v3153, %v3564
    %3566 = vmatmul.f32.gmra.mxu0 %v3565
    %v3567 = vpop.f32.mrf.mxu0
    %v3568 = vadd.f32 %v3526, %v3567
    %v3569 = vand.u32 %v3156, 4294901760
    %v3570 = vsub.f32 %v3156, %v3569
    %3571 = vmatmul.f32.gmra.mxu0 %v3570
    %v3572 = vpop.f32.mrf.mxu0
    %v3573 = vadd.f32 %v3530, %v3572
    %3574 = vdwg.mxu0
    %3575 = vmatpush.msra.mxu0 0.0
    %3576 = vmatpush.msra.mxu0 0.0
    %3577 = vmatpush.msra.mxu0 0.0
    %3578 = vmatpush.msra.mxu0 0.0
    %3579 = vmatpush.msra.mxu0 0.0
    %3580 = vmatpush.msra.mxu0 0.0
    %3581 = vmatpush.msra.mxu0 0.0
    %3582 = vmatpush.msra.mxu0 0.0
    %v3583 = vand.u32 %v120, 4294901760
    %3584 = vmatpush.msra.mxu0 %v3583
    %v3585 = vand.u32 %v118, 4294901760
    %3586 = vmatpush.msra.mxu0 %v3585
    %v3587 = vand.u32 %v116, 4294901760
    %3588 = vmatpush.msra.mxu0 %v3587
    %v3589 = vand.u32 %v114, 4294901760
    %3590 = vmatpush.msra.mxu0 %v3589
    %v3591 = vand.u32 %v112, 4294901760
    %3592 = vmatpush.msra.mxu0 %v3591
    %v3593 = vand.u32 %v110, 4294901760
    %3594 = vmatpush.msra.mxu0 %v3593
    %v3595 = vand.u32 %v108, 4294901760
    %3596 = vmatpush.msra.mxu0 %v3595
    %v3597 = vand.u32 %v106, 4294901760
    %3598 = vmatpush.msra.mxu0 %v3597
    %v3599 = vand.u32 %v3153, 4294901760
    %v3600 = vsub.f32 %v3153, %v3599
    %v3601 = vand.u32 %v3600, 4294901760
    %3602 = vmatmul.f32.gmra.mxu0 %v3601
    %v3603 = vpop.f32.mrf.mxu0
    %v3604 = vadd.f32 %v3568, %v3603
    %v3605 = vand.u32 %v3156, 4294901760
    %v3606 = vsub.f32 %v3156, %v3605
    %v3607 = vand.u32 %v3606, 4294901760
    %3608 = vmatmul.f32.gmra.mxu0 %v3607
    %v3609 = vpop.f32.mrf.mxu0
    %v3610 = vadd.f32 %v3573, %v3609
    %3611 = vdwg.mxu0
    %3612 = vmatpush.msra.mxu0 0.0
    %3613 = vmatpush.msra.mxu0 0.0
    %3614 = vmatpush.msra.mxu0 0.0
    %3615 = vmatpush.msra.mxu0 0.0
    %3616 = vmatpush.msra.mxu0 0.0
    %3617 = vmatpush.msra.mxu0 0.0
    %3618 = vmatpush.msra.mxu0 0.0
    %3619 = vmatpush.msra.mxu0 0.0
    %v3620 = vand.u32 %v120, 4294901760
    %v3621 = vsub.f32 %v120, %v3620
    %v3622 = vand.u32 %v3621, 4294901760
    %3623 = vmatpush.msra.mxu0 %v3622
    %v3624 = vand.u32 %v118, 4294901760
    %v3625 = vsub.f32 %v118, %v3624
    %v3626 = vand.u32 %v3625, 4294901760
    %3627 = vmatpush.msra.mxu0 %v3626
    %v3628 = vand.u32 %v116, 4294901760
    %v3629 = vsub.f32 %v116, %v3628
    %v3630 = vand.u32 %v3629, 4294901760
    %3631 = vmatpush.msra.mxu0 %v3630
    %v3632 = vand.u32 %v114, 4294901760
    %v3633 = vsub.f32 %v114, %v3632
    %v3634 = vand.u32 %v3633, 4294901760
    %3635 = vmatpush.msra.mxu0 %v3634
    %v3636 = vand.u32 %v112, 4294901760
    %v3637 = vsub.f32 %v112, %v3636
    %v3638 = vand.u32 %v3637, 4294901760
    %3639 = vmatpush.msra.mxu0 %v3638
    %v3640 = vand.u32 %v110, 4294901760
    %v3641 = vsub.f32 %v110, %v3640
    %v3642 = vand.u32 %v3641, 4294901760
    %3643 = vmatpush.msra.mxu0 %v3642
    %v3644 = vand.u32 %v108, 4294901760
    %v3645 = vsub.f32 %v108, %v3644
    %v3646 = vand.u32 %v3645, 4294901760
    %3647 = vmatpush.msra.mxu0 %v3646
    %v3648 = vand.u32 %v106, 4294901760
    %v3649 = vsub.f32 %v106, %v3648
    %v3650 = vand.u32 %v3649, 4294901760
    %3651 = vmatpush.msra.mxu0 %v3650
    %v3652 = vand.u32 %v3153, 4294901760
    %3653 = vmatmul.f32.gmra.mxu0 %v3652
    %v3654 = vpop.f32.mrf.mxu0
    %v3655 = vadd.f32 %v3604, %v3654
    %v3656 = vand.u32 %v3156, 4294901760
    %3657 = vmatmul.f32.gmra.mxu0 %v3656
    %v3658 = vpop.f32.mrf.mxu0
    %v3659 = vadd.f32 %v3610, %v3658
    %3660 = vdwg.mxu0
    %3661 = vmatpush.msra.mxu0 0.0
    %3662 = vmatpush.msra.mxu0 0.0
    %3663 = vmatpush.msra.mxu0 0.0
    %3664 = vmatpush.msra.mxu0 0.0
    %3665 = vmatpush.msra.mxu0 0.0
    %3666 = vmatpush.msra.mxu0 0.0
    %3667 = vmatpush.msra.mxu0 0.0
    %3668 = vmatpush.msra.mxu0 0.0
    %v3669 = vand.u32 %v120, 4294901760
    %3670 = vmatpush.msra.mxu0 %v3669
    %v3671 = vand.u32 %v118, 4294901760
    %3672 = vmatpush.msra.mxu0 %v3671
    %v3673 = vand.u32 %v116, 4294901760
    %3674 = vmatpush.msra.mxu0 %v3673
    %v3675 = vand.u32 %v114, 4294901760
    %3676 = vmatpush.msra.mxu0 %v3675
    %v3677 = vand.u32 %v112, 4294901760
    %3678 = vmatpush.msra.mxu0 %v3677
    %v3679 = vand.u32 %v110, 4294901760
    %3680 = vmatpush.msra.mxu0 %v3679
    %v3681 = vand.u32 %v108, 4294901760
    %3682 = vmatpush.msra.mxu0 %v3681
    %v3683 = vand.u32 %v106, 4294901760
    %3684 = vmatpush.msra.mxu0 %v3683
    %v3685 = vand.u32 %v3153, 4294901760
    %3686 = vmatmul.f32.gmra.mxu0 %v3685
    %v3687 = vpop.f32.mrf.mxu0
    %v3688 = vadd.f32 %v3655, %v3687
    %v3689 = vand.u32 %v3156, 4294901760
    %3690 = vmatmul.f32.gmra.mxu0 %v3689
    %v3691 = vpop.f32.mrf.mxu0
    %v3692 = vadd.f32 %v3659, %v3691
    %3693 = vdwg.mxu0
    %3694 = vmatpush.msra.mxu0 0.0
    %3695 = vmatpush.msra.mxu0 0.0
    %3696 = vmatpush.msra.mxu0 0.0
    %3697 = vmatpush.msra.mxu0 0.0
    %3698 = vmatpush.msra.mxu0 0.0
    %3699 = vmatpush.msra.mxu0 0.0
    %3700 = vmatpush.msra.mxu0 0.0
    %3701 = vmatpush.msra.mxu0 0.0
    %3702 = vmatpush.msra.mxu0 0.0
    %3703 = vmatpush.msra.mxu0 0.0
    %3704 = vmatpush.msra.mxu0 0.0
    %3705 = vmatpush.msra.mxu0 0.0
    %3706 = vmatpush.msra.mxu0 0.0
    %3707 = vmatpush.msra.mxu0 0.0
    %3708 = vmatpush.msra.mxu0 %v3424
    %3709 = vmatpush.msra.mxu0 %v3420
    %3710 = vmatmul.f32.gmra.mxu0 %v814
    %v3711 = vpop.f32.mrf.mxu0
    %v3712 = vadd.f32 %v735, %v3711
    %3713 = vmatmul.f32.gmra.mxu0 %v817
    %v3714 = vpop.f32.mrf.mxu0
    %v3715 = vadd.f32 %v740, %v3714
    %3716 = vmatmul.f32.gmra.mxu0 %v820
    %v3717 = vpop.f32.mrf.mxu0
    %v3718 = vadd.f32 %v745, %v3717
    %3719 = vmatmul.f32.gmra.mxu0 %v823
    %v3720 = vpop.f32.mrf.mxu0
    %v3721 = vadd.f32 %v750, %v3720
    %3722 = vmatmul.f32.gmra.mxu0 %v826
    %v3723 = vpop.f32.mrf.mxu0
    %v3724 = vadd.f32 %v755, %v3723
    %3725 = vmatmul.f32.gmra.mxu0 %v829
    %v3726 = vpop.f32.mrf.mxu0
    %v3727 = vadd.f32 %v760, %v3726
    %3728 = vmatmul.f32.gmra.mxu0 %v832
    %v3729 = vpop.f32.mrf.mxu0
    %v3730 = vadd.f32 %v765, %v3729
    %3731 = vmatmul.f32.gmra.mxu0 %v835
    %v3732 = vpop.f32.mrf.mxu0
    %v3733 = vadd.f32 %v770, %v3732
    %3734 = vmatmul.f32.gmra.mxu0 %v838
    %v3735 = vpop.f32.mrf.mxu0
    %v3736 = vadd.f32 %v775, %v3735
    %3737 = vmatmul.f32.gmra.mxu0 %v841
    %v3738 = vpop.f32.mrf.mxu0
    %v3739 = vadd.f32 %v780, %v3738
    %3740 = vmatmul.f32.gmra.mxu0 %v844
    %v3741 = vpop.f32.mrf.mxu0
    %v3742 = vadd.f32 %v785, %v3741
    %3743 = vmatmul.f32.gmra.mxu0 %v847
    %v3744 = vpop.f32.mrf.mxu0
    %v3745 = vadd.f32 %v790, %v3744
    %3746 = vmatmul.f32.gmra.mxu0 %v850
    %v3747 = vpop.f32.mrf.mxu0
    %v3748 = vadd.f32 %v795, %v3747
    %3749 = vmatmul.f32.gmra.mxu0 %v853
    %v3750 = vpop.f32.mrf.mxu0
    %v3751 = vadd.f32 %v800, %v3750
    %3752 = vmatmul.f32.gmra.mxu0 %v856
    %v3753 = vpop.f32.mrf.mxu0
    %v3754 = vadd.f32 %v805, %v3753
    %3755 = vmatmul.f32.gmra.mxu0 %v859
    %v3756 = vpop.f32.mrf.mxu0
    %v3757 = vadd.f32 %v810, %v3756
    %3758 = vdwg.mxu0
    %3759 = vmatpush.msra.mxu0 0.0
    %3760 = vmatpush.msra.mxu0 0.0
    %3761 = vmatpush.msra.mxu0 0.0
    %3762 = vmatpush.msra.mxu0 0.0
    %3763 = vmatpush.msra.mxu0 0.0
    %3764 = vmatpush.msra.mxu0 0.0
    %3765 = vmatpush.msra.mxu0 0.0
    %3766 = vmatpush.msra.mxu0 0.0
    %3767 = vmatpush.msra.mxu0 0.0
    %3768 = vmatpush.msra.mxu0 0.0
    %3769 = vmatpush.msra.mxu0 0.0
    %3770 = vmatpush.msra.mxu0 0.0
    %3771 = vmatpush.msra.mxu0 0.0
    %3772 = vmatpush.msra.mxu0 0.0
    %3773 = vmatpush.msra.mxu0 %v3692
    %3774 = vmatpush.msra.mxu0 %v3688
    %3775 = vmatmul.f32.gmra.mxu0 %v814
    %v3776 = vpop.f32.mrf.mxu0
    %v3777 = vadd.f32 %v735, %v3776
    %3778 = vmatmul.f32.gmra.mxu0 %v817
    %v3779 = vpop.f32.mrf.mxu0
    %v3780 = vadd.f32 %v740, %v3779
    %3781 = vmatmul.f32.gmra.mxu0 %v820
    %v3782 = vpop.f32.mrf.mxu0
    %v3783 = vadd.f32 %v745, %v3782
    %3784 = vmatmul.f32.gmra.mxu0 %v823
    %v3785 = vpop.f32.mrf.mxu0
    %v3786 = vadd.f32 %v750, %v3785
    %3787 = vmatmul.f32.gmra.mxu0 %v826
    %v3788 = vpop.f32.mrf.mxu0
    %v3789 = vadd.f32 %v755, %v3788
    %3790 = vmatmul.f32.gmra.mxu0 %v829
    %v3791 = vpop.f32.mrf.mxu0
    %v3792 = vadd.f32 %v760, %v3791
    %3793 = vmatmul.f32.gmra.mxu0 %v832
    %v3794 = vpop.f32.mrf.mxu0
    %v3795 = vadd.f32 %v765, %v3794
    %3796 = vmatmul.f32.gmra.mxu0 %v835
    %v3797 = vpop.f32.mrf.mxu0
    %v3798 = vadd.f32 %v770, %v3797
    %3799 = vmatmul.f32.gmra.mxu0 %v838
    %v3800 = vpop.f32.mrf.mxu0
    %v3801 = vadd.f32 %v775, %v3800
    %3802 = vmatmul.f32.gmra.mxu0 %v841
    %v3803 = vpop.f32.mrf.mxu0
    %v3804 = vadd.f32 %v780, %v3803
    %3805 = vmatmul.f32.gmra.mxu0 %v844
    %v3806 = vpop.f32.mrf.mxu0
    %v3807 = vadd.f32 %v785, %v3806
    %3808 = vmatmul.f32.gmra.mxu0 %v847
    %v3809 = vpop.f32.mrf.mxu0
    %v3810 = vadd.f32 %v790, %v3809
    %3811 = vmatmul.f32.gmra.mxu0 %v850
    %v3812 = vpop.f32.mrf.mxu0
    %v3813 = vadd.f32 %v795, %v3812
    %3814 = vmatmul.f32.gmra.mxu0 %v853
    %v3815 = vpop.f32.mrf.mxu0
    %v3816 = vadd.f32 %v800, %v3815
    %3817 = vmatmul.f32.gmra.mxu0 %v856
    %v3818 = vpop.f32.mrf.mxu0
    %v3819 = vadd.f32 %v805, %v3818
    %3820 = vmatmul.f32.gmra.mxu0 %v859
    %v3821 = vpop.f32.mrf.mxu0
    %v3822 = vadd.f32 %v810, %v3821
    %3823 = vdwg.mxu0
    %v3824 = vmax.f32 %v3712, 0.0
    %v3825 = vmax.f32 %v3777, 0.0
    %v3826 = vmax.f32 %v3715, 0.0
    %v3827 = vmax.f32 %v3780, 0.0
    %v3828 = vmax.f32 %v3718, 0.0
    %v3829 = vmax.f32 %v3783, 0.0
    %v3830 = vmax.f32 %v3721, 0.0
    %v3831 = vmax.f32 %v3786, 0.0
    %v3832 = vmax.f32 %v3724, 0.0
    %v3833 = vmax.f32 %v3789, 0.0
    %v3834 = vmax.f32 %v3727, 0.0
    %v3835 = vmax.f32 %v3792, 0.0
    %v3836 = vmax.f32 %v3730, 0.0
    %v3837 = vmax.f32 %v3795, 0.0
    %v3838 = vmax.f32 %v3733, 0.0
    %v3839 = vmax.f32 %v3798, 0.0
    %v3840 = vmax.f32 %v3736, 0.0
    %v3841 = vmax.f32 %v3801, 0.0
    %v3842 = vmax.f32 %v3739, 0.0
    %v3843 = vmax.f32 %v3804, 0.0
    %v3844 = vmax.f32 %v3742, 0.0
    %v3845 = vmax.f32 %v3807, 0.0
    %v3846 = vmax.f32 %v3745, 0.0
    %v3847 = vmax.f32 %v3810, 0.0
    %v3848 = vmax.f32 %v3748, 0.0
    %v3849 = vmax.f32 %v3813, 0.0
    %v3850 = vmax.f32 %v3751, 0.0
    %v3851 = vmax.f32 %v3816, 0.0
    %v3852 = vmax.f32 %v3754, 0.0
    %v3853 = vmax.f32 %v3819, 0.0
    %v3854 = vmax.f32 %v3757, 0.0
    %v3855 = vmax.f32 %v3822, 0.0
    %3856 = vmatpush.msra.mxu0 %v3854
    %3857 = vmatpush.msra.mxu0 %v3852
    %3858 = vmatpush.msra.mxu0 %v3850
    %3859 = vmatpush.msra.mxu0 %v3848
    %3860 = vmatpush.msra.mxu0 %v3846
    %3861 = vmatpush.msra.mxu0 %v3844
    %3862 = vmatpush.msra.mxu0 %v3842
    %3863 = vmatpush.msra.mxu0 %v3840
    %3864 = vmatpush.msra.mxu0 %v3838
    %3865 = vmatpush.msra.mxu0 %v3836
    %3866 = vmatpush.msra.mxu0 %v3834
    %3867 = vmatpush.msra.mxu0 %v3832
    %3868 = vmatpush.msra.mxu0 %v3830
    %3869 = vmatpush.msra.mxu0 %v3828
    %3870 = vmatpush.msra.mxu0 %v3826
    %3871 = vmatpush.msra.mxu0 %v3824
    %3872 = vmatmul.f32.gmra.mxu0 %v153
    %v3873 = vpop.f32.mrf.mxu0
    %v3874 = vadd.f32 %v1026, %v3873
    %3875 = vmatmul.f32.gmra.mxu0 %v154
    %v3876 = vpop.f32.mrf.mxu0
    %v3877 = vadd.f32 %v1031, %v3876
    %3878 = vmatmul.f32.gmra.mxu0 %v155
    %v3879 = vpop.f32.mrf.mxu0
    %v3880 = vadd.f32 %v1036, %v3879
    %3881 = vmatmul.f32.gmra.mxu0 %v156
    %v3882 = vpop.f32.mrf.mxu0
    %v3883 = vadd.f32 %v1041, %v3882
    %3884 = vmatmul.f32.gmra.mxu0 %v157
    %v3885 = vpop.f32.mrf.mxu0
    %v3886 = vadd.f32 %v1046, %v3885
    %3887 = vmatmul.f32.gmra.mxu0 %v158
    %v3888 = vpop.f32.mrf.mxu0
    %v3889 = vadd.f32 %v1051, %v3888
    %3890 = vmatmul.f32.gmra.mxu0 %v159
    %v3891 = vpop.f32.mrf.mxu0
    %v3892 = vadd.f32 %v1056, %v3891
    %3893 = vmatmul.f32.gmra.mxu0 %v160
    %v3894 = vpop.f32.mrf.mxu0
    %v3895 = vadd.f32 %v1061, %v3894
    %3896 = vmatmul.f32.gmra.mxu0 %v161
    %v3897 = vpop.f32.mrf.mxu0
    %v3898 = vadd.f32 %v1066, %v3897
    %3899 = vmatmul.f32.gmra.mxu0 %v162
    %v3900 = vpop.f32.mrf.mxu0
    %v3901 = vadd.f32 %v1071, %v3900
    %3902 = vmatmul.f32.gmra.mxu0 %v163
    %v3903 = vpop.f32.mrf.mxu0
    %v3904 = vadd.f32 %v1076, %v3903
    %3905 = vmatmul.f32.gmra.mxu0 %v164
    %v3906 = vpop.f32.mrf.mxu0
    %v3907 = vadd.f32 %v1081, %v3906
    %3908 = vmatmul.f32.gmra.mxu0 %v165
    %v3909 = vpop.f32.mrf.mxu0
    %v3910 = vadd.f32 %v1086, %v3909
    %3911 = vmatmul.f32.gmra.mxu0 %v166
    %v3912 = vpop.f32.mrf.mxu0
    %v3913 = vadd.f32 %v1091, %v3912
    %3914 = vmatmul.f32.gmra.mxu0 %v167
    %v3915 = vpop.f32.mrf.mxu0
    %v3916 = vadd.f32 %v1096, %v3915
    %3917 = vmatmul.f32.gmra.mxu0 %v168
    %v3918 = vpop.f32.mrf.mxu0
    %v3919 = vadd.f32 %v1101, %v3918
    %3920 = vdwg.mxu0
    %3921 = vmatpush.msra.mxu0 %v3855
    %3922 = vmatpush.msra.mxu0 %v3853
    %3923 = vmatpush.msra.mxu0 %v3851
    %3924 = vmatpush.msra.mxu0 %v3849
    %3925 = vmatpush.msra.mxu0 %v3847
    %3926 = vmatpush.msra.mxu0 %v3845
    %3927 = vmatpush.msra.mxu0 %v3843
    %3928 = vmatpush.msra.mxu0 %v3841
    %3929 = vmatpush.msra.mxu0 %v3839
    %3930 = vmatpush.msra.mxu0 %v3837
    %3931 = vmatpush.msra.mxu0 %v3835
    %3932 = vmatpush.msra.mxu0 %v3833
    %3933 = vmatpush.msra.mxu0 %v3831
    %3934 = vmatpush.msra.mxu0 %v3829
    %3935 = vmatpush.msra.mxu0 %v3827
    %3936 = vmatpush.msra.mxu0 %v3825
    %3937 = vmatmul.f32.gmra.mxu0 %v153
    %v3938 = vpop.f32.mrf.mxu0
    %v3939 = vadd.f32 %v1026, %v3938
    %3940 = vmatmul.f32.gmra.mxu0 %v154
    %v3941 = vpop.f32.mrf.mxu0
    %v3942 = vadd.f32 %v1031, %v3941
    %3943 = vmatmul.f32.gmra.mxu0 %v155
    %v3944 = vpop.f32.mrf.mxu0
    %v3945 = vadd.f32 %v1036, %v3944
    %3946 = vmatmul.f32.gmra.mxu0 %v156
    %v3947 = vpop.f32.mrf.mxu0
    %v3948 = vadd.f32 %v1041, %v3947
    %3949 = vmatmul.f32.gmra.mxu0 %v157
    %v3950 = vpop.f32.mrf.mxu0
    %v3951 = vadd.f32 %v1046, %v3950
    %3952 = vmatmul.f32.gmra.mxu0 %v158
    %v3953 = vpop.f32.mrf.mxu0
    %v3954 = vadd.f32 %v1051, %v3953
    %3955 = vmatmul.f32.gmra.mxu0 %v159
    %v3956 = vpop.f32.mrf.mxu0
    %v3957 = vadd.f32 %v1056, %v3956
    %3958 = vmatmul.f32.gmra.mxu0 %v160
    %v3959 = vpop.f32.mrf.mxu0
    %v3960 = vadd.f32 %v1061, %v3959
    %3961 = vmatmul.f32.gmra.mxu0 %v161
    %v3962 = vpop.f32.mrf.mxu0
    %v3963 = vadd.f32 %v1066, %v3962
    %3964 = vmatmul.f32.gmra.mxu0 %v162
    %v3965 = vpop.f32.mrf.mxu0
    %v3966 = vadd.f32 %v1071, %v3965
    %3967 = vmatmul.f32.gmra.mxu0 %v163
    %v3968 = vpop.f32.mrf.mxu0
    %v3969 = vadd.f32 %v1076, %v3968
    %3970 = vmatmul.f32.gmra.mxu0 %v164
    %v3971 = vpop.f32.mrf.mxu0
    %v3972 = vadd.f32 %v1081, %v3971
    %3973 = vmatmul.f32.gmra.mxu0 %v165
    %v3974 = vpop.f32.mrf.mxu0
    %v3975 = vadd.f32 %v1086, %v3974
    %3976 = vmatmul.f32.gmra.mxu0 %v166
    %v3977 = vpop.f32.mrf.mxu0
    %v3978 = vadd.f32 %v1091, %v3977
    %3979 = vmatmul.f32.gmra.mxu0 %v167
    %v3980 = vpop.f32.mrf.mxu0
    %v3981 = vadd.f32 %v1096, %v3980
    %3982 = vmatmul.f32.gmra.mxu0 %v168
    %v3983 = vpop.f32.mrf.mxu0
    %v3984 = vadd.f32 %v1101, %v3983
    %3985 = vdwg.mxu0
    %v3986 = vmax.f32 %v3874, 0.0
    %v3987 = vmax.f32 %v3939, 0.0
    %v3988 = vmax.f32 %v3877, 0.0
    %v3989 = vmax.f32 %v3942, 0.0
    %v3990 = vmax.f32 %v3880, 0.0
    %v3991 = vmax.f32 %v3945, 0.0
    %v3992 = vmax.f32 %v3883, 0.0
    %v3993 = vmax.f32 %v3948, 0.0
    %v3994 = vmax.f32 %v3886, 0.0
    %v3995 = vmax.f32 %v3951, 0.0
    %v3996 = vmax.f32 %v3889, 0.0
    %v3997 = vmax.f32 %v3954, 0.0
    %v3998 = vmax.f32 %v3892, 0.0
    %v3999 = vmax.f32 %v3957, 0.0
    %v4000 = vmax.f32 %v3895, 0.0
    %v4001 = vmax.f32 %v3960, 0.0
    %v4002 = vmax.f32 %v3898, 0.0
    %v4003 = vmax.f32 %v3963, 0.0
    %v4004 = vmax.f32 %v3901, 0.0
    %v4005 = vmax.f32 %v3966, 0.0
    %v4006 = vmax.f32 %v3904, 0.0
    %v4007 = vmax.f32 %v3969, 0.0
    %v4008 = vmax.f32 %v3907, 0.0
    %v4009 = vmax.f32 %v3972, 0.0
    %v4010 = vmax.f32 %v3910, 0.0
    %v4011 = vmax.f32 %v3975, 0.0
    %v4012 = vmax.f32 %v3913, 0.0
    %v4013 = vmax.f32 %v3978, 0.0
    %v4014 = vmax.f32 %v3916, 0.0
    %v4015 = vmax.f32 %v3981, 0.0
    %v4016 = vmax.f32 %v3919, 0.0
    %v4017 = vmax.f32 %v3984, 0.0
    %4018 = vmatpush.msra.mxu0 %v4016
    %4019 = vmatpush.msra.mxu0 %v4014
    %4020 = vmatpush.msra.mxu0 %v4012
    %4021 = vmatpush.msra.mxu0 %v4010
    %4022 = vmatpush.msra.mxu0 %v4008
    %4023 = vmatpush.msra.mxu0 %v4006
    %4024 = vmatpush.msra.mxu0 %v4004
    %4025 = vmatpush.msra.mxu0 %v4002
    %4026 = vmatpush.msra.mxu0 %v4000
    %4027 = vmatpush.msra.mxu0 %v3998
    %4028 = vmatpush.msra.mxu0 %v3996
    %4029 = vmatpush.msra.mxu0 %v3994
    %4030 = vmatpush.msra.mxu0 %v3992
    %4031 = vmatpush.msra.mxu0 %v3990
    %4032 = vmatpush.msra.mxu0 %v3988
    %4033 = vmatpush.msra.mxu0 %v3986
    %4034 = vmatmul.f32.gmra.mxu0 %v185
    %v4035 = vpop.f32.mrf.mxu0
    %v4036 = vadd.f32 %v1265, %v4035
    %4037 = vdwg.mxu0
    %4038 = vmatpush.msra.mxu0 %v4017
    %4039 = vmatpush.msra.mxu0 %v4015
    %4040 = vmatpush.msra.mxu0 %v4013
    %4041 = vmatpush.msra.mxu0 %v4011
    %4042 = vmatpush.msra.mxu0 %v4009
    %4043 = vmatpush.msra.mxu0 %v4007
    %4044 = vmatpush.msra.mxu0 %v4005
    %4045 = vmatpush.msra.mxu0 %v4003
    %4046 = vmatpush.msra.mxu0 %v4001
    %4047 = vmatpush.msra.mxu0 %v3999
    %4048 = vmatpush.msra.mxu0 %v3997
    %4049 = vmatpush.msra.mxu0 %v3995
    %4050 = vmatpush.msra.mxu0 %v3993
    %4051 = vmatpush.msra.mxu0 %v3991
    %4052 = vmatpush.msra.mxu0 %v3989
    %4053 = vmatpush.msra.mxu0 %v3987
    %4054 = vmatmul.f32.gmra.mxu0 %v185
    %v4055 = vpop.f32.mrf.mxu0
    %v4056 = vadd.f32 %v1265, %v4055
    %4057 = vdwg.mxu0
    %v4060 = vrot.slane %v4056, 7
    %v4061 = vsel %vm1309, %v4036, %v4060
    %s4063 = scalar_lea.vmem [#allocation3], 3
    %4064 = vst.msk [vmem:[%s4063] ss:$4 sm:$0x3] %vm1315, %v4061
    // Predicated region
    $region34: #{fused_model_pallas.1} parent=1 // pred_check
      _
    $region35: #{fused_model_pallas.1} parent=1 // pred_check_branch
      %4066 = sbr.rel (0) target = $region37
    $region36: #{fused_model_pallas.1} parent=1 // pred_region
      %4068 = vsyncadd [#allocation4], 0
      %s4070 = sshll.u32 [#allocation3], 4
      %s4071 = int_to_ptr.vmem [resolvable:$true] %s4070
      %s4072 = sshll.u32 %s8, 4
      %s4073 = int_to_ptr.hbm [resolvable:$true] %s4072
      %4075 = dma.vmem_to_hbm [thread:$0]  %s4071, 128, %s4073, [#allocation4]
    $region37: #{fused_model_pallas.1} parent=1 // pred_fallthru
      _
    // Predicated region
    $region38: #{fused_model_pallas.1} parent=1 // pred_check
      _
    $region39: #{fused_model_pallas.1} parent=1 // pred_check_branch
      %4077 = sbr.rel (0) target = $region41
    $region40: #{fused_model_pallas.1} parent=1 // pred_region
      %4079 = dma.done [#allocation4], 128
    $region41: #{fused_model_pallas.1} parent=1 // pred_fallthru
      _
    %4080 = vsyncpa [#allocation4], 1

</llo_original>
